<compile_context>
chip_gen: v7x
topology: tpu7x:2x2x1
jax: 0.10.0
libtpu: 0.0.40
codegen_flags: <defaults>
</compile_context>

<pallas_src>
import math

import jax
import jax.numpy as jnp
from jax.experimental import pallas as pl
from jax.experimental.pallas import tpu as pltpu

_GN_EPS = 1e-6
_INV_SQRT2 = 1.0 / math.sqrt(2.0)


def _silu(v):
    # act = SiLU / swish (the standard choice for NCSN++ blocks)
    return v * (1.0 / (1.0 + jnp.exp(-v)))


def _core_kernel(x_ref, temb_ref,
                 gn0_g_ref, gn0_b_ref, m0_ref, w0_ref, b0_ref,
                 td_w_ref, td_b_ref,
                 gn1_g_ref, gn1_b_ref, m1_ref, w1_ref, b1_ref,
                 o_ref):
    """Per-sample core: act(GN0(x)) -> Conv_0 -> +Dense_0(act(temb)) -> act(GN1) -> Conv_1."""
    H, W, C = x_ref.shape
    HW = H * W

    x = x_ref[...].astype(jnp.float32).reshape(HW, C)

    def group_norm(h, m_ref, g_ref, b_ref):
        # One-pass per-channel sum / sum-of-squares; group aggregation via a tiny
        # block-diagonal (C,C) matmul pre-scaled by 1/(H*W*group_size).
        s = jnp.sum(h, axis=0, keepdims=True)            # (1, C)
        ss = jnp.sum(h * h, axis=0, keepdims=True)       # (1, C)
        m = m_ref[...].astype(jnp.float32)               # (C, C)
        mu = jnp.dot(s, m, preferred_element_type=jnp.float32)    # per-channel group mean
        ex2 = jnp.dot(ss, m, preferred_element_type=jnp.float32)  # per-channel group E[x^2]
        var = ex2 - mu * mu                                       # biased variance
        inv = jax.lax.rsqrt(var + _GN_EPS)
        return (h - mu) * inv * g_ref[...].astype(jnp.float32) + b_ref[...].astype(jnp.float32)

    def conv3x3(h, w_ref, b_ref):
        # "same" 3x3 conv as 3 accumulated MXU matmuls: width taps fused (K = 3*Cin).
        cin = h.shape[-1]
        cout = w_ref.shape[-1]
        h3 = h.reshape(H, W, cin)
        zc = jnp.zeros((H, 1, cin), jnp.float32)
        hpw = jnp.concatenate([zc, h3, zc], axis=1)                  # (H, W+2, cin)
        zr = jnp.zeros((1, W + 2, cin), jnp.float32)
        hp = jnp.concatenate([zr, hpw, zr], axis=0)                  # (H+2, W+2, cin)
        acc = jnp.zeros((HW, cout), jnp.float32)
        for di in range(3):                                          # static, unrolled
            slab = hp[di:di + H, :, :]                               # (H, W+2, cin)
            taps = jnp.concatenate(
                [slab[:, 0:W, :], slab[:, 1:W + 1, :], slab[:, 2:W + 2, :]], axis=-1)
            acc = acc + jnp.dot(taps.reshape(HW, 3 * cin),
                                w_ref[di].astype(jnp.float32),
                                preferred_element_type=jnp.float32)
        return acc + b_ref[...].astype(jnp.float32)                  # (HW, cout)

    # h = act(GroupNorm_0(x))
    h = _silu(group_norm(x, m0_ref, gn0_g_ref, gn0_b_ref))
    # h = Conv_0(h)
    h = conv3x3(h, w0_ref, b0_ref)
    # h += Dense_0(act(temb))[:, :, None, None]
    temb = temb_ref[...].astype(jnp.float32)                         # (1, temb_dim)
    h = h + (jnp.dot(_silu(temb), td_w_ref[...].astype(jnp.float32),
                     preferred_element_type=jnp.float32)
             + td_b_ref[...].astype(jnp.float32))
    # h = act(GroupNorm_1(h));  Dropout_0 -> identity
    # TODO(synk): training-mode Dropout_0 (p=0.1) needs per-call RNG; eval-mode identity here.
    h = _silu(group_norm(h, m1_ref, gn1_g_ref, gn1_b_ref))
    # h = Conv_1(h)
    h = conv3x3(h, w1_ref, b1_ref)

    o_ref[...] = h.reshape(H, W, h.shape[-1]).astype(o_ref.dtype)


def _stack_conv_weight(w):
    # torch layout (Cout, Cin, kh, kw) -> (kh, kw*Cin, Cout); contraction ordered (kw, Cin)
    co, ci, kh, kw = w.shape
    return jnp.transpose(w, (2, 3, 1, 0)).reshape(kh, kw * ci, co)


def _group_mean_matrix(c, num_groups, hw):
    cg = c // num_groups
    gid = jnp.arange(c) // cg
    same = (gid[:, None] == gid[None, :]).astype(jnp.float32)
    return same / float(hw * cg)


def film_resblock_pallas(x_nchw, temb, encoder_hidden_states, params):
    """Forward of ResnetBlockConditionalFiLMBigGANpp; x in PyTorch NCHW layout."""
    N, C, H, W = x_nchw.shape
    co = params["w0"].shape[0]
    assert co == C, "kernel supports the in_ch == out_ch path"
    # TODO(synk): up/down (naive & FIR) resampling branches and the Conv_2 1x1 shortcut
    # (in_ch != out_ch / up / down) are not implemented.
    td = temb.shape[-1]
    hw = H * W
    g0 = min(C // 4, 32)
    g1 = min(co // 4, 32)

    x_nhwc = jnp.transpose(x_nchw, (0, 2, 3, 1)).astype(jnp.float32)
    temb3 = temb.reshape(N, 1, td).astype(jnp.float32)

    row = lambda v: v.reshape(1, -1).astype(jnp.float32)
    w0s = _stack_conv_weight(params["w0"].astype(jnp.float32))
    w1s = _stack_conv_weight(params["w1"].astype(jnp.float32))
    m0 = _group_mean_matrix(C, g0, hw)
    m1 = _group_mean_matrix(co, g1, hw)
    td_w = jnp.transpose(params["td_w"]).astype(jnp.float32)        # (temb_dim, Cout)

    def resident(shape):
        zeros = (0,) * len(shape)
        return pl.BlockSpec(shape, lambda n: zeros)

    conv1_nhwc = pl.pallas_call(
        _core_kernel,
        out_shape=jax.ShapeDtypeStruct((N, H, W, co), jnp.float32),
        grid=(N,),
        in_specs=[
            pl.BlockSpec((None, H, W, C), lambda n: (n, 0, 0, 0)),   # x (one sample per step)
            pl.BlockSpec((None, 1, td), lambda n: (n, 0, 0)),        # temb (per sample)
            resident((1, C)), resident((1, C)), resident((C, C)),    # GN0 gamma, beta, group-M
            resident((3, 3 * C, co)), resident((1, co)),             # Conv_0 weight, bias
            resident((td, co)), resident((1, co)),                   # Dense_0 weight, bias
            resident((1, co)), resident((1, co)), resident((co, co)),  # GN1 gamma, beta, group-M
            resident((3, 3 * co, co)), resident((1, co)),            # Conv_1 weight, bias
        ],
        out_specs=pl.BlockSpec((None, H, W, co), lambda n: (n, 0, 0, 0)),
        compiler_params=pltpu.CompilerParams(dimension_semantics=("parallel",)),
    )(x_nhwc, temb3,
      row(params["gn0_g"]), row(params["gn0_b"]), m0, w0s, row(params["b0"]),
      td_w, row(params["td_b"]),
      row(params["gn1_g"]), row(params["gn1_b"]), m1, w1s, row(params["b1"]))

    # ---- FiLM tail: faithful to the PyTorch code (raw NCHW reshape, no permute) ----
    # TODO(synk): fold this tail into the kernel if the permute-less reshape is confirmed to
    # be an upstream bug (it would then reduce to a plain per-channel scale/shift).
    residual = jnp.transpose(conv1_nhwc, (0, 3, 1, 2))               # Conv_1 output, NCHW
    ehs0 = encoder_hidden_states[:, 0, :].astype(jnp.float32)        # repeated rows are identical
    gammas = ehs0 @ jnp.transpose(params["scale_w"]) + params["scale_b"]   # (N, C)
    bias = ehs0 @ jnp.transpose(params["bias_w"]) + params["bias_b"]       # (N, C)
    h = residual.reshape(N, hw, co)                                  # raw reinterpretation
    h = gammas[:, None, :] * h + bias[:, None, :]
    h = jnp.transpose(h.reshape(N, H, W, co), (0, 3, 1, 2))
    h = h + residual
    return (x_nchw + h) * _INV_SQRT2                                 # skip_rescale=True


def film_resblock_ref(x, temb, encoder_hidden_states, params):
    """Pure-JAX reference mirroring the PyTorch forward line by line."""
    N, C, H, W = x.shape
    co = params["w0"].shape[0]
    g0, g1 = min(C // 4, 32), min(co // 4, 32)

    def gn(h, g, b, groups):
        n, c, hh, ww = h.shape
        hg = h.reshape(n, groups, c // groups, hh, ww)
        mu = jnp.mean(hg, axis=(2, 3, 4), keepdims=True)
        var = jnp.mean((hg - mu) ** 2, axis=(2, 3, 4), keepdims=True)
        hn = ((hg - mu) * jax.lax.rsqrt(var + _GN_EPS)).reshape(n, c, hh, ww)
        return hn * g.reshape(1, -1, 1, 1) + b.reshape(1, -1, 1, 1)

    def conv3x3(h, w, b):
        out = jax.lax.conv_general_dilated(
            h, w, window_strides=(1, 1), padding=((1, 1), (1, 1)),
            dimension_numbers=("NCHW", "OIHW", "NCHW"))
        return out + b.reshape(1, -1, 1, 1)

    h = _silu(gn(x, params["gn0_g"], params["gn0_b"], g0))
    h = conv3x3(h, params["w0"], params["b0"])
    h = h + (_silu(temb) @ params["td_w"].T + params["td_b"])[:, :, None, None]
    h = _silu(gn(h, params["gn1_g"], params["gn1_b"], g1))
    # Dropout_0: identity (eval mode)
    h = conv3x3(h, params["w1"], params["b1"])
    residual = h
    hw = H * W
    ehs_rep = jnp.tile(encoder_hidden_states, (1, hw, 1))            # (N, HW, 256)
    bias = ehs_rep @ params["bias_w"].T + params["bias_b"]
    gammas = ehs_rep @ params["scale_w"].T + params["scale_b"]
    h = h.reshape(N, hw, co)                                         # same raw reshape as torch
    h = gammas * h + bias
    h = jnp.transpose(h.reshape(N, H, W, co), (0, 3, 1, 2))
    h = h + residual
    return (x + h) * _INV_SQRT2


def init_params(key, c, temb_dim, cross_dim=256):
    ks = jax.random.split(key, 12)
    return {
        "gn0_g": 1.0 + 0.05 * jax.random.normal(ks[0], (c,), jnp.float32),
        "gn0_b": 0.05 * jax.random.normal(ks[1], (c,), jnp.float32),
        "w0": jax.random.normal(ks[2], (c, c, 3, 3), jnp.float32) * (0.3 / (3.0 * c ** 0.5)),
        "b0": 0.05 * jax.random.normal(ks[3], (c,), jnp.float32),
        "td_w": jax.random.normal(ks[4], (c, temb_dim), jnp.float32) / temb_dim ** 0.5,
        "td_b": 0.05 * jax.random.normal(ks[5], (c,), jnp.float32),
        "gn1_g": 1.0 + 0.05 * jax.random.normal(ks[6], (c,), jnp.float32),
        "gn1_b": 0.05 * jax.random.normal(ks[7], (c,), jnp.float32),
        "w1": jax.random.normal(ks[8], (c, c, 3, 3), jnp.float32) * (0.3 / (3.0 * c ** 0.5)),
        "b1": 0.05 * jax.random.normal(ks[9], (c,), jnp.float32),
        "scale_w": jax.random.normal(ks[10], (c, cross_dim), jnp.float32) / cross_dim ** 0.5,
        "scale_b": jnp.zeros((c,), jnp.float32),
        "bias_w": jax.random.normal(ks[11], (c, cross_dim), jnp.float32) / cross_dim ** 0.5,
        "bias_b": jnp.zeros((c,), jnp.float32),
    }


if __name__ == "__main__":
    key = jax.random.PRNGKey(0)
    kx, kt, ke, kp = jax.random.split(key, 4)
    N, C, H, W = 2, 4, 16, 16
    TEMB, CROSS = 32, 256

    x = jax.random.normal(kx, (N, C, H, W), jnp.float32)
    temb = jax.random.normal(kt, (N, TEMB), jnp.float32)
    ehs = jax.random.normal(ke, (N, 1, CROSS), jnp.float32)
    params = init_params(kp, C, TEMB, CROSS)

    out = jax.block_until_ready(film_resblock_pallas(x, temb, ehs, params))
    ref = jax.block_until_ready(film_resblock_ref(x, temb, ehs, params))

    assert out.shape == (N, C, H, W)
    max_err = float(jnp.max(jnp.abs(out - ref)))
    assert jnp.allclose(out, ref, atol=5e-4, rtol=5e-4), max_err
    print("KERNEL_OK")
</pallas_src>

<mosaic_0001>
module attributes {stable_mosaic.version = 11 : i64} {
  func.func @_core_kernel(%arg0: i32, %arg1: memref<1x16x16x4xf32, #tpu.memory_space<vmem>>, %arg2: memref<1x1x32xf32, #tpu.memory_space<vmem>>, %arg3: memref<1x4xf32, #tpu.memory_space<vmem>>, %arg4: memref<1x4xf32, #tpu.memory_space<vmem>>, %arg5: memref<4x4xf32, #tpu.memory_space<vmem>>, %arg6: memref<3x12x4xf32, #tpu.memory_space<vmem>>, %arg7: memref<1x4xf32, #tpu.memory_space<vmem>>, %arg8: memref<32x4xf32, #tpu.memory_space<vmem>>, %arg9: memref<1x4xf32, #tpu.memory_space<vmem>>, %arg10: memref<1x4xf32, #tpu.memory_space<vmem>>, %arg11: memref<1x4xf32, #tpu.memory_space<vmem>>, %arg12: memref<4x4xf32, #tpu.memory_space<vmem>>, %arg13: memref<3x12x4xf32, #tpu.memory_space<vmem>>, %arg14: memref<1x4xf32, #tpu.memory_space<vmem>>, %arg15: memref<1x16x16x4xf32, #tpu.memory_space<vmem>>) attributes {dimension_semantics = [#tpu.dimension_semantics<parallel>], iteration_bounds = array<i64: 2>, scalar_prefetch = 0 : i64, scratch_operands = 0 : i64, tpu.core_type = #tpu.core_type<tc>, window_params = [{transform_indices = @transform_0, window_bounds = array<i64: 1, 16, 16, 4>}, {transform_indices = @transform_1, window_bounds = array<i64: 1, 1, 32>}, {pipeline_mode = #tpu.pipeline_mode<synchronous>, transform_indices = @transform_2, window_bounds = array<i64: 1, 4>}, {pipeline_mode = #tpu.pipeline_mode<synchronous>, transform_indices = @transform_3, window_bounds = array<i64: 1, 4>}, {pipeline_mode = #tpu.pipeline_mode<synchronous>, transform_indices = @transform_4, window_bounds = array<i64: 4, 4>}, {pipeline_mode = #tpu.pipeline_mode<synchronous>, transform_indices = @transform_5, window_bounds = array<i64: 3, 12, 4>}, {pipeline_mode = #tpu.pipeline_mode<synchronous>, transform_indices = @transform_6, window_bounds = array<i64: 1, 4>}, {pipeline_mode = #tpu.pipeline_mode<synchronous>, transform_indices = @transform_7, window_bounds = array<i64: 32, 4>}, {pipeline_mode = #tpu.pipeline_mode<synchronous>, transform_indices = @transform_8, window_bounds = array<i64: 1, 4>}, {pipeline_mode = #tpu.pipeline_mode<synchronous>, transform_indices = @transform_9, window_bounds = array<i64: 1, 4>}, {pipeline_mode = #tpu.pipeline_mode<synchronous>, transform_indices = @transform_10, window_bounds = array<i64: 1, 4>}, {pipeline_mode = #tpu.pipeline_mode<synchronous>, transform_indices = @transform_11, window_bounds = array<i64: 4, 4>}, {pipeline_mode = #tpu.pipeline_mode<synchronous>, transform_indices = @transform_12, window_bounds = array<i64: 3, 12, 4>}, {pipeline_mode = #tpu.pipeline_mode<synchronous>, transform_indices = @transform_13, window_bounds = array<i64: 1, 4>}, {transform_indices = @transform_14, window_bounds = array<i64: 1, 16, 16, 4>}]} {
    %c0 = arith.constant 0 : index
    %c0_0 = arith.constant 0 : index
    %c0_1 = arith.constant 0 : index
    %c0_2 = arith.constant 0 : index
    %0 = vector.load %arg1[%c0, %c0_0, %c0_1, %c0_2] : memref<1x16x16x4xf32, #tpu.memory_space<vmem>>, vector<1x16x16x4xf32>
    %1 = vector.shape_cast %0 : vector<1x16x16x4xf32> to vector<16x16x4xf32>
    %2 = vector.shape_cast %1 : vector<16x16x4xf32> to vector<256x4xf32>
    %cst = arith.constant dense<0.000000e+00> : vector<4xf32>
    %3 = vector.multi_reduction <add>, %2, %cst [0] : vector<256x4xf32> to vector<4xf32>
    %4 = vector.shape_cast %3 : vector<4xf32> to vector<1x4xf32>
    %5 = arith.mulf %2, %2 : vector<256x4xf32>
    %cst_3 = arith.constant dense<0.000000e+00> : vector<4xf32>
    %6 = vector.multi_reduction <add>, %5, %cst_3 [0] : vector<256x4xf32> to vector<4xf32>
    %7 = vector.shape_cast %6 : vector<4xf32> to vector<1x4xf32>
    %c0_4 = arith.constant 0 : index
    %c0_5 = arith.constant 0 : index
    %8 = vector.load %arg5[%c0_4, %c0_5] : memref<4x4xf32, #tpu.memory_space<vmem>>, vector<4x4xf32>
    %cst_6 = arith.constant dense<0.000000e+00> : vector<1x4xf32>
    %9 = tpu.matmul %4, %8, %cst_6 {dimension_numbers = #tpu.dot_dimension_numbers<[1], [0], [0], [1], [0, 0, 1, 1], [], []>} : vector<1x4xf32>, vector<4x4xf32>, vector<1x4xf32> -> vector<1x4xf32>
    %cst_7 = arith.constant dense<0.000000e+00> : vector<1x4xf32>
    %10 = tpu.matmul %7, %8, %cst_7 {dimension_numbers = #tpu.dot_dimension_numbers<[1], [0], [0], [1], [0, 0, 1, 1], [], []>} : vector<1x4xf32>, vector<4x4xf32>, vector<1x4xf32> -> vector<1x4xf32>
    %11 = arith.mulf %9, %9 : vector<1x4xf32>
    %12 = arith.subf %10, %11 : vector<1x4xf32>
    %cst_8 = arith.constant 9.99999997E-7 : f32
    %13 = vector.broadcast %cst_8 : f32 to vector<1x4xf32>
    %14 = arith.addf %12, %13 : vector<1x4xf32>
    %15 = math.rsqrt %14 : vector<1x4xf32>
    %16 = vector.broadcast %9 : vector<1x4xf32> to vector<256x4xf32>
    %17 = arith.subf %2, %16 : vector<256x4xf32>
    %18 = vector.broadcast %15 : vector<1x4xf32> to vector<256x4xf32>
    %19 = arith.mulf %17, %18 : vector<256x4xf32>
    %c0_9 = arith.constant 0 : index
    %c0_10 = arith.constant 0 : index
    %20 = vector.load %arg3[%c0_9, %c0_10] : memref<1x4xf32, #tpu.memory_space<vmem>>, vector<1x4xf32>
    %21 = vector.broadcast %20 : vector<1x4xf32> to vector<256x4xf32>
    %22 = arith.mulf %19, %21 : vector<256x4xf32>
    %c0_11 = arith.constant 0 : index
    %c0_12 = arith.constant 0 : index
    %23 = vector.load %arg4[%c0_11, %c0_12] : memref<1x4xf32, #tpu.memory_space<vmem>>, vector<1x4xf32>
    %24 = vector.broadcast %23 : vector<1x4xf32> to vector<256x4xf32>
    %25 = arith.addf %22, %24 : vector<256x4xf32>
    %cst_13 = arith.constant 0.000000e+00 : f32
    %26 = vector.broadcast %cst_13 : f32 to vector<256x4xf32>
    %27 = arith.subf %26, %25 : vector<256x4xf32>
    %28 = math.exp %27 : vector<256x4xf32>
    %cst_14 = arith.constant 1.000000e+00 : f32
    %29 = vector.broadcast %cst_14 : f32 to vector<256x4xf32>
    %30 = arith.addf %29, %28 : vector<256x4xf32>
    %cst_15 = arith.constant 1.000000e+00 : f32
    %31 = vector.broadcast %cst_15 : f32 to vector<256x4xf32>
    %32 = arith.divf %31, %30 : vector<256x4xf32>
    %33 = arith.mulf %25, %32 : vector<256x4xf32>
    %34 = vector.shape_cast %33 : vector<256x4xf32> to vector<16x16x4xf32>
    %cst_16 = arith.constant 0.000000e+00 : f32
    %35 = vector.broadcast %cst_16 : f32 to vector<16x1x4xf32>
    %36 = tpu.concatenate %35, %34, %35 in 1 : vector<16x1x4xf32>, vector<16x16x4xf32>, vector<16x1x4xf32> -> vector<16x18x4xf32>
    %cst_17 = arith.constant 0.000000e+00 : f32
    %37 = vector.broadcast %cst_17 : f32 to vector<1x18x4xf32>
    %38 = tpu.concatenate %37, %36, %37 in 0 : vector<1x18x4xf32>, vector<16x18x4xf32>, vector<1x18x4xf32> -> vector<18x18x4xf32>
    %cst_18 = arith.constant 0.000000e+00 : f32
    %39 = vector.broadcast %cst_18 : f32 to vector<256x4xf32>
    %40 = vector.extract_strided_slice %38 {offsets = [0, 0, 0], sizes = [16, 18, 4], strides = [1, 1, 1]} : vector<18x18x4xf32> to vector<16x18x4xf32>
    %41 = vector.extract_strided_slice %40 {offsets = [0, 0, 0], sizes = [16, 16, 4], strides = [1, 1, 1]} : vector<16x18x4xf32> to vector<16x16x4xf32>
    %42 = vector.extract_strided_slice %40 {offsets = [0, 1, 0], sizes = [16, 16, 4], strides = [1, 1, 1]} : vector<16x18x4xf32> to vector<16x16x4xf32>
    %43 = vector.extract_strided_slice %40 {offsets = [0, 2, 0], sizes = [16, 16, 4], strides = [1, 1, 1]} : vector<16x18x4xf32> to vector<16x16x4xf32>
    %44 = tpu.concatenate %41, %42, %43 in 2 : vector<16x16x4xf32>, vector<16x16x4xf32>, vector<16x16x4xf32> -> vector<16x16x12xf32>
    %45 = vector.shape_cast %44 : vector<16x16x12xf32> to vector<256x12xf32>
    %c0_19 = arith.constant 0 : index
    %c0_20 = arith.constant 0 : index
    %c0_21 = arith.constant 0 : index
    %46 = vector.load %arg6[%c0_19, %c0_20, %c0_21] : memref<3x12x4xf32, #tpu.memory_space<vmem>>, vector<1x12x4xf32>
    %47 = vector.shape_cast %46 : vector<1x12x4xf32> to vector<12x4xf32>
    %cst_22 = arith.constant dense<0.000000e+00> : vector<256x4xf32>
    %48 = tpu.matmul %45, %47, %cst_22 {dimension_numbers = #tpu.dot_dimension_numbers<[1], [0], [0], [1], [0, 0, 1, 1], [], []>} : vector<256x12xf32>, vector<12x4xf32>, vector<256x4xf32> -> vector<256x4xf32>
    %49 = arith.addf %39, %48 : vector<256x4xf32>
    %50 = vector.extract_strided_slice %38 {offsets = [1, 0, 0], sizes = [16, 18, 4], strides = [1, 1, 1]} : vector<18x18x4xf32> to vector<16x18x4xf32>
    %51 = vector.extract_strided_slice %50 {offsets = [0, 0, 0], sizes = [16, 16, 4], strides = [1, 1, 1]} : vector<16x18x4xf32> to vector<16x16x4xf32>
    %52 = vector.extract_strided_slice %50 {offsets = [0, 1, 0], sizes = [16, 16, 4], strides = [1, 1, 1]} : vector<16x18x4xf32> to vector<16x16x4xf32>
    %53 = vector.extract_strided_slice %50 {offsets = [0, 2, 0], sizes = [16, 16, 4], strides = [1, 1, 1]} : vector<16x18x4xf32> to vector<16x16x4xf32>
    %54 = tpu.concatenate %51, %52, %53 in 2 : vector<16x16x4xf32>, vector<16x16x4xf32>, vector<16x16x4xf32> -> vector<16x16x12xf32>
    %55 = vector.shape_cast %54 : vector<16x16x12xf32> to vector<256x12xf32>
    %c1 = arith.constant 1 : index
    %c0_23 = arith.constant 0 : index
    %c0_24 = arith.constant 0 : index
    %56 = vector.load %arg6[%c1, %c0_23, %c0_24] : memref<3x12x4xf32, #tpu.memory_space<vmem>>, vector<1x12x4xf32>
    %57 = vector.shape_cast %56 : vector<1x12x4xf32> to vector<12x4xf32>
    %cst_25 = arith.constant dense<0.000000e+00> : vector<256x4xf32>
    %58 = tpu.matmul %55, %57, %cst_25 {dimension_numbers = #tpu.dot_dimension_numbers<[1], [0], [0], [1], [0, 0, 1, 1], [], []>} : vector<256x12xf32>, vector<12x4xf32>, vector<256x4xf32> -> vector<256x4xf32>
    %59 = arith.addf %49, %58 : vector<256x4xf32>
    %60 = vector.extract_strided_slice %38 {offsets = [2, 0, 0], sizes = [16, 18, 4], strides = [1, 1, 1]} : vector<18x18x4xf32> to vector<16x18x4xf32>
    %61 = vector.extract_strided_slice %60 {offsets = [0, 0, 0], sizes = [16, 16, 4], strides = [1, 1, 1]} : vector<16x18x4xf32> to vector<16x16x4xf32>
    %62 = vector.extract_strided_slice %60 {offsets = [0, 1, 0], sizes = [16, 16, 4], strides = [1, 1, 1]} : vector<16x18x4xf32> to vector<16x16x4xf32>
    %63 = vector.extract_strided_slice %60 {offsets = [0, 2, 0], sizes = [16, 16, 4], strides = [1, 1, 1]} : vector<16x18x4xf32> to vector<16x16x4xf32>
    %64 = tpu.concatenate %61, %62, %63 in 2 : vector<16x16x4xf32>, vector<16x16x4xf32>, vector<16x16x4xf32> -> vector<16x16x12xf32>
    %65 = vector.shape_cast %64 : vector<16x16x12xf32> to vector<256x12xf32>
    %c2 = arith.constant 2 : index
    %c0_26 = arith.constant 0 : index
    %c0_27 = arith.constant 0 : index
    %66 = vector.load %arg6[%c2, %c0_26, %c0_27] : memref<3x12x4xf32, #tpu.memory_space<vmem>>, vector<1x12x4xf32>
    %67 = vector.shape_cast %66 : vector<1x12x4xf32> to vector<12x4xf32>
    %cst_28 = arith.constant dense<0.000000e+00> : vector<256x4xf32>
    %68 = tpu.matmul %65, %67, %cst_28 {dimension_numbers = #tpu.dot_dimension_numbers<[1], [0], [0], [1], [0, 0, 1, 1], [], []>} : vector<256x12xf32>, vector<12x4xf32>, vector<256x4xf32> -> vector<256x4xf32>
    %69 = arith.addf %59, %68 : vector<256x4xf32>
    %c0_29 = arith.constant 0 : index
    %c0_30 = arith.constant 0 : index
    %70 = vector.load %arg7[%c0_29, %c0_30] : memref<1x4xf32, #tpu.memory_space<vmem>>, vector<1x4xf32>
    %71 = vector.broadcast %70 : vector<1x4xf32> to vector<256x4xf32>
    %72 = arith.addf %69, %71 : vector<256x4xf32>
    %c0_31 = arith.constant 0 : index
    %c0_32 = arith.constant 0 : index
    %c0_33 = arith.constant 0 : index
    %73 = vector.load %arg2[%c0_31, %c0_32, %c0_33] : memref<1x1x32xf32, #tpu.memory_space<vmem>>, vector<1x1x32xf32>
    %74 = vector.shape_cast %73 : vector<1x1x32xf32> to vector<1x32xf32>
    %cst_34 = arith.constant 0.000000e+00 : f32
    %75 = vector.broadcast %cst_34 : f32 to vector<1x32xf32>
    %76 = arith.subf %75, %74 : vector<1x32xf32>
    %77 = math.exp %76 : vector<1x32xf32>
    %cst_35 = arith.constant 1.000000e+00 : f32
    %78 = vector.broadcast %cst_35 : f32 to vector<1x32xf32>
    %79 = arith.addf %78, %77 : vector<1x32xf32>
    %cst_36 = arith.constant 1.000000e+00 : f32
    %80 = vector.broadcast %cst_36 : f32 to vector<1x32xf32>
    %81 = arith.divf %80, %79 : vector<1x32xf32>
    %82 = arith.mulf %74, %81 : vector<1x32xf32>
    %c0_37 = arith.constant 0 : index
    %c0_38 = arith.constant 0 : index
    %83 = vector.load %arg8[%c0_37, %c0_38] : memref<32x4xf32, #tpu.memory_space<vmem>>, vector<32x4xf32>
    %cst_39 = arith.constant dense<0.000000e+00> : vector<1x4xf32>
    %84 = tpu.matmul %82, %83, %cst_39 {dimension_numbers = #tpu.dot_dimension_numbers<[1], [0], [0], [1], [0, 0, 1, 1], [], []>} : vector<1x32xf32>, vector<32x4xf32>, vector<1x4xf32> -> vector<1x4xf32>
    %c0_40 = arith.constant 0 : index
    %c0_41 = arith.constant 0 : index
    %85 = vector.load %arg9[%c0_40, %c0_41] : memref<1x4xf32, #tpu.memory_space<vmem>>, vector<1x4xf32>
    %86 = arith.addf %84, %85 : vector<1x4xf32>
    %87 = vector.broadcast %86 : vector<1x4xf32> to vector<256x4xf32>
    %88 = arith.addf %72, %87 : vector<256x4xf32>
    %cst_42 = arith.constant dense<0.000000e+00> : vector<4xf32>
    %89 = vector.multi_reduction <add>, %88, %cst_42 [0] : vector<256x4xf32> to vector<4xf32>
    %90 = vector.shape_cast %89 : vector<4xf32> to vector<1x4xf32>
    %91 = arith.mulf %88, %88 : vector<256x4xf32>
    %cst_43 = arith.constant dense<0.000000e+00> : vector<4xf32>
    %92 = vector.multi_reduction <add>, %91, %cst_43 [0] : vector<256x4xf32> to vector<4xf32>
    %93 = vector.shape_cast %92 : vector<4xf32> to vector<1x4xf32>
    %c0_44 = arith.constant 0 : index
    %c0_45 = arith.constant 0 : index
    %94 = vector.load %arg12[%c0_44, %c0_45] : memref<4x4xf32, #tpu.memory_space<vmem>>, vector<4x4xf32>
    %cst_46 = arith.constant dense<0.000000e+00> : vector<1x4xf32>
    %95 = tpu.matmul %90, %94, %cst_46 {dimension_numbers = #tpu.dot_dimension_numbers<[1], [0], [0], [1], [0, 0, 1, 1], [], []>} : vector<1x4xf32>, vector<4x4xf32>, vector<1x4xf32> -> vector<1x4xf32>
    %cst_47 = arith.constant dense<0.000000e+00> : vector<1x4xf32>
    %96 = tpu.matmul %93, %94, %cst_47 {dimension_numbers = #tpu.dot_dimension_numbers<[1], [0], [0], [1], [0, 0, 1, 1], [], []>} : vector<1x4xf32>, vector<4x4xf32>, vector<1x4xf32> -> vector<1x4xf32>
    %97 = arith.mulf %95, %95 : vector<1x4xf32>
    %98 = arith.subf %96, %97 : vector<1x4xf32>
    %cst_48 = arith.constant 9.99999997E-7 : f32
    %99 = vector.broadcast %cst_48 : f32 to vector<1x4xf32>
    %100 = arith.addf %98, %99 : vector<1x4xf32>
    %101 = math.rsqrt %100 : vector<1x4xf32>
    %102 = vector.broadcast %95 : vector<1x4xf32> to vector<256x4xf32>
    %103 = arith.subf %88, %102 : vector<256x4xf32>
    %104 = vector.broadcast %101 : vector<1x4xf32> to vector<256x4xf32>
    %105 = arith.mulf %103, %104 : vector<256x4xf32>
    %c0_49 = arith.constant 0 : index
    %c0_50 = arith.constant 0 : index
    %106 = vector.load %arg10[%c0_49, %c0_50] : memref<1x4xf32, #tpu.memory_space<vmem>>, vector<1x4xf32>
    %107 = vector.broadcast %106 : vector<1x4xf32> to vector<256x4xf32>
    %108 = arith.mulf %105, %107 : vector<256x4xf32>
    %c0_51 = arith.constant 0 : index
    %c0_52 = arith.constant 0 : index
    %109 = vector.load %arg11[%c0_51, %c0_52] : memref<1x4xf32, #tpu.memory_space<vmem>>, vector<1x4xf32>
    %110 = vector.broadcast %109 : vector<1x4xf32> to vector<256x4xf32>
    %111 = arith.addf %108, %110 : vector<256x4xf32>
    %cst_53 = arith.constant 0.000000e+00 : f32
    %112 = vector.broadcast %cst_53 : f32 to vector<256x4xf32>
    %113 = arith.subf %112, %111 : vector<256x4xf32>
    %114 = math.exp %113 : vector<256x4xf32>
    %cst_54 = arith.constant 1.000000e+00 : f32
    %115 = vector.broadcast %cst_54 : f32 to vector<256x4xf32>
    %116 = arith.addf %115, %114 : vector<256x4xf32>
    %cst_55 = arith.constant 1.000000e+00 : f32
    %117 = vector.broadcast %cst_55 : f32 to vector<256x4xf32>
    %118 = arith.divf %117, %116 : vector<256x4xf32>
    %119 = arith.mulf %111, %118 : vector<256x4xf32>
    %120 = vector.shape_cast %119 : vector<256x4xf32> to vector<16x16x4xf32>
    %cst_56 = arith.constant 0.000000e+00 : f32
    %121 = vector.broadcast %cst_56 : f32 to vector<16x1x4xf32>
    %122 = tpu.concatenate %121, %120, %121 in 1 : vector<16x1x4xf32>, vector<16x16x4xf32>, vector<16x1x4xf32> -> vector<16x18x4xf32>
    %cst_57 = arith.constant 0.000000e+00 : f32
    %123 = vector.broadcast %cst_57 : f32 to vector<1x18x4xf32>
    %124 = tpu.concatenate %123, %122, %123 in 0 : vector<1x18x4xf32>, vector<16x18x4xf32>, vector<1x18x4xf32> -> vector<18x18x4xf32>
    %cst_58 = arith.constant 0.000000e+00 : f32
    %125 = vector.broadcast %cst_58 : f32 to vector<256x4xf32>
    %126 = vector.extract_strided_slice %124 {offsets = [0, 0, 0], sizes = [16, 18, 4], strides = [1, 1, 1]} : vector<18x18x4xf32> to vector<16x18x4xf32>
    %127 = vector.extract_strided_slice %126 {offsets = [0, 0, 0], sizes = [16, 16, 4], strides = [1, 1, 1]} : vector<16x18x4xf32> to vector<16x16x4xf32>
    %128 = vector.extract_strided_slice %126 {offsets = [0, 1, 0], sizes = [16, 16, 4], strides = [1, 1, 1]} : vector<16x18x4xf32> to vector<16x16x4xf32>
    %129 = vector.extract_strided_slice %126 {offsets = [0, 2, 0], sizes = [16, 16, 4], strides = [1, 1, 1]} : vector<16x18x4xf32> to vector<16x16x4xf32>
    %130 = tpu.concatenate %127, %128, %129 in 2 : vector<16x16x4xf32>, vector<16x16x4xf32>, vector<16x16x4xf32> -> vector<16x16x12xf32>
    %131 = vector.shape_cast %130 : vector<16x16x12xf32> to vector<256x12xf32>
    %c0_59 = arith.constant 0 : index
    %c0_60 = arith.constant 0 : index
    %c0_61 = arith.constant 0 : index
    %132 = vector.load %arg13[%c0_59, %c0_60, %c0_61] : memref<3x12x4xf32, #tpu.memory_space<vmem>>, vector<1x12x4xf32>
    %133 = vector.shape_cast %132 : vector<1x12x4xf32> to vector<12x4xf32>
    %cst_62 = arith.constant dense<0.000000e+00> : vector<256x4xf32>
    %134 = tpu.matmul %131, %133, %cst_62 {dimension_numbers = #tpu.dot_dimension_numbers<[1], [0], [0], [1], [0, 0, 1, 1], [], []>} : vector<256x12xf32>, vector<12x4xf32>, vector<256x4xf32> -> vector<256x4xf32>
    %135 = arith.addf %125, %134 : vector<256x4xf32>
    %136 = vector.extract_strided_slice %124 {offsets = [1, 0, 0], sizes = [16, 18, 4], strides = [1, 1, 1]} : vector<18x18x4xf32> to vector<16x18x4xf32>
    %137 = vector.extract_strided_slice %136 {offsets = [0, 0, 0], sizes = [16, 16, 4], strides = [1, 1, 1]} : vector<16x18x4xf32> to vector<16x16x4xf32>
    %138 = vector.extract_strided_slice %136 {offsets = [0, 1, 0], sizes = [16, 16, 4], strides = [1, 1, 1]} : vector<16x18x4xf32> to vector<16x16x4xf32>
    %139 = vector.extract_strided_slice %136 {offsets = [0, 2, 0], sizes = [16, 16, 4], strides = [1, 1, 1]} : vector<16x18x4xf32> to vector<16x16x4xf32>
    %140 = tpu.concatenate %137, %138, %139 in 2 : vector<16x16x4xf32>, vector<16x16x4xf32>, vector<16x16x4xf32> -> vector<16x16x12xf32>
    %141 = vector.shape_cast %140 : vector<16x16x12xf32> to vector<256x12xf32>
    %c1_63 = arith.constant 1 : index
    %c0_64 = arith.constant 0 : index
    %c0_65 = arith.constant 0 : index
    %142 = vector.load %arg13[%c1_63, %c0_64, %c0_65] : memref<3x12x4xf32, #tpu.memory_space<vmem>>, vector<1x12x4xf32>
    %143 = vector.shape_cast %142 : vector<1x12x4xf32> to vector<12x4xf32>
    %cst_66 = arith.constant dense<0.000000e+00> : vector<256x4xf32>
    %144 = tpu.matmul %141, %143, %cst_66 {dimension_numbers = #tpu.dot_dimension_numbers<[1], [0], [0], [1], [0, 0, 1, 1], [], []>} : vector<256x12xf32>, vector<12x4xf32>, vector<256x4xf32> -> vector<256x4xf32>
    %145 = arith.addf %135, %144 : vector<256x4xf32>
    %146 = vector.extract_strided_slice %124 {offsets = [2, 0, 0], sizes = [16, 18, 4], strides = [1, 1, 1]} : vector<18x18x4xf32> to vector<16x18x4xf32>
    %147 = vector.extract_strided_slice %146 {offsets = [0, 0, 0], sizes = [16, 16, 4], strides = [1, 1, 1]} : vector<16x18x4xf32> to vector<16x16x4xf32>
    %148 = vector.extract_strided_slice %146 {offsets = [0, 1, 0], sizes = [16, 16, 4], strides = [1, 1, 1]} : vector<16x18x4xf32> to vector<16x16x4xf32>
    %149 = vector.extract_strided_slice %146 {offsets = [0, 2, 0], sizes = [16, 16, 4], strides = [1, 1, 1]} : vector<16x18x4xf32> to vector<16x16x4xf32>
    %150 = tpu.concatenate %147, %148, %149 in 2 : vector<16x16x4xf32>, vector<16x16x4xf32>, vector<16x16x4xf32> -> vector<16x16x12xf32>
    %151 = vector.shape_cast %150 : vector<16x16x12xf32> to vector<256x12xf32>
    %c2_67 = arith.constant 2 : index
    %c0_68 = arith.constant 0 : index
    %c0_69 = arith.constant 0 : index
    %152 = vector.load %arg13[%c2_67, %c0_68, %c0_69] : memref<3x12x4xf32, #tpu.memory_space<vmem>>, vector<1x12x4xf32>
    %153 = vector.shape_cast %152 : vector<1x12x4xf32> to vector<12x4xf32>
    %cst_70 = arith.constant dense<0.000000e+00> : vector<256x4xf32>
    %154 = tpu.matmul %151, %153, %cst_70 {dimension_numbers = #tpu.dot_dimension_numbers<[1], [0], [0], [1], [0, 0, 1, 1], [], []>} : vector<256x12xf32>, vector<12x4xf32>, vector<256x4xf32> -> vector<256x4xf32>
    %155 = arith.addf %145, %154 : vector<256x4xf32>
    %c0_71 = arith.constant 0 : index
    %c0_72 = arith.constant 0 : index
    %156 = vector.load %arg14[%c0_71, %c0_72] : memref<1x4xf32, #tpu.memory_space<vmem>>, vector<1x4xf32>
    %157 = vector.broadcast %156 : vector<1x4xf32> to vector<256x4xf32>
    %158 = arith.addf %155, %157 : vector<256x4xf32>
    %159 = vector.shape_cast %158 : vector<256x4xf32> to vector<16x16x4xf32>
    %c0_73 = arith.constant 0 : index
    %c0_74 = arith.constant 0 : index
    %c0_75 = arith.constant 0 : index
    %c0_76 = arith.constant 0 : index
    %160 = vector.load %arg15[%c0_73, %c0_74, %c0_75, %c0_76] : memref<1x16x16x4xf32, #tpu.memory_space<vmem>>, vector<1x16x16x4xf32>
    %161 = vector.shape_cast %160 : vector<1x16x16x4xf32> to vector<16x16x4xf32>
    %162 = vector.shape_cast %159 : vector<16x16x4xf32> to vector<1x16x16x4xf32>
    tpu.vector_store %arg15[%c0_73, %c0_74, %c0_75, %c0_76], %162 {strides = array<i32>} : memref<1x16x16x4xf32, #tpu.memory_space<vmem>>, vector<1x16x16x4xf32>,
    return
  }
  func.func @transform_0(%arg0: i32) -> (i32, i32, i32, i32) {
    %c0_i32 = arith.constant 0 : i32
    %c0_i32_0 = arith.constant 0 : i32
    %c0_i32_1 = arith.constant 0 : i32
    %c0_i32_2 = arith.constant 0 : i32
    return %arg0, %c0_i32, %c0_i32_0, %c0_i32_1 : i32, i32, i32, i32
  }
  func.func @transform_1(%arg0: i32) -> (i32, i32, i32) {
    %c0_i32 = arith.constant 0 : i32
    %c0_i32_0 = arith.constant 0 : i32
    %c0_i32_1 = arith.constant 0 : i32
    return %arg0, %c0_i32, %c0_i32_0 : i32, i32, i32
  }
  func.func @transform_2(%arg0: i32) -> (i32, i32) {
    %c0_i32 = arith.constant 0 : i32
    %c0_i32_0 = arith.constant 0 : i32
    %c0_i32_1 = arith.constant 0 : i32
    return %c0_i32, %c0_i32_0 : i32, i32
  }
  func.func @transform_3(%arg0: i32) -> (i32, i32) {
    %c0_i32 = arith.constant 0 : i32
    %c0_i32_0 = arith.constant 0 : i32
    %c0_i32_1 = arith.constant 0 : i32
    return %c0_i32, %c0_i32_0 : i32, i32
  }
  func.func @transform_4(%arg0: i32) -> (i32, i32) {
    %c0_i32 = arith.constant 0 : i32
    %c0_i32_0 = arith.constant 0 : i32
    %c0_i32_1 = arith.constant 0 : i32
    return %c0_i32, %c0_i32_0 : i32, i32
  }
  func.func @transform_5(%arg0: i32) -> (i32, i32, i32) {
    %c0_i32 = arith.constant 0 : i32
    %c0_i32_0 = arith.constant 0 : i32
    %c0_i32_1 = arith.constant 0 : i32
    %c0_i32_2 = arith.constant 0 : i32
    return %c0_i32, %c0_i32_0, %c0_i32_1 : i32, i32, i32
  }
  func.func @transform_6(%arg0: i32) -> (i32, i32) {
    %c0_i32 = arith.constant 0 : i32
    %c0_i32_0 = arith.constant 0 : i32
    %c0_i32_1 = arith.constant 0 : i32
    return %c0_i32, %c0_i32_0 : i32, i32
  }
  func.func @transform_7(%arg0: i32) -> (i32, i32) {
    %c0_i32 = arith.constant 0 : i32
    %c0_i32_0 = arith.constant 0 : i32
    %c0_i32_1 = arith.constant 0 : i32
    return %c0_i32, %c0_i32_0 : i32, i32
  }
  func.func @transform_8(%arg0: i32) -> (i32, i32) {
    %c0_i32 = arith.constant 0 : i32
    %c0_i32_0 = arith.constant 0 : i32
    %c0_i32_1 = arith.constant 0 : i32
    return %c0_i32, %c0_i32_0 : i32, i32
  }
  func.func @transform_9(%arg0: i32) -> (i32, i32) {
    %c0_i32 = arith.constant 0 : i32
    %c0_i32_0 = arith.constant 0 : i32
    %c0_i32_1 = arith.constant 0 : i32
    return %c0_i32, %c0_i32_0 : i32, i32
  }
  func.func @transform_10(%arg0: i32) -> (i32, i32) {
    %c0_i32 = arith.constant 0 : i32
    %c0_i32_0 = arith.constant 0 : i32
    %c0_i32_1 = arith.constant 0 : i32
    return %c0_i32, %c0_i32_0 : i32, i32
  }
  func.func @transform_11(%arg0: i32) -> (i32, i32) {
    %c0_i32 = arith.constant 0 : i32
    %c0_i32_0 = arith.constant 0 : i32
    %c0_i32_1 = arith.constant 0 : i32
    return %c0_i32, %c0_i32_0 : i32, i32
  }
  func.func @transform_12(%arg0: i32) -> (i32, i32, i32) {
    %c0_i32 = arith.constant 0 : i32
    %c0_i32_0 = arith.constant 0 : i32
    %c0_i32_1 = arith.constant 0 : i32
    %c0_i32_2 = arith.constant 0 : i32
    return %c0_i32, %c0_i32_0, %c0_i32_1 : i32, i32, i32
  }
  func.func @transform_13(%arg0: i32) -> (i32, i32) {
    %c0_i32 = arith.constant 0 : i32
    %c0_i32_0 = arith.constant 0 : i32
    %c0_i32_1 = arith.constant 0 : i32
    return %c0_i32, %c0_i32_0 : i32, i32
  }
  func.func @transform_14(%arg0: i32) -> (i32, i32, i32, i32) {
    %c0_i32 = arith.constant 0 : i32
    %c0_i32_0 = arith.constant 0 : i32
    %c0_i32_1 = arith.constant 0 : i32
    %c0_i32_2 = arith.constant 0 : i32
    return %arg0, %c0_i32, %c0_i32_0, %c0_i32_1 : i32, i32, i32, i32
  }
}

</mosaic_0001>

<llo_original>
// kernel: tpu_custom_call.1
$region0: #{tpu_custom_call.1}
  #allocation0 [shape = 'u32[]', space=smem, size = 0x4, offset = 0x4, fixed_abs, tag = 'smem constant byte address 0x4 - core index']
  #allocation1 [shape = 'u32[144,128]{1,0:T(1,128)}', space=vmem, size = 0x12000, scoped, tag = 'internal scratch']
  %s0 = inlined_call_operand.vmem [shape: f32[2,16,16,4], index: 0, kind: input, shape index: {}]
  %s1 = inlined_call_operand.vmem [shape: f32[2,1,32], index: 1, kind: input, shape index: {}]
  %s2 = inlined_call_operand.vmem [shape: f32[1,4], index: 2, kind: input, shape index: {}]
  %s3 = inlined_call_operand.vmem [shape: f32[1,4], index: 3, kind: input, shape index: {}]
  %s4 = inlined_call_operand.vmem [shape: f32[4,4], index: 4, kind: input, shape index: {}]
  %s5 = inlined_call_operand.vmem [shape: f32[3,12,4], index: 5, kind: input, shape index: {}]
  %s6 = inlined_call_operand.vmem [shape: f32[1,4], index: 6, kind: input, shape index: {}]
  %s7 = inlined_call_operand.vmem [shape: f32[32,4], index: 7, kind: input, shape index: {}]
  %s8 = inlined_call_operand.vmem [shape: f32[1,4], index: 8, kind: input, shape index: {}]
  %s9 = inlined_call_operand.vmem [shape: f32[1,4], index: 9, kind: input, shape index: {}]
  %s10 = inlined_call_operand.vmem [shape: f32[1,4], index: 10, kind: input, shape index: {}]
  %s11 = inlined_call_operand.vmem [shape: f32[4,4], index: 11, kind: input, shape index: {}]
  %s12 = inlined_call_operand.vmem [shape: f32[3,12,4], index: 12, kind: input, shape index: {}]
  %s13 = inlined_call_operand.vmem [shape: f32[1,4], index: 13, kind: input, shape index: {}]
  %s14 = inlined_call_operand.vmem [shape: f32[2,16,16,4], index: 14, kind: output, shape index: {}]
  %s15 = sld [smem:[#allocation0]]
  $region89: #{tpu_custom_call.1} parent=0
    _
  %s17 = ssub.s32 1, %s15
  %s18 = scalar_select 0, %s17, %s15
  loop: start=0, step=1, limit=4
  $region2: #{tpu_custom_call.1} parent=0 // loop_pre_header
    _
  $region3: #{tpu_custom_call.1} parent=0 // loop_header
    %s20 = sphi 0, %s24
    %p21 = scmp.ge.s32.totalorder %s20, 4
    %s30 = sphi 0, %s32
    %s33 = sphi 0, %s30
    %s34 = sphi 0, %s33
    %s50 = sphi 0, %s34
    %s56 = sphi 0, %s58
    %s59 = sphi 0, %s56
    %s60 = sphi 0, %s59
    %s76 = sphi 0, %s60
    %s80 = sphi 0, %s80
    %s82 = sphi 0, %s80
    %s83 = sphi 0, %s82
    %s97 = sphi 0, %s83
    %s101 = sphi 0, %s101
    %s103 = sphi 0, %s101
    %s104 = sphi 0, %s103
    %s118 = sphi 0, %s104
    %s122 = sphi 0, %s122
    %s124 = sphi 0, %s122
    %s125 = sphi 0, %s124
    %s139 = sphi 0, %s125
    %s143 = sphi 0, %s143
    %s145 = sphi 0, %s143
    %s146 = sphi 0, %s145
    %s160 = sphi 0, %s146
    %s164 = sphi 0, %s164
    %s166 = sphi 0, %s164
    %s167 = sphi 0, %s166
    %s181 = sphi 0, %s167
    %s185 = sphi 0, %s185
    %s187 = sphi 0, %s185
    %s188 = sphi 0, %s187
    %s202 = sphi 0, %s188
    %s206 = sphi 0, %s206
    %s208 = sphi 0, %s206
    %s209 = sphi 0, %s208
    %s223 = sphi 0, %s209
    %s227 = sphi 0, %s227
    %s229 = sphi 0, %s227
    %s230 = sphi 0, %s229
    %s244 = sphi 0, %s230
    %s248 = sphi 0, %s248
    %s250 = sphi 0, %s248
    %s251 = sphi 0, %s250
    %s265 = sphi 0, %s251
    %s269 = sphi 0, %s269
    %s271 = sphi 0, %s269
    %s272 = sphi 0, %s271
    %s286 = sphi 0, %s272
    %s290 = sphi 0, %s290
    %s292 = sphi 0, %s290
    %s293 = sphi 0, %s292
    %s307 = sphi 0, %s293
    %s311 = sphi 0, %s311
    %s313 = sphi 0, %s311
    %s314 = sphi 0, %s313
    %s328 = sphi 0, %s314
    %s334 = sphi 0, %s336
    %s337 = sphi 0, %s334
    %s338 = sphi 0, %s337
    %s354 = sphi 0, %s338
  $region4: #{tpu_custom_call.1} parent=0 // loop_header_branch
    %23 = sbr.rel (%p21) target = $region8
  $region5: #{tpu_custom_call.1} parent=0 // loop_body
    %s25 = ssub.s32 %s20, 1
    %s26 = ssub.s32 %s20, 2
    %s27 = sadd.s32 %s20, 1
    %s28 = ssub.s32 %s20, %s27
    %p29 = scmp.eq.s32.totalorder %s28, 0
    %s31 = sadd.s32 %s30, 1
    %s32 = scalar_select %p29, %s30, %s31
    %p35 = pneg %p29
    %p36 = scmp.eq.s32.totalorder %s20, 1
    %p37 = por %p35, %p36
    %p38 = scmp.ne.s32.totalorder %s30, %s33
    %p39 = scmp.eq.s32.totalorder %s20, 0
    %p40 = por %p38, %p39
    %p41 = scmp.ne.s32.totalorder %s30, %s33
    %p42 = scmp.eq.s32.totalorder %s25, 1
    %p43 = por %p41, %p42
    %p44 = scmp.ne.s32.totalorder %s33, %s34
    %p45 = scmp.eq.s32.totalorder %s25, 0
    %p46 = por %p44, %p45
    %p47 = scmp.ne.s32.totalorder %s33, %s34
    %p48 = scmp.eq.s32.totalorder %s26, 1
    %p49 = por %p47, %p48
    %p51 = scmp.ne.s32.totalorder %s34, %s50
    %p52 = scmp.eq.s32.totalorder %s26, 0
    %p53 = por %p51, %p52
    %s54 = ssub.s32 %s20, %s27
    %p55 = scmp.eq.s32.totalorder %s54, 0
    %s57 = sadd.s32 %s56, 1
    %s58 = scalar_select %p55, %s56, %s57
    %p61 = pneg %p55
    %p62 = scmp.eq.s32.totalorder %s20, 1
    %p63 = por %p61, %p62
    %p64 = scmp.ne.s32.totalorder %s56, %s59
    %p65 = scmp.eq.s32.totalorder %s20, 0
    %p66 = por %p64, %p65
    %p67 = scmp.ne.s32.totalorder %s56, %s59
    %p68 = scmp.eq.s32.totalorder %s25, 1
    %p69 = por %p67, %p68
    %p70 = scmp.ne.s32.totalorder %s59, %s60
    %p71 = scmp.eq.s32.totalorder %s25, 0
    %p72 = por %p70, %p71
    %p73 = scmp.ne.s32.totalorder %s59, %s60
    %p74 = scmp.eq.s32.totalorder %s26, 1
    %p75 = por %p73, %p74
    %p77 = scmp.ne.s32.totalorder %s60, %s76
    %p78 = scmp.eq.s32.totalorder %s26, 0
    %p79 = por %p77, %p78
    %s81 = sadd.s32 %s80, 1
    %p84 = scmp.eq.s32.totalorder %s20, 1
    %p85 = scmp.ne.s32.totalorder %s80, %s82
    %p86 = scmp.eq.s32.totalorder %s20, 0
    %p87 = por %p85, %p86
    %p88 = scmp.ne.s32.totalorder %s80, %s82
    %p89 = scmp.eq.s32.totalorder %s25, 1
    %p90 = por %p88, %p89
    %p91 = scmp.ne.s32.totalorder %s82, %s83
    %p92 = scmp.eq.s32.totalorder %s25, 0
    %p93 = por %p91, %p92
    %p94 = scmp.ne.s32.totalorder %s82, %s83
    %p95 = scmp.eq.s32.totalorder %s26, 1
    %p96 = por %p94, %p95
    %p98 = scmp.ne.s32.totalorder %s83, %s97
    %p99 = scmp.eq.s32.totalorder %s26, 0
    %p100 = por %p98, %p99
    %s102 = sadd.s32 %s101, 1
    %p105 = scmp.eq.s32.totalorder %s20, 1
    %p106 = scmp.ne.s32.totalorder %s101, %s103
    %p107 = scmp.eq.s32.totalorder %s20, 0
    %p108 = por %p106, %p107
    %p109 = scmp.ne.s32.totalorder %s101, %s103
    %p110 = scmp.eq.s32.totalorder %s25, 1
    %p111 = por %p109, %p110
    %p112 = scmp.ne.s32.totalorder %s103, %s104
    %p113 = scmp.eq.s32.totalorder %s25, 0
    %p114 = por %p112, %p113
    %p115 = scmp.ne.s32.totalorder %s103, %s104
    %p116 = scmp.eq.s32.totalorder %s26, 1
    %p117 = por %p115, %p116
    %p119 = scmp.ne.s32.totalorder %s104, %s118
    %p120 = scmp.eq.s32.totalorder %s26, 0
    %p121 = por %p119, %p120
    %s123 = sadd.s32 %s122, 1
    %p126 = scmp.eq.s32.totalorder %s20, 1
    %p127 = scmp.ne.s32.totalorder %s122, %s124
    %p128 = scmp.eq.s32.totalorder %s20, 0
    %p129 = por %p127, %p128
    %p130 = scmp.ne.s32.totalorder %s122, %s124
    %p131 = scmp.eq.s32.totalorder %s25, 1
    %p132 = por %p130, %p131
    %p133 = scmp.ne.s32.totalorder %s124, %s125
    %p134 = scmp.eq.s32.totalorder %s25, 0
    %p135 = por %p133, %p134
    %p136 = scmp.ne.s32.totalorder %s124, %s125
    %p137 = scmp.eq.s32.totalorder %s26, 1
    %p138 = por %p136, %p137
    %p140 = scmp.ne.s32.totalorder %s125, %s139
    %p141 = scmp.eq.s32.totalorder %s26, 0
    %p142 = por %p140, %p141
    %s144 = sadd.s32 %s143, 1
    %p147 = scmp.eq.s32.totalorder %s20, 1
    %p148 = scmp.ne.s32.totalorder %s143, %s145
    %p149 = scmp.eq.s32.totalorder %s20, 0
    %p150 = por %p148, %p149
    %p151 = scmp.ne.s32.totalorder %s143, %s145
    %p152 = scmp.eq.s32.totalorder %s25, 1
    %p153 = por %p151, %p152
    %p154 = scmp.ne.s32.totalorder %s145, %s146
    %p155 = scmp.eq.s32.totalorder %s25, 0
    %p156 = por %p154, %p155
    %p157 = scmp.ne.s32.totalorder %s145, %s146
    %p158 = scmp.eq.s32.totalorder %s26, 1
    %p159 = por %p157, %p158
    %p161 = scmp.ne.s32.totalorder %s146, %s160
    %p162 = scmp.eq.s32.totalorder %s26, 0
    %p163 = por %p161, %p162
    %s165 = sadd.s32 %s164, 1
    %p168 = scmp.eq.s32.totalorder %s20, 1
    %p169 = scmp.ne.s32.totalorder %s164, %s166
    %p170 = scmp.eq.s32.totalorder %s20, 0
    %p171 = por %p169, %p170
    %p172 = scmp.ne.s32.totalorder %s164, %s166
    %p173 = scmp.eq.s32.totalorder %s25, 1
    %p174 = por %p172, %p173
    %p175 = scmp.ne.s32.totalorder %s166, %s167
    %p176 = scmp.eq.s32.totalorder %s25, 0
    %p177 = por %p175, %p176
    %p178 = scmp.ne.s32.totalorder %s166, %s167
    %p179 = scmp.eq.s32.totalorder %s26, 1
    %p180 = por %p178, %p179
    %p182 = scmp.ne.s32.totalorder %s167, %s181
    %p183 = scmp.eq.s32.totalorder %s26, 0
    %p184 = por %p182, %p183
    %s186 = sadd.s32 %s185, 1
    %p189 = scmp.eq.s32.totalorder %s20, 1
    %p190 = scmp.ne.s32.totalorder %s185, %s187
    %p191 = scmp.eq.s32.totalorder %s20, 0
    %p192 = por %p190, %p191
    %p193 = scmp.ne.s32.totalorder %s185, %s187
    %p194 = scmp.eq.s32.totalorder %s25, 1
    %p195 = por %p193, %p194
    %p196 = scmp.ne.s32.totalorder %s187, %s188
    %p197 = scmp.eq.s32.totalorder %s25, 0
    %p198 = por %p196, %p197
    %p199 = scmp.ne.s32.totalorder %s187, %s188
    %p200 = scmp.eq.s32.totalorder %s26, 1
    %p201 = por %p199, %p200
    %p203 = scmp.ne.s32.totalorder %s188, %s202
    %p204 = scmp.eq.s32.totalorder %s26, 0
    %p205 = por %p203, %p204
    %s207 = sadd.s32 %s206, 1
    %p210 = scmp.eq.s32.totalorder %s20, 1
    %p211 = scmp.ne.s32.totalorder %s206, %s208
    %p212 = scmp.eq.s32.totalorder %s20, 0
    %p213 = por %p211, %p212
    %p214 = scmp.ne.s32.totalorder %s206, %s208
    %p215 = scmp.eq.s32.totalorder %s25, 1
    %p216 = por %p214, %p215
    %p217 = scmp.ne.s32.totalorder %s208, %s209
    %p218 = scmp.eq.s32.totalorder %s25, 0
    %p219 = por %p217, %p218
    %p220 = scmp.ne.s32.totalorder %s208, %s209
    %p221 = scmp.eq.s32.totalorder %s26, 1
    %p222 = por %p220, %p221
    %p224 = scmp.ne.s32.totalorder %s209, %s223
    %p225 = scmp.eq.s32.totalorder %s26, 0
    %p226 = por %p224, %p225
    %s228 = sadd.s32 %s227, 1
    %p231 = scmp.eq.s32.totalorder %s20, 1
    %p232 = scmp.ne.s32.totalorder %s227, %s229
    %p233 = scmp.eq.s32.totalorder %s20, 0
    %p234 = por %p232, %p233
    %p235 = scmp.ne.s32.totalorder %s227, %s229
    %p236 = scmp.eq.s32.totalorder %s25, 1
    %p237 = por %p235, %p236
    %p238 = scmp.ne.s32.totalorder %s229, %s230
    %p239 = scmp.eq.s32.totalorder %s25, 0
    %p240 = por %p238, %p239
    %p241 = scmp.ne.s32.totalorder %s229, %s230
    %p242 = scmp.eq.s32.totalorder %s26, 1
    %p243 = por %p241, %p242
    %p245 = scmp.ne.s32.totalorder %s230, %s244
    %p246 = scmp.eq.s32.totalorder %s26, 0
    %p247 = por %p245, %p246
    %s249 = sadd.s32 %s248, 1
    %p252 = scmp.eq.s32.totalorder %s20, 1
    %p253 = scmp.ne.s32.totalorder %s248, %s250
    %p254 = scmp.eq.s32.totalorder %s20, 0
    %p255 = por %p253, %p254
    %p256 = scmp.ne.s32.totalorder %s248, %s250
    %p257 = scmp.eq.s32.totalorder %s25, 1
    %p258 = por %p256, %p257
    %p259 = scmp.ne.s32.totalorder %s250, %s251
    %p260 = scmp.eq.s32.totalorder %s25, 0
    %p261 = por %p259, %p260
    %p262 = scmp.ne.s32.totalorder %s250, %s251
    %p263 = scmp.eq.s32.totalorder %s26, 1
    %p264 = por %p262, %p263
    %p266 = scmp.ne.s32.totalorder %s251, %s265
    %p267 = scmp.eq.s32.totalorder %s26, 0
    %p268 = por %p266, %p267
    %s270 = sadd.s32 %s269, 1
    %p273 = scmp.eq.s32.totalorder %s20, 1
    %p274 = scmp.ne.s32.totalorder %s269, %s271
    %p275 = scmp.eq.s32.totalorder %s20, 0
    %p276 = por %p274, %p275
    %p277 = scmp.ne.s32.totalorder %s269, %s271
    %p278 = scmp.eq.s32.totalorder %s25, 1
    %p279 = por %p277, %p278
    %p280 = scmp.ne.s32.totalorder %s271, %s272
    %p281 = scmp.eq.s32.totalorder %s25, 0
    %p282 = por %p280, %p281
    %p283 = scmp.ne.s32.totalorder %s271, %s272
    %p284 = scmp.eq.s32.totalorder %s26, 1
    %p285 = por %p283, %p284
    %p287 = scmp.ne.s32.totalorder %s272, %s286
    %p288 = scmp.eq.s32.totalorder %s26, 0
    %p289 = por %p287, %p288
    %s291 = sadd.s32 %s290, 1
    %p294 = scmp.eq.s32.totalorder %s20, 1
    %p295 = scmp.ne.s32.totalorder %s290, %s292
    %p296 = scmp.eq.s32.totalorder %s20, 0
    %p297 = por %p295, %p296
    %p298 = scmp.ne.s32.totalorder %s290, %s292
    %p299 = scmp.eq.s32.totalorder %s25, 1
    %p300 = por %p298, %p299
    %p301 = scmp.ne.s32.totalorder %s292, %s293
    %p302 = scmp.eq.s32.totalorder %s25, 0
    %p303 = por %p301, %p302
    %p304 = scmp.ne.s32.totalorder %s292, %s293
    %p305 = scmp.eq.s32.totalorder %s26, 1
    %p306 = por %p304, %p305
    %p308 = scmp.ne.s32.totalorder %s293, %s307
    %p309 = scmp.eq.s32.totalorder %s26, 0
    %p310 = por %p308, %p309
    %s312 = sadd.s32 %s311, 1
    %p315 = scmp.eq.s32.totalorder %s20, 1
    %p316 = scmp.ne.s32.totalorder %s311, %s313
    %p317 = scmp.eq.s32.totalorder %s20, 0
    %p318 = por %p316, %p317
    %p319 = scmp.ne.s32.totalorder %s311, %s313
    %p320 = scmp.eq.s32.totalorder %s25, 1
    %p321 = por %p319, %p320
    %p322 = scmp.ne.s32.totalorder %s313, %s314
    %p323 = scmp.eq.s32.totalorder %s25, 0
    %p324 = por %p322, %p323
    %p325 = scmp.ne.s32.totalorder %s313, %s314
    %p326 = scmp.eq.s32.totalorder %s26, 1
    %p327 = por %p325, %p326
    %p329 = scmp.ne.s32.totalorder %s314, %s328
    %p330 = scmp.eq.s32.totalorder %s26, 0
    %p331 = por %p329, %p330
    %s332 = ssub.s32 %s20, %s27
    %p333 = scmp.eq.s32.totalorder %s332, 0
    %s335 = sadd.s32 %s334, 1
    %s336 = scalar_select %p333, %s334, %s335
    %p339 = pneg %p333
    %p340 = scmp.eq.s32.totalorder %s20, 1
    %p341 = por %p339, %p340
    %p342 = scmp.ne.s32.totalorder %s334, %s337
    %p343 = scmp.eq.s32.totalorder %s20, 0
    %p344 = por %p342, %p343
    %p345 = scmp.ne.s32.totalorder %s334, %s337
    %p346 = scmp.eq.s32.totalorder %s25, 1
    %p347 = por %p345, %p346
    %p348 = scmp.ne.s32.totalorder %s337, %s338
    %p349 = scmp.eq.s32.totalorder %s25, 0
    %p350 = por %p348, %p349
    %p351 = scmp.ne.s32.totalorder %s337, %s338
    %p352 = scmp.eq.s32.totalorder %s26, 1
    %p353 = por %p351, %p352
    %p355 = scmp.ne.s32.totalorder %s338, %s354
    %p356 = scmp.eq.s32.totalorder %s26, 0
    %p357 = por %p355, %p356
    %p358 = scmp.le.s32.totalorder 1, %s20
    %p359 = scmp.lt.s32.totalorder %s20, 3
    %p360 = pnand %p358, %p359
    %p361 = pneg %p360
    // Predicated region
    $region9: #{tpu_custom_call.1} parent=5 // pred_check
      _
    $region10: #{tpu_custom_call.1} parent=5 // pred_check_branch
      %363 = sbr.rel (%p360) target = $region12
    $region11: #{tpu_custom_call.1} parent=5 // pred_region
      %s364 = ssub.s32 %s20, 1
      // Predicated region
      $region13: #{tpu_custom_call.1} parent=11 // pred_check
        %p365 = pneg %p93
      $region14: #{tpu_custom_call.1} parent=11 // pred_check_branch
        %367 = sbr.rel (%p365) target = $region16
      $region15: #{tpu_custom_call.1} parent=11 // pred_region
        _
      $region16: #{tpu_custom_call.1} parent=11 // pred_fallthru
        _
      // Predicated region
      $region17: #{tpu_custom_call.1} parent=11 // pred_check
        %p368 = pneg %p114
      $region18: #{tpu_custom_call.1} parent=11 // pred_check_branch
        %370 = sbr.rel (%p368) target = $region20
      $region19: #{tpu_custom_call.1} parent=11 // pred_region
        _
      $region20: #{tpu_custom_call.1} parent=11 // pred_fallthru
        _
      // Predicated region
      $region21: #{tpu_custom_call.1} parent=11 // pred_check
        %p371 = pneg %p135
      $region22: #{tpu_custom_call.1} parent=11 // pred_check_branch
        %373 = sbr.rel (%p371) target = $region24
      $region23: #{tpu_custom_call.1} parent=11 // pred_region
        _
      $region24: #{tpu_custom_call.1} parent=11 // pred_fallthru
        _
      // Predicated region
      $region25: #{tpu_custom_call.1} parent=11 // pred_check
        %p374 = pneg %p156
      $region26: #{tpu_custom_call.1} parent=11 // pred_check_branch
        %376 = sbr.rel (%p374) target = $region28
      $region27: #{tpu_custom_call.1} parent=11 // pred_region
        _
      $region28: #{tpu_custom_call.1} parent=11 // pred_fallthru
        _
      // Predicated region
      $region29: #{tpu_custom_call.1} parent=11 // pred_check
        %p377 = pneg %p177
      $region30: #{tpu_custom_call.1} parent=11 // pred_check_branch
        %379 = sbr.rel (%p377) target = $region32
      $region31: #{tpu_custom_call.1} parent=11 // pred_region
        _
      $region32: #{tpu_custom_call.1} parent=11 // pred_fallthru
        _
      // Predicated region
      $region33: #{tpu_custom_call.1} parent=11 // pred_check
        %p380 = pneg %p198
      $region34: #{tpu_custom_call.1} parent=11 // pred_check_branch
        %382 = sbr.rel (%p380) target = $region36
      $region35: #{tpu_custom_call.1} parent=11 // pred_region
        _
      $region36: #{tpu_custom_call.1} parent=11 // pred_fallthru
        _
      // Predicated region
      $region37: #{tpu_custom_call.1} parent=11 // pred_check
        %p383 = pneg %p219
      $region38: #{tpu_custom_call.1} parent=11 // pred_check_branch
        %385 = sbr.rel (%p383) target = $region40
      $region39: #{tpu_custom_call.1} parent=11 // pred_region
        _
      $region40: #{tpu_custom_call.1} parent=11 // pred_fallthru
        _
      // Predicated region
      $region41: #{tpu_custom_call.1} parent=11 // pred_check
        %p386 = pneg %p240
      $region42: #{tpu_custom_call.1} parent=11 // pred_check_branch
        %388 = sbr.rel (%p386) target = $region44
      $region43: #{tpu_custom_call.1} parent=11 // pred_region
        _
      $region44: #{tpu_custom_call.1} parent=11 // pred_fallthru
        _
      // Predicated region
      $region45: #{tpu_custom_call.1} parent=11 // pred_check
        %p389 = pneg %p261
      $region46: #{tpu_custom_call.1} parent=11 // pred_check_branch
        %391 = sbr.rel (%p389) target = $region48
      $region47: #{tpu_custom_call.1} parent=11 // pred_region
        _
      $region48: #{tpu_custom_call.1} parent=11 // pred_fallthru
        _
      // Predicated region
      $region49: #{tpu_custom_call.1} parent=11 // pred_check
        %p392 = pneg %p282
      $region50: #{tpu_custom_call.1} parent=11 // pred_check_branch
        %394 = sbr.rel (%p392) target = $region52
      $region51: #{tpu_custom_call.1} parent=11 // pred_region
        _
      $region52: #{tpu_custom_call.1} parent=11 // pred_fallthru
        _
      // Predicated region
      $region53: #{tpu_custom_call.1} parent=11 // pred_check
        %p395 = pneg %p303
      $region54: #{tpu_custom_call.1} parent=11 // pred_check_branch
        %397 = sbr.rel (%p395) target = $region56
      $region55: #{tpu_custom_call.1} parent=11 // pred_region
        _
      $region56: #{tpu_custom_call.1} parent=11 // pred_fallthru
        _
      // Predicated region
      $region57: #{tpu_custom_call.1} parent=11 // pred_check
        %p398 = pneg %p324
      $region58: #{tpu_custom_call.1} parent=11 // pred_check_branch
        %400 = sbr.rel (%p398) target = $region60
      $region59: #{tpu_custom_call.1} parent=11 // pred_region
        _
      $region60: #{tpu_custom_call.1} parent=11 // pred_fallthru
        _
    $region12: #{tpu_custom_call.1} parent=5 // pred_fallthru
      _
    %p401 = scmp.lt.s32.totalorder %s20, 2
    // Predicated region
    $region61: #{tpu_custom_call.1} parent=5 // pred_check
      %p402 = pneg %p401
    $region62: #{tpu_custom_call.1} parent=5 // pred_check_branch
      %404 = sbr.rel (%p402) target = $region64
    $region63: #{tpu_custom_call.1} parent=5 // pred_region
      // Predicated region
      $region65: #{tpu_custom_call.1} parent=63 // pred_check
        %p405 = pneg %p40
      $region66: #{tpu_custom_call.1} parent=63 // pred_check_branch
        %407 = sbr.rel (%p405) target = $region68
      $region67: #{tpu_custom_call.1} parent=63 // pred_region
        %p408 = scmp.lt.s32.totalorder %s20, 1
        %s409 = scalar_select %p408, %s20, 1
        %s410 = smul.addr %s409, 32
        %s411 = smul.addr %s410, 8
        %s412 = scalar_lea.vmem %s0, %s411
      $region68: #{tpu_custom_call.1} parent=63 // pred_fallthru
        _
      // Predicated region
      $region69: #{tpu_custom_call.1} parent=63 // pred_check
        %p413 = pneg %p66
      $region70: #{tpu_custom_call.1} parent=63 // pred_check_branch
        %415 = sbr.rel (%p413) target = $region72
      $region71: #{tpu_custom_call.1} parent=63 // pred_region
        %p416 = scmp.lt.s32.totalorder %s20, 1
        %s417 = scalar_select %p416, %s20, 1
        %s418 = scalar_lea.vmem %s1, %s417
      $region72: #{tpu_custom_call.1} parent=63 // pred_fallthru
        _
    $region64: #{tpu_custom_call.1} parent=5 // pred_fallthru
      _
    %p419 = scmp.le.s32.totalorder 1, %s20
    %p420 = scmp.lt.s32.totalorder %s20, 3
    %p421 = pnand %p419, %p420
    %p422 = pneg %p421
    // Predicated region
    $region73: #{tpu_custom_call.1} parent=5 // pred_check
      _
    $region74: #{tpu_custom_call.1} parent=5 // pred_check_branch
      %424 = sbr.rel (%p421) target = $region76
    $region75: #{tpu_custom_call.1} parent=5 // pred_region
      %s425 = ssub.s32 %s20, 1
      %p426 = scmp.lt.s32.totalorder %s25, 1
      %s427 = scalar_select %p426, %s25, 1
      %s428 = smul.addr %s427, 32
      %s429 = smul.addr %s428, 8
      %s430 = scalar_lea.vmem %s0, %s429
      %p431 = pneg %p46
      %p432 = pneg %p43
      %p433 = scmp.lt.s32.totalorder %s25, 1
      %s434 = scalar_select %p433, %s25, 1
      %s435 = scalar_lea.vmem %s1, %s434
      %p436 = pneg %p72
      %p437 = pneg %p69
      %p438 = pneg %p93
      %p439 = pneg %p90
      %p440 = pneg %p114
      %p441 = pneg %p111
      %p442 = pneg %p135
      %p443 = pneg %p132
      %p444 = pneg %p156
      %p445 = pneg %p153
      %p446 = pneg %p177
      %p447 = pneg %p174
      %p448 = pneg %p198
      %p449 = pneg %p195
      %p450 = pneg %p219
      %p451 = pneg %p216
      %p452 = pneg %p240
      %p453 = pneg %p237
      %p454 = pneg %p261
      %p455 = pneg %p258
      %p456 = pneg %p282
      %p457 = pneg %p279
      %p458 = pneg %p303
      %p459 = pneg %p300
      %p460 = pneg %p324
      %p461 = pneg %p321
      %p462 = pneg %p350
      %p463 = pneg %p347
      %p464 = scmp.lt.s32.totalorder %s25, 1
      %s465 = scalar_select %p464, %s25, 1
      %s466 = smul.addr %s465, 32
      %s467 = smul.addr %s466, 8
      %s468 = scalar_lea.vmem %s14, %s467
      %p469 = scmp.lt.s32.totalorder %s25, 1
      %s470 = scalar_select %p469, %s25, 1
      %s471 = smul.addr %s470, 32
      %s472 = smul.addr %s471, 8
      %s473 = scalar_lea.vmem %s0, %s472
      %p474 = scmp.lt.s32.totalorder %s25, 1
      %s475 = scalar_select %p474, %s25, 1
      %s476 = scalar_lea.vmem %s1, %s475
      %p477 = scmp.lt.s32.totalorder %s25, 1
      %s478 = scalar_select %p477, %s25, 1
      %s479 = smul.addr %s478, 32
      %s480 = smul.addr %s479, 8
      %s481 = scalar_lea.vmem %s14, %s480
      %v482 = vld [vmem:[%s473] sm:$0xff]
      %v483 = vld [vmem:[%s473 + $0x8] sm:$0xff]
      %v484 = vld [vmem:[%s473 + $0x10] sm:$0xff]
      %v485 = vld [vmem:[%s473 + $0x18] sm:$0xff]
      %v486 = vld [vmem:[%s473 + $0x20] sm:$0xff]
      %v487 = vld [vmem:[%s473 + $0x28] sm:$0xff]
      %v488 = vld [vmem:[%s473 + $0x30] sm:$0xff]
      %v489 = vld [vmem:[%s473 + $0x38] sm:$0xff]
      %v490 = vld [vmem:[%s473 + $0x40] sm:$0xff]
      %v491 = vld [vmem:[%s473 + $0x48] sm:$0xff]
      %v492 = vld [vmem:[%s473 + $0x50] sm:$0xff]
      %v493 = vld [vmem:[%s473 + $0x58] sm:$0xff]
      %v494 = vld [vmem:[%s473 + $0x60] sm:$0xff]
      %v495 = vld [vmem:[%s473 + $0x68] sm:$0xff]
      %v496 = vld [vmem:[%s473 + $0x70] sm:$0xff]
      %v497 = vld [vmem:[%s473 + $0x78] sm:$0xff]
      %v498 = vld [vmem:[%s473 + $0x80] sm:$0xff]
      %v499 = vld [vmem:[%s473 + $0x88] sm:$0xff]
      %v500 = vld [vmem:[%s473 + $0x90] sm:$0xff]
      %v501 = vld [vmem:[%s473 + $0x98] sm:$0xff]
      %v502 = vld [vmem:[%s473 + $0xa0] sm:$0xff]
      %v503 = vld [vmem:[%s473 + $0xa8] sm:$0xff]
      %v504 = vld [vmem:[%s473 + $0xb0] sm:$0xff]
      %v505 = vld [vmem:[%s473 + $0xb8] sm:$0xff]
      %v506 = vld [vmem:[%s473 + $0xc0] sm:$0xff]
      %v507 = vld [vmem:[%s473 + $0xc8] sm:$0xff]
      %v508 = vld [vmem:[%s473 + $0xd0] sm:$0xff]
      %v509 = vld [vmem:[%s473 + $0xd8] sm:$0xff]
      %v510 = vld [vmem:[%s473 + $0xe0] sm:$0xff]
      %v511 = vld [vmem:[%s473 + $0xe8] sm:$0xff]
      %v512 = vld [vmem:[%s473 + $0xf0] sm:$0xff]
      %v513 = vld [vmem:[%s473 + $0xf8] sm:$0xff]
      %vm514 = vcmask 31744
      %v515 = vsel %vm514, %v482, 0.0
      %v516 = vsel %vm514, %v483, 0.0
      %v517 = vadd.f32 %v515, %v516
      %v518 = vsel %vm514, %v484, 0.0
      %v519 = vadd.f32 %v517, %v518
      %v520 = vsel %vm514, %v485, 0.0
      %v521 = vadd.f32 %v519, %v520
      %v522 = vsel %vm514, %v486, 0.0
      %v523 = vadd.f32 %v521, %v522
      %v524 = vsel %vm514, %v487, 0.0
      %v525 = vadd.f32 %v523, %v524
      %v526 = vsel %vm514, %v488, 0.0
      %v527 = vadd.f32 %v525, %v526
      %v528 = vsel %vm514, %v489, 0.0
      %v529 = vadd.f32 %v527, %v528
      %v530 = vsel %vm514, %v490, 0.0
      %v531 = vadd.f32 %v529, %v530
      %v532 = vsel %vm514, %v491, 0.0
      %v533 = vadd.f32 %v531, %v532
      %v534 = vsel %vm514, %v492, 0.0
      %v535 = vadd.f32 %v533, %v534
      %v536 = vsel %vm514, %v493, 0.0
      %v537 = vadd.f32 %v535, %v536
      %v538 = vsel %vm514, %v494, 0.0
      %v539 = vadd.f32 %v537, %v538
      %v540 = vsel %vm514, %v495, 0.0
      %v541 = vadd.f32 %v539, %v540
      %v542 = vsel %vm514, %v496, 0.0
      %v543 = vadd.f32 %v541, %v542
      %v544 = vsel %vm514, %v497, 0.0
      %v545 = vadd.f32 %v543, %v544
      %v546 = vsel %vm514, %v498, 0.0
      %v547 = vadd.f32 %v545, %v546
      %v548 = vsel %vm514, %v499, 0.0
      %v549 = vadd.f32 %v547, %v548
      %v550 = vsel %vm514, %v500, 0.0
      %v551 = vadd.f32 %v549, %v550
      %v552 = vsel %vm514, %v501, 0.0
      %v553 = vadd.f32 %v551, %v552
      %v554 = vsel %vm514, %v502, 0.0
      %v555 = vadd.f32 %v553, %v554
      %v556 = vsel %vm514, %v503, 0.0
      %v557 = vadd.f32 %v555, %v556
      %v558 = vsel %vm514, %v504, 0.0
      %v559 = vadd.f32 %v557, %v558
      %v560 = vsel %vm514, %v505, 0.0
      %v561 = vadd.f32 %v559, %v560
      %v562 = vsel %vm514, %v506, 0.0
      %v563 = vadd.f32 %v561, %v562
      %v564 = vsel %vm514, %v507, 0.0
      %v565 = vadd.f32 %v563, %v564
      %v566 = vsel %vm514, %v508, 0.0
      %v567 = vadd.f32 %v565, %v566
      %v568 = vsel %vm514, %v509, 0.0
      %v569 = vadd.f32 %v567, %v568
      %v570 = vsel %vm514, %v510, 0.0
      %v571 = vadd.f32 %v569, %v570
      %v572 = vsel %vm514, %v511, 0.0
      %v573 = vadd.f32 %v571, %v572
      %v574 = vsel %vm514, %v512, 0.0
      %v575 = vadd.f32 %v573, %v574
      %v576 = vsel %vm514, %v513, 0.0
      %v577 = vadd.f32 %v575, %v576
      %v578 = vrot.slane %v577, 4
      %v579 = vadd.f32 %v577, %v578
      %v580 = vrot.slane %v579, 2
      %v581 = vadd.f32 %v579, %v580
      %v582 = vrot.slane %v581, 1
      %v583 = vadd.f32 %v581, %v582
      %v584 = vmul.f32 %v482, %v482
      %v585 = vmul.f32 %v483, %v483
      %v586 = vmul.f32 %v484, %v484
      %v587 = vmul.f32 %v485, %v485
      %v588 = vmul.f32 %v486, %v486
      %v589 = vmul.f32 %v487, %v487
      %v590 = vmul.f32 %v488, %v488
      %v591 = vmul.f32 %v489, %v489
      %v592 = vmul.f32 %v490, %v490
      %v593 = vmul.f32 %v491, %v491
      %v594 = vmul.f32 %v492, %v492
      %v595 = vmul.f32 %v493, %v493
      %v596 = vmul.f32 %v494, %v494
      %v597 = vmul.f32 %v495, %v495
      %v598 = vmul.f32 %v496, %v496
      %v599 = vmul.f32 %v497, %v497
      %v600 = vmul.f32 %v498, %v498
      %v601 = vmul.f32 %v499, %v499
      %v602 = vmul.f32 %v500, %v500
      %v603 = vmul.f32 %v501, %v501
      %v604 = vmul.f32 %v502, %v502
      %v605 = vmul.f32 %v503, %v503
      %v606 = vmul.f32 %v504, %v504
      %v607 = vmul.f32 %v505, %v505
      %v608 = vmul.f32 %v506, %v506
      %v609 = vmul.f32 %v507, %v507
      %v610 = vmul.f32 %v508, %v508
      %v611 = vmul.f32 %v509, %v509
      %v612 = vmul.f32 %v510, %v510
      %v613 = vmul.f32 %v511, %v511
      %v614 = vmul.f32 %v512, %v512
      %v615 = vmul.f32 %v513, %v513
      %v616 = vsel %vm514, %v584, 0.0
      %v617 = vsel %vm514, %v585, 0.0
      %v618 = vadd.f32 %v616, %v617
      %v619 = vsel %vm514, %v586, 0.0
      %v620 = vadd.f32 %v618, %v619
      %v621 = vsel %vm514, %v587, 0.0
      %v622 = vadd.f32 %v620, %v621
      %v623 = vsel %vm514, %v588, 0.0
      %v624 = vadd.f32 %v622, %v623
      %v625 = vsel %vm514, %v589, 0.0
      %v626 = vadd.f32 %v624, %v625
      %v627 = vsel %vm514, %v590, 0.0
      %v628 = vadd.f32 %v626, %v627
      %v629 = vsel %vm514, %v591, 0.0
      %v630 = vadd.f32 %v628, %v629
      %v631 = vsel %vm514, %v592, 0.0
      %v632 = vadd.f32 %v630, %v631
      %v633 = vsel %vm514, %v593, 0.0
      %v634 = vadd.f32 %v632, %v633
      %v635 = vsel %vm514, %v594, 0.0
      %v636 = vadd.f32 %v634, %v635
      %v637 = vsel %vm514, %v595, 0.0
      %v638 = vadd.f32 %v636, %v637
      %v639 = vsel %vm514, %v596, 0.0
      %v640 = vadd.f32 %v638, %v639
      %v641 = vsel %vm514, %v597, 0.0
      %v642 = vadd.f32 %v640, %v641
      %v643 = vsel %vm514, %v598, 0.0
      %v644 = vadd.f32 %v642, %v643
      %v645 = vsel %vm514, %v599, 0.0
      %v646 = vadd.f32 %v644, %v645
      %v647 = vsel %vm514, %v600, 0.0
      %v648 = vadd.f32 %v646, %v647
      %v649 = vsel %vm514, %v601, 0.0
      %v650 = vadd.f32 %v648, %v649
      %v651 = vsel %vm514, %v602, 0.0
      %v652 = vadd.f32 %v650, %v651
      %v653 = vsel %vm514, %v603, 0.0
      %v654 = vadd.f32 %v652, %v653
      %v655 = vsel %vm514, %v604, 0.0
      %v656 = vadd.f32 %v654, %v655
      %v657 = vsel %vm514, %v605, 0.0
      %v658 = vadd.f32 %v656, %v657
      %v659 = vsel %vm514, %v606, 0.0
      %v660 = vadd.f32 %v658, %v659
      %v661 = vsel %vm514, %v607, 0.0
      %v662 = vadd.f32 %v660, %v661
      %v663 = vsel %vm514, %v608, 0.0
      %v664 = vadd.f32 %v662, %v663
      %v665 = vsel %vm514, %v609, 0.0
      %v666 = vadd.f32 %v664, %v665
      %v667 = vsel %vm514, %v610, 0.0
      %v668 = vadd.f32 %v666, %v667
      %v669 = vsel %vm514, %v611, 0.0
      %v670 = vadd.f32 %v668, %v669
      %v671 = vsel %vm514, %v612, 0.0
      %v672 = vadd.f32 %v670, %v671
      %v673 = vsel %vm514, %v613, 0.0
      %v674 = vadd.f32 %v672, %v673
      %v675 = vsel %vm514, %v614, 0.0
      %v676 = vadd.f32 %v674, %v675
      %v677 = vsel %vm514, %v615, 0.0
      %v678 = vadd.f32 %v676, %v677
      %v679 = vrot.slane %v678, 4
      %v680 = vadd.f32 %v678, %v679
      %v681 = vrot.slane %v680, 2
      %v682 = vadd.f32 %v680, %v681
      %v683 = vrot.slane %v682, 1
      %v684 = vadd.f32 %v682, %v683
      %v685 = vld [vmem:[%s4] sm:$0xf]
      %v687 = vsel %vm514, %v583, 0
      %vm689 = vcmask 1043456
      %v691 = vsel %vm689, %v685, 0
      %693 = vmatprep.subr.mxu0 0.0
      %694 = vmatpush1.msra.mxu0 %v691
      %695 = vmatprep.subr.mxu0 0.0
      %696 = vmatpush1.msra.mxu0 0.0
      %697 = vmatprep.subr.mxu0 0.0
      %698 = vmatpush1.msra.mxu0 0.0
      %699 = vmatprep.subr.mxu0 0.0
      %700 = vmatpush1.msra.mxu0 0.0
      %701 = vmatprep.subr.mxu0 0.0
      %702 = vmatpush1.msra.mxu0 0.0
      %703 = vmatprep.subr.mxu0 0.0
      %704 = vmatpush1.msra.mxu0 0.0
      %705 = vmatprep.subr.mxu0 0.0
      %706 = vmatpush1.msra.mxu0 0.0
      %707 = vmatprep.subr.mxu0 0.0
      %708 = vmatpush1.msra.mxu0 0.0
      %709 = vmatprep.subr.mxu0 0.0
      %710 = vmatpush1.msra.mxu0 0.0
      %711 = vmatprep.subr.mxu0 0.0
      %712 = vmatpush1.msra.mxu0 0.0
      %713 = vmatprep.subr.mxu0 0.0
      %714 = vmatpush1.msra.mxu0 0.0
      %715 = vmatprep.subr.mxu0 0.0
      %716 = vmatpush1.msra.mxu0 0.0
      %717 = vmatprep.subr.mxu0 0.0
      %718 = vmatpush1.msra.mxu0 0.0
      %719 = vmatprep.subr.mxu0 0.0
      %720 = vmatpush1.msra.mxu0 0.0
      %721 = vmatprep.subr.mxu0 0.0
      %722 = vmatpush1.msra.mxu0 0.0
      %723 = vmatprep.subr.mxu0 0.0
      %724 = vmatpush1.msra.mxu0 0.0
      %725 = vmatprep.subr.mxu0 0.0
      %726 = vmatpush1.msra.mxu0 0.0
      %727 = vmatprep.subr.mxu0 0.0
      %728 = vmatpush1.msra.mxu0 0.0
      %729 = vmatprep.subr.mxu0 0.0
      %730 = vmatpush1.msra.mxu0 0.0
      %731 = vmatprep.subr.mxu0 0.0
      %732 = vmatpush1.msra.mxu0 0.0
      %733 = vmatprep.subr.mxu0 0.0
      %734 = vmatpush1.msra.mxu0 0.0
      %735 = vmatprep.subr.mxu0 0.0
      %736 = vmatpush1.msra.mxu0 0.0
      %737 = vmatprep.subr.mxu0 0.0
      %738 = vmatpush1.msra.mxu0 0.0
      %739 = vmatprep.subr.mxu0 0.0
      %740 = vmatpush1.msra.mxu0 0.0
      %741 = vmatprep.subr.mxu0 0.0
      %742 = vmatpush1.msra.mxu0 0.0
      %743 = vmatprep.subr.mxu0 0.0
      %744 = vmatpush1.msra.mxu0 0.0
      %745 = vmatprep.subr.mxu0 0.0
      %746 = vmatpush1.msra.mxu0 0.0
      %747 = vmatprep.subr.mxu0 0.0
      %748 = vmatpush1.msra.mxu0 0.0
      %749 = vmatprep.subr.mxu0 0.0
      %750 = vmatpush1.msra.mxu0 0.0
      %751 = vmatprep.subr.mxu0 0.0
      %752 = vmatpush1.msra.mxu0 0.0
      %753 = vmatprep.subr.mxu0 0.0
      %754 = vmatpush1.msra.mxu0 0.0
      %755 = vmatprep.subr.mxu0 0.0
      %756 = vmatpush1.msra.mxu0 0.0
      %757 = vmatprep.mubr.f32.mxu0 0.0
      %758 = vmatmul.mubr.f32.gmra.mrb[0].mxu0 %v687
      %v759 = vpop.f32.mrb[0].mxu0
      %v760 = vadd.f32 0.0, %v759
      %v761 = vpop.f32.mrb[0].mxu0
      %762 = vdwg.mxu0
      %v764 = vsel %vm514, %v684, 0
      %766 = vmatprep.subr.mxu0 0.0
      %767 = vmatpush1.msra.mxu0 %v691
      %768 = vmatprep.subr.mxu0 0.0
      %769 = vmatpush1.msra.mxu0 0.0
      %770 = vmatprep.subr.mxu0 0.0
      %771 = vmatpush1.msra.mxu0 0.0
      %772 = vmatprep.subr.mxu0 0.0
      %773 = vmatpush1.msra.mxu0 0.0
      %774 = vmatprep.subr.mxu0 0.0
      %775 = vmatpush1.msra.mxu0 0.0
      %776 = vmatprep.subr.mxu0 0.0
      %777 = vmatpush1.msra.mxu0 0.0
      %778 = vmatprep.subr.mxu0 0.0
      %779 = vmatpush1.msra.mxu0 0.0
      %780 = vmatprep.subr.mxu0 0.0
      %781 = vmatpush1.msra.mxu0 0.0
      %782 = vmatprep.subr.mxu0 0.0
      %783 = vmatpush1.msra.mxu0 0.0
      %784 = vmatprep.subr.mxu0 0.0
      %785 = vmatpush1.msra.mxu0 0.0
      %786 = vmatprep.subr.mxu0 0.0
      %787 = vmatpush1.msra.mxu0 0.0
      %788 = vmatprep.subr.mxu0 0.0
      %789 = vmatpush1.msra.mxu0 0.0
      %790 = vmatprep.subr.mxu0 0.0
      %791 = vmatpush1.msra.mxu0 0.0
      %792 = vmatprep.subr.mxu0 0.0
      %793 = vmatpush1.msra.mxu0 0.0
      %794 = vmatprep.subr.mxu0 0.0
      %795 = vmatpush1.msra.mxu0 0.0
      %796 = vmatprep.subr.mxu0 0.0
      %797 = vmatpush1.msra.mxu0 0.0
      %798 = vmatprep.subr.mxu0 0.0
      %799 = vmatpush1.msra.mxu0 0.0
      %800 = vmatprep.subr.mxu0 0.0
      %801 = vmatpush1.msra.mxu0 0.0
      %802 = vmatprep.subr.mxu0 0.0
      %803 = vmatpush1.msra.mxu0 0.0
      %804 = vmatprep.subr.mxu0 0.0
      %805 = vmatpush1.msra.mxu0 0.0
      %806 = vmatprep.subr.mxu0 0.0
      %807 = vmatpush1.msra.mxu0 0.0
      %808 = vmatprep.subr.mxu0 0.0
      %809 = vmatpush1.msra.mxu0 0.0
      %810 = vmatprep.subr.mxu0 0.0
      %811 = vmatpush1.msra.mxu0 0.0
      %812 = vmatprep.subr.mxu0 0.0
      %813 = vmatpush1.msra.mxu0 0.0
      %814 = vmatprep.subr.mxu0 0.0
      %815 = vmatpush1.msra.mxu0 0.0
      %816 = vmatprep.subr.mxu0 0.0
      %817 = vmatpush1.msra.mxu0 0.0
      %818 = vmatprep.subr.mxu0 0.0
      %819 = vmatpush1.msra.mxu0 0.0
      %820 = vmatprep.subr.mxu0 0.0
      %821 = vmatpush1.msra.mxu0 0.0
      %822 = vmatprep.subr.mxu0 0.0
      %823 = vmatpush1.msra.mxu0 0.0
      %824 = vmatprep.subr.mxu0 0.0
      %825 = vmatpush1.msra.mxu0 0.0
      %826 = vmatprep.subr.mxu0 0.0
      %827 = vmatpush1.msra.mxu0 0.0
      %828 = vmatprep.subr.mxu0 0.0
      %829 = vmatpush1.msra.mxu0 0.0
      %830 = vmatprep.mubr.f32.mxu0 0.0
      %831 = vmatmul.mubr.f32.gmra.mrb[0].mxu0 %v764
      %v832 = vpop.f32.mrb[0].mxu0
      %v833 = vadd.f32 0.0, %v832
      %v834 = vpop.f32.mrb[0].mxu0
      %835 = vdwg.mxu0
      %v836 = vmul.f32 %v760, %v760
      %v837 = vsub.f32 %v833, %v836
      %v838 = vadd.f32 %v837, 1e-06
      %v839 = vrsqrt.pop %v838
      %v840 = vlaneseq
      %v841 = vshrl.u32 %v840, 7
      %v842 = vsub.s32 0, %v841
      %v843 = vrot.slane %v760, %v842
      %v844 = vsub.f32 %v482, %v843
      %v845 = vsub.f32 %v483, %v843
      %v846 = vsub.f32 %v484, %v843
      %v847 = vsub.f32 %v485, %v843
      %v848 = vsub.f32 %v486, %v843
      %v849 = vsub.f32 %v487, %v843
      %v850 = vsub.f32 %v488, %v843
      %v851 = vsub.f32 %v489, %v843
      %v852 = vsub.f32 %v490, %v843
      %v853 = vsub.f32 %v491, %v843
      %v854 = vsub.f32 %v492, %v843
      %v855 = vsub.f32 %v493, %v843
      %v856 = vsub.f32 %v494, %v843
      %v857 = vsub.f32 %v495, %v843
      %v858 = vsub.f32 %v496, %v843
      %v859 = vsub.f32 %v497, %v843
      %v860 = vsub.f32 %v498, %v843
      %v861 = vsub.f32 %v499, %v843
      %v862 = vsub.f32 %v500, %v843
      %v863 = vsub.f32 %v501, %v843
      %v864 = vsub.f32 %v502, %v843
      %v865 = vsub.f32 %v503, %v843
      %v866 = vsub.f32 %v504, %v843
      %v867 = vsub.f32 %v505, %v843
      %v868 = vsub.f32 %v506, %v843
      %v869 = vsub.f32 %v507, %v843
      %v870 = vsub.f32 %v508, %v843
      %v871 = vsub.f32 %v509, %v843
      %v872 = vsub.f32 %v510, %v843
      %v873 = vsub.f32 %v511, %v843
      %v874 = vsub.f32 %v512, %v843
      %v875 = vsub.f32 %v513, %v843
      %v876 = vlaneseq
      %v877 = vshrl.u32 %v876, 7
      %v878 = vsub.s32 0, %v877
      %v879 = vrot.slane %v839, %v878
      %v880 = vmul.f32 %v844, %v879
      %v881 = vmul.f32 %v845, %v879
      %v882 = vmul.f32 %v846, %v879
      %v883 = vmul.f32 %v847, %v879
      %v884 = vmul.f32 %v848, %v879
      %v885 = vmul.f32 %v849, %v879
      %v886 = vmul.f32 %v850, %v879
      %v887 = vmul.f32 %v851, %v879
      %v888 = vmul.f32 %v852, %v879
      %v889 = vmul.f32 %v853, %v879
      %v890 = vmul.f32 %v854, %v879
      %v891 = vmul.f32 %v855, %v879
      %v892 = vmul.f32 %v856, %v879
      %v893 = vmul.f32 %v857, %v879
      %v894 = vmul.f32 %v858, %v879
      %v895 = vmul.f32 %v859, %v879
      %v896 = vmul.f32 %v860, %v879
      %v897 = vmul.f32 %v861, %v879
      %v898 = vmul.f32 %v862, %v879
      %v899 = vmul.f32 %v863, %v879
      %v900 = vmul.f32 %v864, %v879
      %v901 = vmul.f32 %v865, %v879
      %v902 = vmul.f32 %v866, %v879
      %v903 = vmul.f32 %v867, %v879
      %v904 = vmul.f32 %v868, %v879
      %v905 = vmul.f32 %v869, %v879
      %v906 = vmul.f32 %v870, %v879
      %v907 = vmul.f32 %v871, %v879
      %v908 = vmul.f32 %v872, %v879
      %v909 = vmul.f32 %v873, %v879
      %v910 = vmul.f32 %v874, %v879
      %v911 = vmul.f32 %v875, %v879
      %v912 = vld [vmem:[%s2] sm:$0x1]
      %v914 = vlaneseq
      %v915 = vshrl.u32 %v914, 7
      %v916 = vsub.s32 0, %v915
      %v917 = vrot.slane %v912, %v916
      %v919 = vmul.f32 %v880, %v917
      %v920 = vmul.f32 %v881, %v917
      %v921 = vmul.f32 %v882, %v917
      %v922 = vmul.f32 %v883, %v917
      %v923 = vmul.f32 %v884, %v917
      %v924 = vmul.f32 %v885, %v917
      %v925 = vmul.f32 %v886, %v917
      %v926 = vmul.f32 %v887, %v917
      %v927 = vmul.f32 %v888, %v917
      %v928 = vmul.f32 %v889, %v917
      %v929 = vmul.f32 %v890, %v917
      %v930 = vmul.f32 %v891, %v917
      %v931 = vmul.f32 %v892, %v917
      %v932 = vmul.f32 %v893, %v917
      %v933 = vmul.f32 %v894, %v917
      %v934 = vmul.f32 %v895, %v917
      %v935 = vmul.f32 %v896, %v917
      %v936 = vmul.f32 %v897, %v917
      %v937 = vmul.f32 %v898, %v917
      %v938 = vmul.f32 %v899, %v917
      %v939 = vmul.f32 %v900, %v917
      %v940 = vmul.f32 %v901, %v917
      %v941 = vmul.f32 %v902, %v917
      %v942 = vmul.f32 %v903, %v917
      %v943 = vmul.f32 %v904, %v917
      %v944 = vmul.f32 %v905, %v917
      %v945 = vmul.f32 %v906, %v917
      %v946 = vmul.f32 %v907, %v917
      %v947 = vmul.f32 %v908, %v917
      %v948 = vmul.f32 %v909, %v917
      %v949 = vmul.f32 %v910, %v917
      %v950 = vmul.f32 %v911, %v917
      %v951 = vld [vmem:[%s3] sm:$0x1]
      %v953 = vlaneseq
      %v954 = vshrl.u32 %v953, 7
      %v955 = vsub.s32 0, %v954
      %v956 = vrot.slane %v951, %v955
      %v958 = vadd.f32 %v919, %v956
      %v959 = vadd.f32 %v920, %v956
      %v960 = vadd.f32 %v921, %v956
      %v961 = vadd.f32 %v922, %v956
      %v962 = vadd.f32 %v923, %v956
      %v963 = vadd.f32 %v924, %v956
      %v964 = vadd.f32 %v925, %v956
      %v965 = vadd.f32 %v926, %v956
      %v966 = vadd.f32 %v927, %v956
      %v967 = vadd.f32 %v928, %v956
      %v968 = vadd.f32 %v929, %v956
      %v969 = vadd.f32 %v930, %v956
      %v970 = vadd.f32 %v931, %v956
      %v971 = vadd.f32 %v932, %v956
      %v972 = vadd.f32 %v933, %v956
      %v973 = vadd.f32 %v934, %v956
      %v974 = vadd.f32 %v935, %v956
      %v975 = vadd.f32 %v936, %v956
      %v976 = vadd.f32 %v937, %v956
      %v977 = vadd.f32 %v938, %v956
      %v978 = vadd.f32 %v939, %v956
      %v979 = vadd.f32 %v940, %v956
      %v980 = vadd.f32 %v941, %v956
      %v981 = vadd.f32 %v942, %v956
      %v982 = vadd.f32 %v943, %v956
      %v983 = vadd.f32 %v944, %v956
      %v984 = vadd.f32 %v945, %v956
      %v985 = vadd.f32 %v946, %v956
      %v986 = vadd.f32 %v947, %v956
      %v987 = vadd.f32 %v948, %v956
      %v988 = vadd.f32 %v949, %v956
      %v989 = vadd.f32 %v950, %v956
      %v990 = vsub.f32 0.0, %v958
      %v991 = vsub.f32 0.0, %v959
      %v992 = vsub.f32 0.0, %v960
      %v993 = vsub.f32 0.0, %v961
      %v994 = vsub.f32 0.0, %v962
      %v995 = vsub.f32 0.0, %v963
      %v996 = vsub.f32 0.0, %v964
      %v997 = vsub.f32 0.0, %v965
      %v998 = vsub.f32 0.0, %v966
      %v999 = vsub.f32 0.0, %v967
      %v1000 = vsub.f32 0.0, %v968
      %v1001 = vsub.f32 0.0, %v969
      %v1002 = vsub.f32 0.0, %v970
      %v1003 = vsub.f32 0.0, %v971
      %v1004 = vsub.f32 0.0, %v972
      %v1005 = vsub.f32 0.0, %v973
      %v1006 = vsub.f32 0.0, %v974
      %v1007 = vsub.f32 0.0, %v975
      %v1008 = vsub.f32 0.0, %v976
      %v1009 = vsub.f32 0.0, %v977
      %v1010 = vsub.f32 0.0, %v978
      %v1011 = vsub.f32 0.0, %v979
      %v1012 = vsub.f32 0.0, %v980
      %v1013 = vsub.f32 0.0, %v981
      %v1014 = vsub.f32 0.0, %v982
      %v1015 = vsub.f32 0.0, %v983
      %v1016 = vsub.f32 0.0, %v984
      %v1017 = vsub.f32 0.0, %v985
      %v1018 = vsub.f32 0.0, %v986
      %v1019 = vsub.f32 0.0, %v987
      %v1020 = vsub.f32 0.0, %v988
      %v1021 = vsub.f32 0.0, %v989
      %v1022 = vmul.f32 %v990, 1.442695
      %v1023 = vpow.pop %v1022
      %v1024 = vmul.f32 %v991, 1.442695
      %v1025 = vpow.pop %v1024
      %v1026 = vmul.f32 %v992, 1.442695
      %v1027 = vpow.pop %v1026
      %v1028 = vmul.f32 %v993, 1.442695
      %v1029 = vpow.pop %v1028
      %v1030 = vmul.f32 %v994, 1.442695
      %v1031 = vpow.pop %v1030
      %v1032 = vmul.f32 %v995, 1.442695
      %v1033 = vpow.pop %v1032
      %v1034 = vmul.f32 %v996, 1.442695
      %v1035 = vpow.pop %v1034
      %v1036 = vmul.f32 %v997, 1.442695
      %v1037 = vpow.pop %v1036
      %v1038 = vmul.f32 %v998, 1.442695
      %v1039 = vpow.pop %v1038
      %v1040 = vmul.f32 %v999, 1.442695
      %v1041 = vpow.pop %v1040
      %v1042 = vmul.f32 %v1000, 1.442695
      %v1043 = vpow.pop %v1042
      %v1044 = vmul.f32 %v1001, 1.442695
      %v1045 = vpow.pop %v1044
      %v1046 = vmul.f32 %v1002, 1.442695
      %v1047 = vpow.pop %v1046
      %v1048 = vmul.f32 %v1003, 1.442695
      %v1049 = vpow.pop %v1048
      %v1050 = vmul.f32 %v1004, 1.442695
      %v1051 = vpow.pop %v1050
      %v1052 = vmul.f32 %v1005, 1.442695
      %v1053 = vpow.pop %v1052
      %v1054 = vmul.f32 %v1006, 1.442695
      %v1055 = vpow.pop %v1054
      %v1056 = vmul.f32 %v1007, 1.442695
      %v1057 = vpow.pop %v1056
      %v1058 = vmul.f32 %v1008, 1.442695
      %v1059 = vpow.pop %v1058
      %v1060 = vmul.f32 %v1009, 1.442695
      %v1061 = vpow.pop %v1060
      %v1062 = vmul.f32 %v1010, 1.442695
      %v1063 = vpow.pop %v1062
      %v1064 = vmul.f32 %v1011, 1.442695
      %v1065 = vpow.pop %v1064
      %v1066 = vmul.f32 %v1012, 1.442695
      %v1067 = vpow.pop %v1066
      %v1068 = vmul.f32 %v1013, 1.442695
      %v1069 = vpow.pop %v1068
      %v1070 = vmul.f32 %v1014, 1.442695
      %v1071 = vpow.pop %v1070
      %v1072 = vmul.f32 %v1015, 1.442695
      %v1073 = vpow.pop %v1072
      %v1074 = vmul.f32 %v1016, 1.442695
      %v1075 = vpow.pop %v1074
      %v1076 = vmul.f32 %v1017, 1.442695
      %v1077 = vpow.pop %v1076
      %v1078 = vmul.f32 %v1018, 1.442695
      %v1079 = vpow.pop %v1078
      %v1080 = vmul.f32 %v1019, 1.442695
      %v1081 = vpow.pop %v1080
      %v1082 = vmul.f32 %v1020, 1.442695
      %v1083 = vpow.pop %v1082
      %v1084 = vmul.f32 %v1021, 1.442695
      %v1085 = vpow.pop %v1084
      %v1086 = vadd.f32 %v1023, 1.0
      %v1087 = vadd.f32 %v1025, 1.0
      %v1088 = vadd.f32 %v1027, 1.0
      %v1089 = vadd.f32 %v1029, 1.0
      %v1090 = vadd.f32 %v1031, 1.0
      %v1091 = vadd.f32 %v1033, 1.0
      %v1092 = vadd.f32 %v1035, 1.0
      %v1093 = vadd.f32 %v1037, 1.0
      %v1094 = vadd.f32 %v1039, 1.0
      %v1095 = vadd.f32 %v1041, 1.0
      %v1096 = vadd.f32 %v1043, 1.0
      %v1097 = vadd.f32 %v1045, 1.0
      %v1098 = vadd.f32 %v1047, 1.0
      %v1099 = vadd.f32 %v1049, 1.0
      %v1100 = vadd.f32 %v1051, 1.0
      %v1101 = vadd.f32 %v1053, 1.0
      %v1102 = vadd.f32 %v1055, 1.0
      %v1103 = vadd.f32 %v1057, 1.0
      %v1104 = vadd.f32 %v1059, 1.0
      %v1105 = vadd.f32 %v1061, 1.0
      %v1106 = vadd.f32 %v1063, 1.0
      %v1107 = vadd.f32 %v1065, 1.0
      %v1108 = vadd.f32 %v1067, 1.0
      %v1109 = vadd.f32 %v1069, 1.0
      %v1110 = vadd.f32 %v1071, 1.0
      %v1111 = vadd.f32 %v1073, 1.0
      %v1112 = vadd.f32 %v1075, 1.0
      %v1113 = vadd.f32 %v1077, 1.0
      %v1114 = vadd.f32 %v1079, 1.0
      %v1115 = vadd.f32 %v1081, 1.0
      %v1116 = vadd.f32 %v1083, 1.0
      %v1117 = vadd.f32 %v1085, 1.0
      %v1118 = vrcp.pop %v1086
      %v1119 = vmul.f32 1.0, %v1118
      %v1120 = vrcp.pop %v1087
      %v1121 = vmul.f32 1.0, %v1120
      %v1122 = vrcp.pop %v1088
      %v1123 = vmul.f32 1.0, %v1122
      %v1124 = vrcp.pop %v1089
      %v1125 = vmul.f32 1.0, %v1124
      %v1126 = vrcp.pop %v1090
      %v1127 = vmul.f32 1.0, %v1126
      %v1128 = vrcp.pop %v1091
      %v1129 = vmul.f32 1.0, %v1128
      %v1130 = vrcp.pop %v1092
      %v1131 = vmul.f32 1.0, %v1130
      %v1132 = vrcp.pop %v1093
      %v1133 = vmul.f32 1.0, %v1132
      %v1134 = vrcp.pop %v1094
      %v1135 = vmul.f32 1.0, %v1134
      %v1136 = vrcp.pop %v1095
      %v1137 = vmul.f32 1.0, %v1136
      %v1138 = vrcp.pop %v1096
      %v1139 = vmul.f32 1.0, %v1138
      %v1140 = vrcp.pop %v1097
      %v1141 = vmul.f32 1.0, %v1140
      %v1142 = vrcp.pop %v1098
      %v1143 = vmul.f32 1.0, %v1142
      %v1144 = vrcp.pop %v1099
      %v1145 = vmul.f32 1.0, %v1144
      %v1146 = vrcp.pop %v1100
      %v1147 = vmul.f32 1.0, %v1146
      %v1148 = vrcp.pop %v1101
      %v1149 = vmul.f32 1.0, %v1148
      %v1150 = vrcp.pop %v1102
      %v1151 = vmul.f32 1.0, %v1150
      %v1152 = vrcp.pop %v1103
      %v1153 = vmul.f32 1.0, %v1152
      %v1154 = vrcp.pop %v1104
      %v1155 = vmul.f32 1.0, %v1154
      %v1156 = vrcp.pop %v1105
      %v1157 = vmul.f32 1.0, %v1156
      %v1158 = vrcp.pop %v1106
      %v1159 = vmul.f32 1.0, %v1158
      %v1160 = vrcp.pop %v1107
      %v1161 = vmul.f32 1.0, %v1160
      %v1162 = vrcp.pop %v1108
      %v1163 = vmul.f32 1.0, %v1162
      %v1164 = vrcp.pop %v1109
      %v1165 = vmul.f32 1.0, %v1164
      %v1166 = vrcp.pop %v1110
      %v1167 = vmul.f32 1.0, %v1166
      %v1168 = vrcp.pop %v1111
      %v1169 = vmul.f32 1.0, %v1168
      %v1170 = vrcp.pop %v1112
      %v1171 = vmul.f32 1.0, %v1170
      %v1172 = vrcp.pop %v1113
      %v1173 = vmul.f32 1.0, %v1172
      %v1174 = vrcp.pop %v1114
      %v1175 = vmul.f32 1.0, %v1174
      %v1176 = vrcp.pop %v1115
      %v1177 = vmul.f32 1.0, %v1176
      %v1178 = vrcp.pop %v1116
      %v1179 = vmul.f32 1.0, %v1178
      %v1180 = vrcp.pop %v1117
      %v1181 = vmul.f32 1.0, %v1180
      %v1182 = vmul.f32 %v958, %v1119
      %v1183 = vmul.f32 %v959, %v1121
      %v1184 = vmul.f32 %v960, %v1123
      %v1185 = vmul.f32 %v961, %v1125
      %v1186 = vmul.f32 %v962, %v1127
      %v1187 = vmul.f32 %v963, %v1129
      %v1188 = vmul.f32 %v964, %v1131
      %v1189 = vmul.f32 %v965, %v1133
      %v1190 = vmul.f32 %v966, %v1135
      %v1191 = vmul.f32 %v967, %v1137
      %v1192 = vmul.f32 %v968, %v1139
      %v1193 = vmul.f32 %v969, %v1141
      %v1194 = vmul.f32 %v970, %v1143
      %v1195 = vmul.f32 %v971, %v1145
      %v1196 = vmul.f32 %v972, %v1147
      %v1197 = vmul.f32 %v973, %v1149
      %v1198 = vmul.f32 %v974, %v1151
      %v1199 = vmul.f32 %v975, %v1153
      %v1200 = vmul.f32 %v976, %v1155
      %v1201 = vmul.f32 %v977, %v1157
      %v1202 = vmul.f32 %v978, %v1159
      %v1203 = vmul.f32 %v979, %v1161
      %v1204 = vmul.f32 %v980, %v1163
      %v1205 = vmul.f32 %v981, %v1165
      %v1206 = vmul.f32 %v982, %v1167
      %v1207 = vmul.f32 %v983, %v1169
      %v1208 = vmul.f32 %v984, %v1171
      %v1209 = vmul.f32 %v985, %v1173
      %v1210 = vmul.f32 %v986, %v1175
      %v1211 = vmul.f32 %v987, %v1177
      %v1212 = vmul.f32 %v988, %v1179
      %v1213 = vmul.f32 %v989, %v1181
      %vm1246 = vcmask 1040384
      %v1247 = vrot.slane %v1182, 7
      %v1248 = vrot.slane %v1183, 7
      %v1249 = vsel %vm1246, %v1247, %v1248
      %v1250 = vrot.slane %v1184, 7
      %v1251 = vrot.slane %v1185, 7
      %v1252 = vsel %vm1246, %v1250, %v1251
      %v1253 = vrot.slane %v1186, 7
      %v1254 = vrot.slane %v1187, 7
      %v1255 = vsel %vm1246, %v1253, %v1254
      %v1256 = vrot.slane %v1188, 7
      %v1257 = vrot.slane %v1189, 7
      %v1258 = vsel %vm1246, %v1256, %v1257
      %v1259 = vrot.slane %v1190, 7
      %v1260 = vrot.slane %v1191, 7
      %v1261 = vsel %vm1246, %v1259, %v1260
      %v1262 = vrot.slane %v1192, 7
      %v1263 = vrot.slane %v1193, 7
      %v1264 = vsel %vm1246, %v1262, %v1263
      %v1265 = vrot.slane %v1194, 7
      %v1266 = vrot.slane %v1195, 7
      %v1267 = vsel %vm1246, %v1265, %v1266
      %v1268 = vrot.slane %v1196, 7
      %v1269 = vrot.slane %v1197, 7
      %v1270 = vsel %vm1246, %v1268, %v1269
      %v1271 = vrot.slane %v1198, 7
      %v1272 = vrot.slane %v1199, 7
      %v1273 = vsel %vm1246, %v1271, %v1272
      %v1274 = vrot.slane %v1200, 7
      %v1275 = vrot.slane %v1201, 7
      %v1276 = vsel %vm1246, %v1274, %v1275
      %v1277 = vrot.slane %v1202, 7
      %v1278 = vrot.slane %v1203, 7
      %v1279 = vsel %vm1246, %v1277, %v1278
      %v1280 = vrot.slane %v1204, 7
      %v1281 = vrot.slane %v1205, 7
      %v1282 = vsel %vm1246, %v1280, %v1281
      %v1283 = vrot.slane %v1206, 7
      %v1284 = vrot.slane %v1207, 7
      %v1285 = vsel %vm1246, %v1283, %v1284
      %v1286 = vrot.slane %v1208, 7
      %v1287 = vrot.slane %v1209, 7
      %v1288 = vsel %vm1246, %v1286, %v1287
      %v1289 = vrot.slane %v1210, 7
      %v1290 = vrot.slane %v1211, 7
      %v1291 = vsel %vm1246, %v1289, %v1290
      %v1292 = vrot.slane %v1212, 7
      %v1293 = vrot.slane %v1213, 7
      %v1294 = vsel %vm1246, %v1292, %v1293
      %v1343 = vsel %vm1246, 0.0, %v1247
      %v1344 = vsel %vm1246, 0.0, %v1250
      %v1345 = vsel %vm1246, 0.0, %v1253
      %v1346 = vsel %vm1246, 0.0, %v1256
      %v1347 = vsel %vm1246, 0.0, %v1259
      %v1348 = vsel %vm1246, 0.0, %v1262
      %v1349 = vsel %vm1246, 0.0, %v1265
      %v1350 = vsel %vm1246, 0.0, %v1268
      %v1351 = vsel %vm1246, 0.0, %v1271
      %v1352 = vsel %vm1246, 0.0, %v1274
      %v1353 = vsel %vm1246, 0.0, %v1277
      %v1354 = vsel %vm1246, 0.0, %v1280
      %v1355 = vsel %vm1246, 0.0, %v1283
      %v1356 = vsel %vm1246, 0.0, %v1286
      %v1357 = vsel %vm1246, 0.0, %v1289
      %v1358 = vsel %vm1246, 0.0, %v1292
      %v1359 = vsel %vm1246, %v1248, 0.0
      %v1360 = vsel %vm1246, %v1251, 0.0
      %v1361 = vsel %vm1246, %v1254, 0.0
      %v1362 = vsel %vm1246, %v1257, 0.0
      %v1363 = vsel %vm1246, %v1260, 0.0
      %v1364 = vsel %vm1246, %v1263, 0.0
      %v1365 = vsel %vm1246, %v1266, 0.0
      %v1366 = vsel %vm1246, %v1269, 0.0
      %v1367 = vsel %vm1246, %v1272, 0.0
      %v1368 = vsel %vm1246, %v1275, 0.0
      %v1369 = vsel %vm1246, %v1278, 0.0
      %v1370 = vsel %vm1246, %v1281, 0.0
      %v1371 = vsel %vm1246, %v1284, 0.0
      %v1372 = vsel %vm1246, %v1287, 0.0
      %v1373 = vsel %vm1246, %v1290, 0.0
      %v1374 = vsel %vm1246, %v1293, 0.0
      %vm1406 = vcmask 1046528
      %v1407 = vrot.slane 0.0, 1
      %v1408 = vsel %vm1406, %v1407, %v1407
      %v1409 = vrot.slane %v1343, 1
      %v1410 = vrot.slane %v1249, 1
      %v1411 = vsel %vm1406, %v1409, %v1410
      %v1412 = vrot.slane %v1359, 1
      %v1413 = vsel %vm1406, %v1410, %v1412
      %v1414 = vrot.slane %v1344, 1
      %v1415 = vrot.slane %v1252, 1
      %v1416 = vsel %vm1406, %v1414, %v1415
      %v1417 = vrot.slane %v1360, 1
      %v1418 = vsel %vm1406, %v1415, %v1417
      %v1419 = vrot.slane %v1345, 1
      %v1420 = vrot.slane %v1255, 1
      %v1421 = vsel %vm1406, %v1419, %v1420
      %v1422 = vrot.slane %v1361, 1
      %v1423 = vsel %vm1406, %v1420, %v1422
      %v1424 = vrot.slane %v1346, 1
      %v1425 = vrot.slane %v1258, 1
      %v1426 = vsel %vm1406, %v1424, %v1425
      %v1427 = vrot.slane %v1362, 1
      %v1428 = vsel %vm1406, %v1425, %v1427
      %v1429 = vrot.slane %v1347, 1
      %v1430 = vrot.slane %v1261, 1
      %v1431 = vsel %vm1406, %v1429, %v1430
      %v1432 = vrot.slane %v1363, 1
      %v1433 = vsel %vm1406, %v1430, %v1432
      %v1434 = vrot.slane %v1348, 1
      %v1435 = vrot.slane %v1264, 1
      %v1436 = vsel %vm1406, %v1434, %v1435
      %v1437 = vrot.slane %v1364, 1
      %v1438 = vsel %vm1406, %v1435, %v1437
      %v1439 = vrot.slane %v1349, 1
      %v1440 = vrot.slane %v1267, 1
      %v1441 = vsel %vm1406, %v1439, %v1440
      %v1442 = vrot.slane %v1365, 1
      %v1443 = vsel %vm1406, %v1440, %v1442
      %v1444 = vrot.slane %v1350, 1
      %v1445 = vrot.slane %v1270, 1
      %v1446 = vsel %vm1406, %v1444, %v1445
      %v1447 = vrot.slane %v1366, 1
      %v1448 = vsel %vm1406, %v1445, %v1447
      %v1449 = vrot.slane %v1351, 1
      %v1450 = vrot.slane %v1273, 1
      %v1451 = vsel %vm1406, %v1449, %v1450
      %v1452 = vrot.slane %v1367, 1
      %v1453 = vsel %vm1406, %v1450, %v1452
      %v1454 = vrot.slane %v1352, 1
      %v1455 = vrot.slane %v1276, 1
      %v1456 = vsel %vm1406, %v1454, %v1455
      %v1457 = vrot.slane %v1368, 1
      %v1458 = vsel %vm1406, %v1455, %v1457
      %v1459 = vrot.slane %v1353, 1
      %v1460 = vrot.slane %v1279, 1
      %v1461 = vsel %vm1406, %v1459, %v1460
      %v1462 = vrot.slane %v1369, 1
      %v1463 = vsel %vm1406, %v1460, %v1462
      %v1464 = vrot.slane %v1354, 1
      %v1465 = vrot.slane %v1282, 1
      %v1466 = vsel %vm1406, %v1464, %v1465
      %v1467 = vrot.slane %v1370, 1
      %v1468 = vsel %vm1406, %v1465, %v1467
      %v1469 = vrot.slane %v1355, 1
      %v1470 = vrot.slane %v1285, 1
      %v1471 = vsel %vm1406, %v1469, %v1470
      %v1472 = vrot.slane %v1371, 1
      %v1473 = vsel %vm1406, %v1470, %v1472
      %v1474 = vrot.slane %v1356, 1
      %v1475 = vrot.slane %v1288, 1
      %v1476 = vsel %vm1406, %v1474, %v1475
      %v1477 = vrot.slane %v1372, 1
      %v1478 = vsel %vm1406, %v1475, %v1477
      %v1479 = vrot.slane %v1357, 1
      %v1480 = vrot.slane %v1291, 1
      %v1481 = vsel %vm1406, %v1479, %v1480
      %v1482 = vrot.slane %v1373, 1
      %v1483 = vsel %vm1406, %v1480, %v1482
      %1484 = vrot.lane.b32.xlu0 %v1408, 4
      %v1485 = vpop.permute.xlu0 %1484
      %1486 = vrot.lane.b32.xlu0 %v1411, 4
      %v1487 = vpop.permute.xlu0 %1486
      %1488 = vrot.lane.b32.xlu0 %v1413, 4
      %v1489 = vpop.permute.xlu0 %1488
      %1490 = vrot.lane.b32.xlu0 %v1416, 4
      %v1491 = vpop.permute.xlu0 %1490
      %1492 = vrot.lane.b32.xlu0 %v1418, 4
      %v1493 = vpop.permute.xlu0 %1492
      %1494 = vrot.lane.b32.xlu0 %v1421, 4
      %v1495 = vpop.permute.xlu0 %1494
      %1496 = vrot.lane.b32.xlu0 %v1423, 4
      %v1497 = vpop.permute.xlu0 %1496
      %1498 = vrot.lane.b32.xlu0 %v1426, 4
      %v1499 = vpop.permute.xlu0 %1498
      %1500 = vrot.lane.b32.xlu0 %v1428, 4
      %v1501 = vpop.permute.xlu0 %1500
      %1502 = vrot.lane.b32.xlu0 %v1431, 4
      %v1503 = vpop.permute.xlu0 %1502
      %1504 = vrot.lane.b32.xlu0 %v1433, 4
      %v1505 = vpop.permute.xlu0 %1504
      %1506 = vrot.lane.b32.xlu0 %v1436, 4
      %v1507 = vpop.permute.xlu0 %1506
      %1508 = vrot.lane.b32.xlu0 %v1438, 4
      %v1509 = vpop.permute.xlu0 %1508
      %1510 = vrot.lane.b32.xlu0 %v1441, 4
      %v1511 = vpop.permute.xlu0 %1510
      %1512 = vrot.lane.b32.xlu0 %v1443, 4
      %v1513 = vpop.permute.xlu0 %1512
      %1514 = vrot.lane.b32.xlu0 %v1446, 4
      %v1515 = vpop.permute.xlu0 %1514
      %1516 = vrot.lane.b32.xlu0 %v1448, 4
      %v1517 = vpop.permute.xlu0 %1516
      %1518 = vrot.lane.b32.xlu0 %v1451, 4
      %v1519 = vpop.permute.xlu0 %1518
      %1520 = vrot.lane.b32.xlu0 %v1453, 4
      %v1521 = vpop.permute.xlu0 %1520
      %1522 = vrot.lane.b32.xlu0 %v1456, 4
      %v1523 = vpop.permute.xlu0 %1522
      %1524 = vrot.lane.b32.xlu0 %v1458, 4
      %v1525 = vpop.permute.xlu0 %1524
      %1526 = vrot.lane.b32.xlu0 %v1461, 4
      %v1527 = vpop.permute.xlu0 %1526
      %1528 = vrot.lane.b32.xlu0 %v1463, 4
      %v1529 = vpop.permute.xlu0 %1528
      %1530 = vrot.lane.b32.xlu0 %v1466, 4
      %v1531 = vpop.permute.xlu0 %1530
      %1532 = vrot.lane.b32.xlu0 %v1468, 4
      %v1533 = vpop.permute.xlu0 %1532
      %1534 = vrot.lane.b32.xlu0 %v1471, 4
      %v1535 = vpop.permute.xlu0 %1534
      %1536 = vrot.lane.b32.xlu0 %v1473, 4
      %v1537 = vpop.permute.xlu0 %1536
      %1538 = vrot.lane.b32.xlu0 %v1476, 4
      %v1539 = vpop.permute.xlu0 %1538
      %1540 = vrot.lane.b32.xlu0 %v1478, 4
      %v1541 = vpop.permute.xlu0 %1540
      %1542 = vrot.lane.b32.xlu0 %v1481, 4
      %v1543 = vpop.permute.xlu0 %1542
      %1544 = vrot.lane.b32.xlu0 %v1483, 4
      %v1545 = vpop.permute.xlu0 %1544
      %vm1577 = vcmask 1045504
      %v1578 = vrot.slane 0.0, 2
      %v1579 = vsel %vm1577, %v1578, %v1578
      %v1580 = vrot.slane %v1343, 2
      %v1581 = vrot.slane %v1249, 2
      %v1582 = vsel %vm1577, %v1580, %v1581
      %v1583 = vrot.slane %v1359, 2
      %v1584 = vsel %vm1577, %v1581, %v1583
      %v1585 = vrot.slane %v1344, 2
      %v1586 = vrot.slane %v1252, 2
      %v1587 = vsel %vm1577, %v1585, %v1586
      %v1588 = vrot.slane %v1360, 2
      %v1589 = vsel %vm1577, %v1586, %v1588
      %v1590 = vrot.slane %v1345, 2
      %v1591 = vrot.slane %v1255, 2
      %v1592 = vsel %vm1577, %v1590, %v1591
      %v1593 = vrot.slane %v1361, 2
      %v1594 = vsel %vm1577, %v1591, %v1593
      %v1595 = vrot.slane %v1346, 2
      %v1596 = vrot.slane %v1258, 2
      %v1597 = vsel %vm1577, %v1595, %v1596
      %v1598 = vrot.slane %v1362, 2
      %v1599 = vsel %vm1577, %v1596, %v1598
      %v1600 = vrot.slane %v1347, 2
      %v1601 = vrot.slane %v1261, 2
      %v1602 = vsel %vm1577, %v1600, %v1601
      %v1603 = vrot.slane %v1363, 2
      %v1604 = vsel %vm1577, %v1601, %v1603
      %v1605 = vrot.slane %v1348, 2
      %v1606 = vrot.slane %v1264, 2
      %v1607 = vsel %vm1577, %v1605, %v1606
      %v1608 = vrot.slane %v1364, 2
      %v1609 = vsel %vm1577, %v1606, %v1608
      %v1610 = vrot.slane %v1349, 2
      %v1611 = vrot.slane %v1267, 2
      %v1612 = vsel %vm1577, %v1610, %v1611
      %v1613 = vrot.slane %v1365, 2
      %v1614 = vsel %vm1577, %v1611, %v1613
      %v1615 = vrot.slane %v1350, 2
      %v1616 = vrot.slane %v1270, 2
      %v1617 = vsel %vm1577, %v1615, %v1616
      %v1618 = vrot.slane %v1366, 2
      %v1619 = vsel %vm1577, %v1616, %v1618
      %v1620 = vrot.slane %v1351, 2
      %v1621 = vrot.slane %v1273, 2
      %v1622 = vsel %vm1577, %v1620, %v1621
      %v1623 = vrot.slane %v1367, 2
      %v1624 = vsel %vm1577, %v1621, %v1623
      %v1625 = vrot.slane %v1352, 2
      %v1626 = vrot.slane %v1276, 2
      %v1627 = vsel %vm1577, %v1625, %v1626
      %v1628 = vrot.slane %v1368, 2
      %v1629 = vsel %vm1577, %v1626, %v1628
      %v1630 = vrot.slane %v1353, 2
      %v1631 = vrot.slane %v1279, 2
      %v1632 = vsel %vm1577, %v1630, %v1631
      %v1633 = vrot.slane %v1369, 2
      %v1634 = vsel %vm1577, %v1631, %v1633
      %v1635 = vrot.slane %v1354, 2
      %v1636 = vrot.slane %v1282, 2
      %v1637 = vsel %vm1577, %v1635, %v1636
      %v1638 = vrot.slane %v1370, 2
      %v1639 = vsel %vm1577, %v1636, %v1638
      %v1640 = vrot.slane %v1355, 2
      %v1641 = vrot.slane %v1285, 2
      %v1642 = vsel %vm1577, %v1640, %v1641
      %v1643 = vrot.slane %v1371, 2
      %v1644 = vsel %vm1577, %v1641, %v1643
      %v1645 = vrot.slane %v1356, 2
      %v1646 = vrot.slane %v1288, 2
      %v1647 = vsel %vm1577, %v1645, %v1646
      %v1648 = vrot.slane %v1372, 2
      %v1649 = vsel %vm1577, %v1646, %v1648
      %v1650 = vrot.slane %v1357, 2
      %v1651 = vrot.slane %v1291, 2
      %v1652 = vsel %vm1577, %v1650, %v1651
      %v1653 = vrot.slane %v1373, 2
      %v1654 = vsel %vm1577, %v1651, %v1653
      %1655 = vrot.lane.b32.xlu0 %v1579, 8
      %v1656 = vpop.permute.xlu0 %1655
      %1657 = vrot.lane.b32.xlu0 %v1582, 8
      %v1658 = vpop.permute.xlu0 %1657
      %1659 = vrot.lane.b32.xlu0 %v1584, 8
      %v1660 = vpop.permute.xlu0 %1659
      %1661 = vrot.lane.b32.xlu0 %v1587, 8
      %v1662 = vpop.permute.xlu0 %1661
      %1663 = vrot.lane.b32.xlu0 %v1589, 8
      %v1664 = vpop.permute.xlu0 %1663
      %1665 = vrot.lane.b32.xlu0 %v1592, 8
      %v1666 = vpop.permute.xlu0 %1665
      %1667 = vrot.lane.b32.xlu0 %v1594, 8
      %v1668 = vpop.permute.xlu0 %1667
      %1669 = vrot.lane.b32.xlu0 %v1597, 8
      %v1670 = vpop.permute.xlu0 %1669
      %1671 = vrot.lane.b32.xlu0 %v1599, 8
      %v1672 = vpop.permute.xlu0 %1671
      %1673 = vrot.lane.b32.xlu0 %v1602, 8
      %v1674 = vpop.permute.xlu0 %1673
      %1675 = vrot.lane.b32.xlu0 %v1604, 8
      %v1676 = vpop.permute.xlu0 %1675
      %1677 = vrot.lane.b32.xlu0 %v1607, 8
      %v1678 = vpop.permute.xlu0 %1677
      %1679 = vrot.lane.b32.xlu0 %v1609, 8
      %v1680 = vpop.permute.xlu0 %1679
      %1681 = vrot.lane.b32.xlu0 %v1612, 8
      %v1682 = vpop.permute.xlu0 %1681
      %1683 = vrot.lane.b32.xlu0 %v1614, 8
      %v1684 = vpop.permute.xlu0 %1683
      %1685 = vrot.lane.b32.xlu0 %v1617, 8
      %v1686 = vpop.permute.xlu0 %1685
      %1687 = vrot.lane.b32.xlu0 %v1619, 8
      %v1688 = vpop.permute.xlu0 %1687
      %1689 = vrot.lane.b32.xlu0 %v1622, 8
      %v1690 = vpop.permute.xlu0 %1689
      %1691 = vrot.lane.b32.xlu0 %v1624, 8
      %v1692 = vpop.permute.xlu0 %1691
      %1693 = vrot.lane.b32.xlu0 %v1627, 8
      %v1694 = vpop.permute.xlu0 %1693
      %1695 = vrot.lane.b32.xlu0 %v1629, 8
      %v1696 = vpop.permute.xlu0 %1695
      %1697 = vrot.lane.b32.xlu0 %v1632, 8
      %v1698 = vpop.permute.xlu0 %1697
      %1699 = vrot.lane.b32.xlu0 %v1634, 8
      %v1700 = vpop.permute.xlu0 %1699
      %1701 = vrot.lane.b32.xlu0 %v1637, 8
      %v1702 = vpop.permute.xlu0 %1701
      %1703 = vrot.lane.b32.xlu0 %v1639, 8
      %v1704 = vpop.permute.xlu0 %1703
      %1705 = vrot.lane.b32.xlu0 %v1642, 8
      %v1706 = vpop.permute.xlu0 %1705
      %1707 = vrot.lane.b32.xlu0 %v1644, 8
      %v1708 = vpop.permute.xlu0 %1707
      %1709 = vrot.lane.b32.xlu0 %v1647, 8
      %v1710 = vpop.permute.xlu0 %1709
      %1711 = vrot.lane.b32.xlu0 %v1649, 8
      %v1712 = vpop.permute.xlu0 %1711
      %1713 = vrot.lane.b32.xlu0 %v1652, 8
      %v1714 = vpop.permute.xlu0 %1713
      %1715 = vrot.lane.b32.xlu0 %v1654, 8
      %v1716 = vpop.permute.xlu0 %1715
      %v1748 = vsel %vm514, 0.0, %v1485
      %v1749 = vsel %vm514, %v1343, %v1487
      %v1750 = vsel %vm514, %v1249, %v1489
      %v1751 = vsel %vm514, %v1344, %v1491
      %v1752 = vsel %vm514, %v1252, %v1493
      %v1753 = vsel %vm514, %v1345, %v1495
      %v1754 = vsel %vm514, %v1255, %v1497
      %v1755 = vsel %vm514, %v1346, %v1499
      %v1756 = vsel %vm514, %v1258, %v1501
      %v1757 = vsel %vm514, %v1347, %v1503
      %v1758 = vsel %vm514, %v1261, %v1505
      %v1759 = vsel %vm514, %v1348, %v1507
      %v1760 = vsel %vm514, %v1264, %v1509
      %v1761 = vsel %vm514, %v1349, %v1511
      %v1762 = vsel %vm514, %v1267, %v1513
      %v1763 = vsel %vm514, %v1350, %v1515
      %v1764 = vsel %vm514, %v1270, %v1517
      %v1765 = vsel %vm514, %v1351, %v1519
      %v1766 = vsel %vm514, %v1273, %v1521
      %v1767 = vsel %vm514, %v1352, %v1523
      %v1768 = vsel %vm514, %v1276, %v1525
      %v1769 = vsel %vm514, %v1353, %v1527
      %v1770 = vsel %vm514, %v1279, %v1529
      %v1771 = vsel %vm514, %v1354, %v1531
      %v1772 = vsel %vm514, %v1282, %v1533
      %v1773 = vsel %vm514, %v1355, %v1535
      %v1774 = vsel %vm514, %v1285, %v1537
      %v1775 = vsel %vm514, %v1356, %v1539
      %v1776 = vsel %vm514, %v1288, %v1541
      %v1777 = vsel %vm514, %v1357, %v1543
      %v1778 = vsel %vm514, %v1291, %v1545
      %vm1779 = vcmask 64512
      %v1780 = vsel %vm1779, %v1748, %v1656
      %v1781 = vsel %vm1779, %v1749, %v1658
      %v1782 = vsel %vm1779, %v1750, %v1660
      %v1783 = vsel %vm1779, %v1751, %v1662
      %v1784 = vsel %vm1779, %v1752, %v1664
      %v1785 = vsel %vm1779, %v1753, %v1666
      %v1786 = vsel %vm1779, %v1754, %v1668
      %v1787 = vsel %vm1779, %v1755, %v1670
      %v1788 = vsel %vm1779, %v1756, %v1672
      %v1789 = vsel %vm1779, %v1757, %v1674
      %v1790 = vsel %vm1779, %v1758, %v1676
      %v1791 = vsel %vm1779, %v1759, %v1678
      %v1792 = vsel %vm1779, %v1760, %v1680
      %v1793 = vsel %vm1779, %v1761, %v1682
      %v1794 = vsel %vm1779, %v1762, %v1684
      %v1795 = vsel %vm1779, %v1763, %v1686
      %v1796 = vsel %vm1779, %v1764, %v1688
      %v1797 = vsel %vm1779, %v1765, %v1690
      %v1798 = vsel %vm1779, %v1766, %v1692
      %v1799 = vsel %vm1779, %v1767, %v1694
      %v1800 = vsel %vm1779, %v1768, %v1696
      %v1801 = vsel %vm1779, %v1769, %v1698
      %v1802 = vsel %vm1779, %v1770, %v1700
      %v1803 = vsel %vm1779, %v1771, %v1702
      %v1804 = vsel %vm1779, %v1772, %v1704
      %v1805 = vsel %vm1779, %v1773, %v1706
      %v1806 = vsel %vm1779, %v1774, %v1708
      %v1807 = vsel %vm1779, %v1775, %v1710
      %v1808 = vsel %vm1779, %v1776, %v1712
      %v1809 = vsel %vm1779, %v1777, %v1714
      %v1810 = vsel %vm1779, %v1778, %v1716
      %v1811 = vld [vmem:[%s5] sm:$0xff]
      %v1812 = vld [vmem:[%s5 + $0x8] sm:$0xf]
      %v1815 = vrot.slane %v1358, 1
      %v1816 = vrot.slane %v1294, 1
      %v1817 = vsel %vm1406, %v1815, %v1816
      %v1818 = vrot.slane %v1374, 1
      %v1819 = vsel %vm1406, %v1816, %v1818
      %1820 = vrot.lane.b32.xlu0 %v1817, 4
      %v1821 = vpop.permute.xlu0 %1820
      %1822 = vrot.lane.b32.xlu0 %v1819, 4
      %v1823 = vpop.permute.xlu0 %1822
      %v1826 = vrot.slane %v1358, 2
      %v1827 = vrot.slane %v1294, 2
      %v1828 = vsel %vm1577, %v1826, %v1827
      %v1829 = vrot.slane %v1374, 2
      %v1830 = vsel %vm1577, %v1827, %v1829
      %1831 = vrot.lane.b32.xlu0 %v1828, 8
      %v1832 = vpop.permute.xlu0 %1831
      %1833 = vrot.lane.b32.xlu0 %v1830, 8
      %v1834 = vpop.permute.xlu0 %1833
      %v1837 = vsel %vm514, %v1358, %v1821
      %v1838 = vsel %vm514, %v1294, %v1823
      %v1839 = vsel %vm1779, %v1837, %v1832
      %v1840 = vsel %vm1779, %v1838, %v1834
      %s1841 = scalar_lea.vmem %s5, 16
      %v1842 = vld [vmem:[%s1841] sm:$0xff]
      %v1843 = vld [vmem:[%s1841 + $0x8] sm:$0xf]
      %vm1844 = vcmask 97280
      %v1846 = vsel %vm1844, %v1781, 0
      %v1849 = vsel %vm1844, %v1782, 0
      %v1852 = vsel %vm1844, %v1783, 0
      %v1855 = vsel %vm1844, %v1784, 0
      %v1858 = vsel %vm1844, %v1785, 0
      %v1861 = vsel %vm1844, %v1786, 0
      %v1864 = vsel %vm1844, %v1787, 0
      %v1867 = vsel %vm1844, %v1788, 0
      %v1870 = vsel %vm1844, %v1789, 0
      %v1873 = vsel %vm1844, %v1790, 0
      %v1876 = vsel %vm1844, %v1791, 0
      %v1879 = vsel %vm1844, %v1792, 0
      %v1882 = vsel %vm1844, %v1793, 0
      %v1885 = vsel %vm1844, %v1794, 0
      %v1888 = vsel %vm1844, %v1795, 0
      %v1891 = vsel %vm1844, %v1796, 0
      %v1894 = vsel %vm1844, %v1797, 0
      %v1897 = vsel %vm1844, %v1798, 0
      %v1900 = vsel %vm1844, %v1799, 0
      %v1903 = vsel %vm1844, %v1800, 0
      %v1906 = vsel %vm1844, %v1801, 0
      %v1909 = vsel %vm1844, %v1802, 0
      %v1912 = vsel %vm1844, %v1803, 0
      %v1915 = vsel %vm1844, %v1804, 0
      %v1918 = vsel %vm1844, %v1805, 0
      %v1921 = vsel %vm1844, %v1806, 0
      %v1924 = vsel %vm1844, %v1807, 0
      %v1927 = vsel %vm1844, %v1808, 0
      %v1930 = vsel %vm1844, %v1809, 0
      %v1933 = vsel %vm1844, %v1810, 0
      %v1936 = vsel %vm1844, %v1839, 0
      %v1939 = vsel %vm1844, %v1840, 0
      %v1942 = vsel %vm689, %v1843, 0
      %1944 = vmatprep.subr.mxu0 0.0
      %1945 = vmatpush1.msra.mxu0 %v1842
      %1946 = vmatprep.subr.mxu0 0.0
      %1947 = vmatpush1.msra.mxu0 %v1942
      %1948 = vmatprep.subr.mxu0 0.0
      %1949 = vmatpush1.msra.mxu0 0.0
      %1950 = vmatprep.subr.mxu0 0.0
      %1951 = vmatpush1.msra.mxu0 0.0
      %1952 = vmatprep.subr.mxu0 0.0
      %1953 = vmatpush1.msra.mxu0 0.0
      %1954 = vmatprep.subr.mxu0 0.0
      %1955 = vmatpush1.msra.mxu0 0.0
      %1956 = vmatprep.subr.mxu0 0.0
      %1957 = vmatpush1.msra.mxu0 0.0
      %1958 = vmatprep.subr.mxu0 0.0
      %1959 = vmatpush1.msra.mxu0 0.0
      %1960 = vmatprep.subr.mxu0 0.0
      %1961 = vmatpush1.msra.mxu0 0.0
      %1962 = vmatprep.subr.mxu0 0.0
      %1963 = vmatpush1.msra.mxu0 0.0
      %1964 = vmatprep.subr.mxu0 0.0
      %1965 = vmatpush1.msra.mxu0 0.0
      %1966 = vmatprep.subr.mxu0 0.0
      %1967 = vmatpush1.msra.mxu0 0.0
      %1968 = vmatprep.subr.mxu0 0.0
      %1969 = vmatpush1.msra.mxu0 0.0
      %1970 = vmatprep.subr.mxu0 0.0
      %1971 = vmatpush1.msra.mxu0 0.0
      %1972 = vmatprep.subr.mxu0 0.0
      %1973 = vmatpush1.msra.mxu0 0.0
      %1974 = vmatprep.subr.mxu0 0.0
      %1975 = vmatpush1.msra.mxu0 0.0
      %1976 = vmatprep.subr.mxu0 0.0
      %1977 = vmatpush1.msra.mxu0 0.0
      %1978 = vmatprep.subr.mxu0 0.0
      %1979 = vmatpush1.msra.mxu0 0.0
      %1980 = vmatprep.subr.mxu0 0.0
      %1981 = vmatpush1.msra.mxu0 0.0
      %1982 = vmatprep.subr.mxu0 0.0
      %1983 = vmatpush1.msra.mxu0 0.0
      %1984 = vmatprep.subr.mxu0 0.0
      %1985 = vmatpush1.msra.mxu0 0.0
      %1986 = vmatprep.subr.mxu0 0.0
      %1987 = vmatpush1.msra.mxu0 0.0
      %1988 = vmatprep.subr.mxu0 0.0
      %1989 = vmatpush1.msra.mxu0 0.0
      %1990 = vmatprep.subr.mxu0 0.0
      %1991 = vmatpush1.msra.mxu0 0.0
      %1992 = vmatprep.subr.mxu0 0.0
      %1993 = vmatpush1.msra.mxu0 0.0
      %1994 = vmatprep.subr.mxu0 0.0
      %1995 = vmatpush1.msra.mxu0 0.0
      %1996 = vmatprep.subr.mxu0 0.0
      %1997 = vmatpush1.msra.mxu0 0.0
      %1998 = vmatprep.subr.mxu0 0.0
      %1999 = vmatpush1.msra.mxu0 0.0
      %2000 = vmatprep.subr.mxu0 0.0
      %2001 = vmatpush1.msra.mxu0 0.0
      %2002 = vmatprep.subr.mxu0 0.0
      %2003 = vmatpush1.msra.mxu0 0.0
      %2004 = vmatprep.subr.mxu0 0.0
      %2005 = vmatpush1.msra.mxu0 0.0
      %2006 = vmatprep.subr.mxu0 0.0
      %2007 = vmatpush1.msra.mxu0 0.0
      %2008 = vmatprep.mubr.f32.mxu0 0.0
      %2009 = vmatmul.mubr.f32.gmra.mrb[0].mxu0 %v1846
      %v2010 = vpop.f32.mrb[0].mxu0
      %v2011 = vadd.f32 0.0, %v2010
      %v2012 = vpop.f32.mrb[0].mxu0
      %2013 = vmatprep.mubr.f32.mxu0 0.0
      %2014 = vmatmul.mubr.f32.gmra.mrb[0].mxu0 %v1849
      %v2015 = vpop.f32.mrb[0].mxu0
      %v2016 = vadd.f32 0.0, %v2015
      %v2017 = vpop.f32.mrb[0].mxu0
      %2018 = vmatprep.mubr.f32.mxu0 0.0
      %2019 = vmatmul.mubr.f32.gmra.mrb[0].mxu0 %v1852
      %v2020 = vpop.f32.mrb[0].mxu0
      %v2021 = vadd.f32 0.0, %v2020
      %v2022 = vpop.f32.mrb[0].mxu0
      %2023 = vmatprep.mubr.f32.mxu0 0.0
      %2024 = vmatmul.mubr.f32.gmra.mrb[0].mxu0 %v1855
      %v2025 = vpop.f32.mrb[0].mxu0
      %v2026 = vadd.f32 0.0, %v2025
      %v2027 = vpop.f32.mrb[0].mxu0
      %2028 = vmatprep.mubr.f32.mxu0 0.0
      %2029 = vmatmul.mubr.f32.gmra.mrb[0].mxu0 %v1858
      %v2030 = vpop.f32.mrb[0].mxu0
      %v2031 = vadd.f32 0.0, %v2030
      %v2032 = vpop.f32.mrb[0].mxu0
      %2033 = vmatprep.mubr.f32.mxu0 0.0
      %2034 = vmatmul.mubr.f32.gmra.mrb[0].mxu0 %v1861
      %v2035 = vpop.f32.mrb[0].mxu0
      %v2036 = vadd.f32 0.0, %v2035
      %v2037 = vpop.f32.mrb[0].mxu0
      %2038 = vmatprep.mubr.f32.mxu0 0.0
      %2039 = vmatmul.mubr.f32.gmra.mrb[0].mxu0 %v1864
      %v2040 = vpop.f32.mrb[0].mxu0
      %v2041 = vadd.f32 0.0, %v2040
      %v2042 = vpop.f32.mrb[0].mxu0
      %2043 = vmatprep.mubr.f32.mxu0 0.0
      %2044 = vmatmul.mubr.f32.gmra.mrb[0].mxu0 %v1867
      %v2045 = vpop.f32.mrb[0].mxu0
      %v2046 = vadd.f32 0.0, %v2045
      %v2047 = vpop.f32.mrb[0].mxu0
      %2048 = vmatprep.mubr.f32.mxu0 0.0
      %2049 = vmatmul.mubr.f32.gmra.mrb[0].mxu0 %v1870
      %v2050 = vpop.f32.mrb[0].mxu0
      %v2051 = vadd.f32 0.0, %v2050
      %v2052 = vpop.f32.mrb[0].mxu0
      %2053 = vmatprep.mubr.f32.mxu0 0.0
      %2054 = vmatmul.mubr.f32.gmra.mrb[0].mxu0 %v1873
      %v2055 = vpop.f32.mrb[0].mxu0
      %v2056 = vadd.f32 0.0, %v2055
      %v2057 = vpop.f32.mrb[0].mxu0
      %2058 = vmatprep.mubr.f32.mxu0 0.0
      %2059 = vmatmul.mubr.f32.gmra.mrb[0].mxu0 %v1876
      %v2060 = vpop.f32.mrb[0].mxu0
      %v2061 = vadd.f32 0.0, %v2060
      %v2062 = vpop.f32.mrb[0].mxu0
      %2063 = vmatprep.mubr.f32.mxu0 0.0
      %2064 = vmatmul.mubr.f32.gmra.mrb[0].mxu0 %v1879
      %v2065 = vpop.f32.mrb[0].mxu0
      %v2066 = vadd.f32 0.0, %v2065
      %v2067 = vpop.f32.mrb[0].mxu0
      %2068 = vmatprep.mubr.f32.mxu0 0.0
      %2069 = vmatmul.mubr.f32.gmra.mrb[0].mxu0 %v1882
      %v2070 = vpop.f32.mrb[0].mxu0
      %v2071 = vadd.f32 0.0, %v2070
      %v2072 = vpop.f32.mrb[0].mxu0
      %2073 = vmatprep.mubr.f32.mxu0 0.0
      %2074 = vmatmul.mubr.f32.gmra.mrb[0].mxu0 %v1885
      %v2075 = vpop.f32.mrb[0].mxu0
      %v2076 = vadd.f32 0.0, %v2075
      %v2077 = vpop.f32.mrb[0].mxu0
      %2078 = vmatprep.mubr.f32.mxu0 0.0
      %2079 = vmatmul.mubr.f32.gmra.mrb[0].mxu0 %v1888
      %v2080 = vpop.f32.mrb[0].mxu0
      %v2081 = vadd.f32 0.0, %v2080
      %v2082 = vpop.f32.mrb[0].mxu0
      %2083 = vmatprep.mubr.f32.mxu0 0.0
      %2084 = vmatmul.mubr.f32.gmra.mrb[0].mxu0 %v1891
      %v2085 = vpop.f32.mrb[0].mxu0
      %v2086 = vadd.f32 0.0, %v2085
      %v2087 = vpop.f32.mrb[0].mxu0
      %2088 = vmatprep.mubr.f32.mxu0 0.0
      %2089 = vmatmul.mubr.f32.gmra.mrb[0].mxu0 %v1894
      %v2090 = vpop.f32.mrb[0].mxu0
      %v2091 = vadd.f32 0.0, %v2090
      %v2092 = vpop.f32.mrb[0].mxu0
      %2093 = vmatprep.mubr.f32.mxu0 0.0
      %2094 = vmatmul.mubr.f32.gmra.mrb[0].mxu0 %v1897
      %v2095 = vpop.f32.mrb[0].mxu0
      %v2096 = vadd.f32 0.0, %v2095
      %v2097 = vpop.f32.mrb[0].mxu0
      %2098 = vmatprep.mubr.f32.mxu0 0.0
      %2099 = vmatmul.mubr.f32.gmra.mrb[0].mxu0 %v1900
      %v2100 = vpop.f32.mrb[0].mxu0
      %v2101 = vadd.f32 0.0, %v2100
      %v2102 = vpop.f32.mrb[0].mxu0
      %2103 = vmatprep.mubr.f32.mxu0 0.0
      %2104 = vmatmul.mubr.f32.gmra.mrb[0].mxu0 %v1903
      %v2105 = vpop.f32.mrb[0].mxu0
      %v2106 = vadd.f32 0.0, %v2105
      %v2107 = vpop.f32.mrb[0].mxu0
      %2108 = vmatprep.mubr.f32.mxu0 0.0
      %2109 = vmatmul.mubr.f32.gmra.mrb[0].mxu0 %v1906
      %v2110 = vpop.f32.mrb[0].mxu0
      %v2111 = vadd.f32 0.0, %v2110
      %v2112 = vpop.f32.mrb[0].mxu0
      %2113 = vmatprep.mubr.f32.mxu0 0.0
      %2114 = vmatmul.mubr.f32.gmra.mrb[0].mxu0 %v1909
      %v2115 = vpop.f32.mrb[0].mxu0
      %v2116 = vadd.f32 0.0, %v2115
      %v2117 = vpop.f32.mrb[0].mxu0
      %2118 = vmatprep.mubr.f32.mxu0 0.0
      %2119 = vmatmul.mubr.f32.gmra.mrb[0].mxu0 %v1912
      %v2120 = vpop.f32.mrb[0].mxu0
      %v2121 = vadd.f32 0.0, %v2120
      %v2122 = vpop.f32.mrb[0].mxu0
      %2123 = vmatprep.mubr.f32.mxu0 0.0
      %2124 = vmatmul.mubr.f32.gmra.mrb[0].mxu0 %v1915
      %v2125 = vpop.f32.mrb[0].mxu0
      %v2126 = vadd.f32 0.0, %v2125
      %v2127 = vpop.f32.mrb[0].mxu0
      %2128 = vmatprep.mubr.f32.mxu0 0.0
      %2129 = vmatmul.mubr.f32.gmra.mrb[0].mxu0 %v1918
      %v2130 = vpop.f32.mrb[0].mxu0
      %v2131 = vadd.f32 0.0, %v2130
      %v2132 = vpop.f32.mrb[0].mxu0
      %2133 = vmatprep.mubr.f32.mxu0 0.0
      %2134 = vmatmul.mubr.f32.gmra.mrb[0].mxu0 %v1921
      %v2135 = vpop.f32.mrb[0].mxu0
      %v2136 = vadd.f32 0.0, %v2135
      %v2137 = vpop.f32.mrb[0].mxu0
      %2138 = vmatprep.mubr.f32.mxu0 0.0
      %2139 = vmatmul.mubr.f32.gmra.mrb[0].mxu0 %v1924
      %v2140 = vpop.f32.mrb[0].mxu0
      %v2141 = vadd.f32 0.0, %v2140
      %v2142 = vpop.f32.mrb[0].mxu0
      %2143 = vmatprep.mubr.f32.mxu0 0.0
      %2144 = vmatmul.mubr.f32.gmra.mrb[0].mxu0 %v1927
      %v2145 = vpop.f32.mrb[0].mxu0
      %v2146 = vadd.f32 0.0, %v2145
      %v2147 = vpop.f32.mrb[0].mxu0
      %2148 = vmatprep.mubr.f32.mxu0 0.0
      %2149 = vmatmul.mubr.f32.gmra.mrb[0].mxu0 %v1930
      %v2150 = vpop.f32.mrb[0].mxu0
      %v2151 = vadd.f32 0.0, %v2150
      %v2152 = vpop.f32.mrb[0].mxu0
      %2153 = vmatprep.mubr.f32.mxu0 0.0
      %2154 = vmatmul.mubr.f32.gmra.mrb[0].mxu0 %v1933
      %v2155 = vpop.f32.mrb[0].mxu0
      %v2156 = vadd.f32 0.0, %v2155
      %v2157 = vpop.f32.mrb[0].mxu0
      %2158 = vmatprep.mubr.f32.mxu0 0.0
      %2159 = vmatmul.mubr.f32.gmra.mrb[0].mxu0 %v1936
      %v2160 = vpop.f32.mrb[0].mxu0
      %v2161 = vadd.f32 0.0, %v2160
      %v2162 = vpop.f32.mrb[0].mxu0
      %2163 = vmatprep.mubr.f32.mxu0 0.0
      %2164 = vmatmul.mubr.f32.gmra.mrb[0].mxu0 %v1939
      %v2165 = vpop.f32.mrb[0].mxu0
      %v2166 = vadd.f32 0.0, %v2165
      %v2167 = vpop.f32.mrb[0].mxu0
      %2168 = vdwg.mxu0
      %v2170 = vsel %vm1844, %v1780, 0
      %v2173 = vsel %vm689, %v1812, 0
      %2175 = vmatprep.subr.mxu0 0.0
      %2176 = vmatpush1.msra.mxu0 %v1811
      %2177 = vmatprep.subr.mxu0 0.0
      %2178 = vmatpush1.msra.mxu0 %v2173
      %2179 = vmatprep.subr.mxu0 0.0
      %2180 = vmatpush1.msra.mxu0 0.0
      %2181 = vmatprep.subr.mxu0 0.0
      %2182 = vmatpush1.msra.mxu0 0.0
      %2183 = vmatprep.subr.mxu0 0.0
      %2184 = vmatpush1.msra.mxu0 0.0
      %2185 = vmatprep.subr.mxu0 0.0
      %2186 = vmatpush1.msra.mxu0 0.0
      %2187 = vmatprep.subr.mxu0 0.0
      %2188 = vmatpush1.msra.mxu0 0.0
      %2189 = vmatprep.subr.mxu0 0.0
      %2190 = vmatpush1.msra.mxu0 0.0
      %2191 = vmatprep.subr.mxu0 0.0
      %2192 = vmatpush1.msra.mxu0 0.0
      %2193 = vmatprep.subr.mxu0 0.0
      %2194 = vmatpush1.msra.mxu0 0.0
      %2195 = vmatprep.subr.mxu0 0.0
      %2196 = vmatpush1.msra.mxu0 0.0
      %2197 = vmatprep.subr.mxu0 0.0
      %2198 = vmatpush1.msra.mxu0 0.0
      %2199 = vmatprep.subr.mxu0 0.0
      %2200 = vmatpush1.msra.mxu0 0.0
      %2201 = vmatprep.subr.mxu0 0.0
      %2202 = vmatpush1.msra.mxu0 0.0
      %2203 = vmatprep.subr.mxu0 0.0
      %2204 = vmatpush1.msra.mxu0 0.0
      %2205 = vmatprep.subr.mxu0 0.0
      %2206 = vmatpush1.msra.mxu0 0.0
      %2207 = vmatprep.subr.mxu0 0.0
      %2208 = vmatpush1.msra.mxu0 0.0
      %2209 = vmatprep.subr.mxu0 0.0
      %2210 = vmatpush1.msra.mxu0 0.0
      %2211 = vmatprep.subr.mxu0 0.0
      %2212 = vmatpush1.msra.mxu0 0.0
      %2213 = vmatprep.subr.mxu0 0.0
      %2214 = vmatpush1.msra.mxu0 0.0
      %2215 = vmatprep.subr.mxu0 0.0
      %2216 = vmatpush1.msra.mxu0 0.0
      %2217 = vmatprep.subr.mxu0 0.0
      %2218 = vmatpush1.msra.mxu0 0.0
      %2219 = vmatprep.subr.mxu0 0.0
      %2220 = vmatpush1.msra.mxu0 0.0
      %2221 = vmatprep.subr.mxu0 0.0
      %2222 = vmatpush1.msra.mxu0 0.0
      %2223 = vmatprep.subr.mxu0 0.0
      %2224 = vmatpush1.msra.mxu0 0.0
      %2225 = vmatprep.subr.mxu0 0.0
      %2226 = vmatpush1.msra.mxu0 0.0
      %2227 = vmatprep.subr.mxu0 0.0
      %2228 = vmatpush1.msra.mxu0 0.0
      %2229 = vmatprep.subr.mxu0 0.0
      %2230 = vmatpush1.msra.mxu0 0.0
      %2231 = vmatprep.subr.mxu0 0.0
      %2232 = vmatpush1.msra.mxu0 0.0
      %2233 = vmatprep.subr.mxu0 0.0
      %2234 = vmatpush1.msra.mxu0 0.0
      %2235 = vmatprep.subr.mxu0 0.0
      %2236 = vmatpush1.msra.mxu0 0.0
      %2237 = vmatprep.subr.mxu0 0.0
      %2238 = vmatpush1.msra.mxu0 0.0
      %2239 = vmatprep.mubr.f32.mxu0 0.0
      %2240 = vmatmul.mubr.f32.gmra.mrb[0].mxu0 %v2170
      %v2241 = vpop.f32.mrb[0].mxu0
      %v2242 = vadd.f32 %v2011, %v2241
      %v2243 = vpop.f32.mrb[0].mxu0
      %2244 = vmatprep.mubr.f32.mxu0 0.0
      %2245 = vmatmul.mubr.f32.gmra.mrb[0].mxu0 %v2170
      %v2246 = vpop.f32.mrb[0].mxu0
      %v2247 = vadd.f32 %v2016, %v2246
      %v2248 = vpop.f32.mrb[0].mxu0
      %2249 = vmatprep.mubr.f32.mxu0 0.0
      %2250 = vmatmul.mubr.f32.gmra.mrb[0].mxu0 %v1846
      %v2251 = vpop.f32.mrb[0].mxu0
      %v2252 = vadd.f32 %v2021, %v2251
      %v2253 = vpop.f32.mrb[0].mxu0
      %2254 = vmatprep.mubr.f32.mxu0 0.0
      %2255 = vmatmul.mubr.f32.gmra.mrb[0].mxu0 %v1849
      %v2256 = vpop.f32.mrb[0].mxu0
      %v2257 = vadd.f32 %v2026, %v2256
      %v2258 = vpop.f32.mrb[0].mxu0
      %2259 = vmatprep.mubr.f32.mxu0 0.0
      %2260 = vmatmul.mubr.f32.gmra.mrb[0].mxu0 %v1852
      %v2261 = vpop.f32.mrb[0].mxu0
      %v2262 = vadd.f32 %v2031, %v2261
      %v2263 = vpop.f32.mrb[0].mxu0
      %2264 = vmatprep.mubr.f32.mxu0 0.0
      %2265 = vmatmul.mubr.f32.gmra.mrb[0].mxu0 %v1855
      %v2266 = vpop.f32.mrb[0].mxu0
      %v2267 = vadd.f32 %v2036, %v2266
      %v2268 = vpop.f32.mrb[0].mxu0
      %2269 = vmatprep.mubr.f32.mxu0 0.0
      %2270 = vmatmul.mubr.f32.gmra.mrb[0].mxu0 %v1858
      %v2271 = vpop.f32.mrb[0].mxu0
      %v2272 = vadd.f32 %v2041, %v2271
      %v2273 = vpop.f32.mrb[0].mxu0
      %2274 = vmatprep.mubr.f32.mxu0 0.0
      %2275 = vmatmul.mubr.f32.gmra.mrb[0].mxu0 %v1861
      %v2276 = vpop.f32.mrb[0].mxu0
      %v2277 = vadd.f32 %v2046, %v2276
      %v2278 = vpop.f32.mrb[0].mxu0
      %2279 = vmatprep.mubr.f32.mxu0 0.0
      %2280 = vmatmul.mubr.f32.gmra.mrb[0].mxu0 %v1864
      %v2281 = vpop.f32.mrb[0].mxu0
      %v2282 = vadd.f32 %v2051, %v2281
      %v2283 = vpop.f32.mrb[0].mxu0
      %2284 = vmatprep.mubr.f32.mxu0 0.0
      %2285 = vmatmul.mubr.f32.gmra.mrb[0].mxu0 %v1867
      %v2286 = vpop.f32.mrb[0].mxu0
      %v2287 = vadd.f32 %v2056, %v2286
      %v2288 = vpop.f32.mrb[0].mxu0
      %2289 = vmatprep.mubr.f32.mxu0 0.0
      %2290 = vmatmul.mubr.f32.gmra.mrb[0].mxu0 %v1870
      %v2291 = vpop.f32.mrb[0].mxu0
      %v2292 = vadd.f32 %v2061, %v2291
      %v2293 = vpop.f32.mrb[0].mxu0
      %2294 = vmatprep.mubr.f32.mxu0 0.0
      %2295 = vmatmul.mubr.f32.gmra.mrb[0].mxu0 %v1873
      %v2296 = vpop.f32.mrb[0].mxu0
      %v2297 = vadd.f32 %v2066, %v2296
      %v2298 = vpop.f32.mrb[0].mxu0
      %2299 = vmatprep.mubr.f32.mxu0 0.0
      %2300 = vmatmul.mubr.f32.gmra.mrb[0].mxu0 %v1876
      %v2301 = vpop.f32.mrb[0].mxu0
      %v2302 = vadd.f32 %v2071, %v2301
      %v2303 = vpop.f32.mrb[0].mxu0
      %2304 = vmatprep.mubr.f32.mxu0 0.0
      %2305 = vmatmul.mubr.f32.gmra.mrb[0].mxu0 %v1879
      %v2306 = vpop.f32.mrb[0].mxu0
      %v2307 = vadd.f32 %v2076, %v2306
      %v2308 = vpop.f32.mrb[0].mxu0
      %2309 = vmatprep.mubr.f32.mxu0 0.0
      %2310 = vmatmul.mubr.f32.gmra.mrb[0].mxu0 %v1882
      %v2311 = vpop.f32.mrb[0].mxu0
      %v2312 = vadd.f32 %v2081, %v2311
      %v2313 = vpop.f32.mrb[0].mxu0
      %2314 = vmatprep.mubr.f32.mxu0 0.0
      %2315 = vmatmul.mubr.f32.gmra.mrb[0].mxu0 %v1885
      %v2316 = vpop.f32.mrb[0].mxu0
      %v2317 = vadd.f32 %v2086, %v2316
      %v2318 = vpop.f32.mrb[0].mxu0
      %2319 = vmatprep.mubr.f32.mxu0 0.0
      %2320 = vmatmul.mubr.f32.gmra.mrb[0].mxu0 %v1888
      %v2321 = vpop.f32.mrb[0].mxu0
      %v2322 = vadd.f32 %v2091, %v2321
      %v2323 = vpop.f32.mrb[0].mxu0
      %2324 = vmatprep.mubr.f32.mxu0 0.0
      %2325 = vmatmul.mubr.f32.gmra.mrb[0].mxu0 %v1891
      %v2326 = vpop.f32.mrb[0].mxu0
      %v2327 = vadd.f32 %v2096, %v2326
      %v2328 = vpop.f32.mrb[0].mxu0
      %2329 = vmatprep.mubr.f32.mxu0 0.0
      %2330 = vmatmul.mubr.f32.gmra.mrb[0].mxu0 %v1894
      %v2331 = vpop.f32.mrb[0].mxu0
      %v2332 = vadd.f32 %v2101, %v2331
      %v2333 = vpop.f32.mrb[0].mxu0
      %2334 = vmatprep.mubr.f32.mxu0 0.0
      %2335 = vmatmul.mubr.f32.gmra.mrb[0].mxu0 %v1897
      %v2336 = vpop.f32.mrb[0].mxu0
      %v2337 = vadd.f32 %v2106, %v2336
      %v2338 = vpop.f32.mrb[0].mxu0
      %2339 = vmatprep.mubr.f32.mxu0 0.0
      %2340 = vmatmul.mubr.f32.gmra.mrb[0].mxu0 %v1900
      %v2341 = vpop.f32.mrb[0].mxu0
      %v2342 = vadd.f32 %v2111, %v2341
      %v2343 = vpop.f32.mrb[0].mxu0
      %2344 = vmatprep.mubr.f32.mxu0 0.0
      %2345 = vmatmul.mubr.f32.gmra.mrb[0].mxu0 %v1903
      %v2346 = vpop.f32.mrb[0].mxu0
      %v2347 = vadd.f32 %v2116, %v2346
      %v2348 = vpop.f32.mrb[0].mxu0
      %2349 = vmatprep.mubr.f32.mxu0 0.0
      %2350 = vmatmul.mubr.f32.gmra.mrb[0].mxu0 %v1906
      %v2351 = vpop.f32.mrb[0].mxu0
      %v2352 = vadd.f32 %v2121, %v2351
      %v2353 = vpop.f32.mrb[0].mxu0
      %2354 = vmatprep.mubr.f32.mxu0 0.0
      %2355 = vmatmul.mubr.f32.gmra.mrb[0].mxu0 %v1909
      %v2356 = vpop.f32.mrb[0].mxu0
      %v2357 = vadd.f32 %v2126, %v2356
      %v2358 = vpop.f32.mrb[0].mxu0
      %2359 = vmatprep.mubr.f32.mxu0 0.0
      %2360 = vmatmul.mubr.f32.gmra.mrb[0].mxu0 %v1912
      %v2361 = vpop.f32.mrb[0].mxu0
      %v2362 = vadd.f32 %v2131, %v2361
      %v2363 = vpop.f32.mrb[0].mxu0
      %2364 = vmatprep.mubr.f32.mxu0 0.0
      %2365 = vmatmul.mubr.f32.gmra.mrb[0].mxu0 %v1915
      %v2366 = vpop.f32.mrb[0].mxu0
      %v2367 = vadd.f32 %v2136, %v2366
      %v2368 = vpop.f32.mrb[0].mxu0
      %2369 = vmatprep.mubr.f32.mxu0 0.0
      %2370 = vmatmul.mubr.f32.gmra.mrb[0].mxu0 %v1918
      %v2371 = vpop.f32.mrb[0].mxu0
      %v2372 = vadd.f32 %v2141, %v2371
      %v2373 = vpop.f32.mrb[0].mxu0
      %2374 = vmatprep.mubr.f32.mxu0 0.0
      %2375 = vmatmul.mubr.f32.gmra.mrb[0].mxu0 %v1921
      %v2376 = vpop.f32.mrb[0].mxu0
      %v2377 = vadd.f32 %v2146, %v2376
      %v2378 = vpop.f32.mrb[0].mxu0
      %2379 = vmatprep.mubr.f32.mxu0 0.0
      %2380 = vmatmul.mubr.f32.gmra.mrb[0].mxu0 %v1924
      %v2381 = vpop.f32.mrb[0].mxu0
      %v2382 = vadd.f32 %v2151, %v2381
      %v2383 = vpop.f32.mrb[0].mxu0
      %2384 = vmatprep.mubr.f32.mxu0 0.0
      %2385 = vmatmul.mubr.f32.gmra.mrb[0].mxu0 %v1927
      %v2386 = vpop.f32.mrb[0].mxu0
      %v2387 = vadd.f32 %v2156, %v2386
      %v2388 = vpop.f32.mrb[0].mxu0
      %2389 = vmatprep.mubr.f32.mxu0 0.0
      %2390 = vmatmul.mubr.f32.gmra.mrb[0].mxu0 %v1930
      %v2391 = vpop.f32.mrb[0].mxu0
      %v2392 = vadd.f32 %v2161, %v2391
      %v2393 = vpop.f32.mrb[0].mxu0
      %2394 = vmatprep.mubr.f32.mxu0 0.0
      %2395 = vmatmul.mubr.f32.gmra.mrb[0].mxu0 %v1933
      %v2396 = vpop.f32.mrb[0].mxu0
      %v2397 = vadd.f32 %v2166, %v2396
      %v2398 = vpop.f32.mrb[0].mxu0
      %2399 = vdwg.mxu0
      %s2400 = scalar_lea.vmem %s5, 32
      %v2401 = vld [vmem:[%s2400] sm:$0xff]
      %v2402 = vld [vmem:[%s2400 + $0x8] sm:$0xf]
      %v2404 = vsel %vm689, %v2402, 0
      %2406 = vmatprep.subr.mxu0 0.0
      %2407 = vmatpush1.msra.mxu0 %v2401
      %2408 = vmatprep.subr.mxu0 0.0
      %2409 = vmatpush1.msra.mxu0 %v2404
      %2410 = vmatprep.subr.mxu0 0.0
      %2411 = vmatpush1.msra.mxu0 0.0
      %2412 = vmatprep.subr.mxu0 0.0
      %2413 = vmatpush1.msra.mxu0 0.0
      %2414 = vmatprep.subr.mxu0 0.0
      %2415 = vmatpush1.msra.mxu0 0.0
      %2416 = vmatprep.subr.mxu0 0.0
      %2417 = vmatpush1.msra.mxu0 0.0
      %2418 = vmatprep.subr.mxu0 0.0
      %2419 = vmatpush1.msra.mxu0 0.0
      %2420 = vmatprep.subr.mxu0 0.0
      %2421 = vmatpush1.msra.mxu0 0.0
      %2422 = vmatprep.subr.mxu0 0.0
      %2423 = vmatpush1.msra.mxu0 0.0
      %2424 = vmatprep.subr.mxu0 0.0
      %2425 = vmatpush1.msra.mxu0 0.0
      %2426 = vmatprep.subr.mxu0 0.0
      %2427 = vmatpush1.msra.mxu0 0.0
      %2428 = vmatprep.subr.mxu0 0.0
      %2429 = vmatpush1.msra.mxu0 0.0
      %2430 = vmatprep.subr.mxu0 0.0
      %2431 = vmatpush1.msra.mxu0 0.0
      %2432 = vmatprep.subr.mxu0 0.0
      %2433 = vmatpush1.msra.mxu0 0.0
      %2434 = vmatprep.subr.mxu0 0.0
      %2435 = vmatpush1.msra.mxu0 0.0
      %2436 = vmatprep.subr.mxu0 0.0
      %2437 = vmatpush1.msra.mxu0 0.0
      %2438 = vmatprep.subr.mxu0 0.0
      %2439 = vmatpush1.msra.mxu0 0.0
      %2440 = vmatprep.subr.mxu0 0.0
      %2441 = vmatpush1.msra.mxu0 0.0
      %2442 = vmatprep.subr.mxu0 0.0
      %2443 = vmatpush1.msra.mxu0 0.0
      %2444 = vmatprep.subr.mxu0 0.0
      %2445 = vmatpush1.msra.mxu0 0.0
      %2446 = vmatprep.subr.mxu0 0.0
      %2447 = vmatpush1.msra.mxu0 0.0
      %2448 = vmatprep.subr.mxu0 0.0
      %2449 = vmatpush1.msra.mxu0 0.0
      %2450 = vmatprep.subr.mxu0 0.0
      %2451 = vmatpush1.msra.mxu0 0.0
      %2452 = vmatprep.subr.mxu0 0.0
      %2453 = vmatpush1.msra.mxu0 0.0
      %2454 = vmatprep.subr.mxu0 0.0
      %2455 = vmatpush1.msra.mxu0 0.0
      %2456 = vmatprep.subr.mxu0 0.0
      %2457 = vmatpush1.msra.mxu0 0.0
      %2458 = vmatprep.subr.mxu0 0.0
      %2459 = vmatpush1.msra.mxu0 0.0
      %2460 = vmatprep.subr.mxu0 0.0
      %2461 = vmatpush1.msra.mxu0 0.0
      %2462 = vmatprep.subr.mxu0 0.0
      %2463 = vmatpush1.msra.mxu0 0.0
      %2464 = vmatprep.subr.mxu0 0.0
      %2465 = vmatpush1.msra.mxu0 0.0
      %2466 = vmatprep.subr.mxu0 0.0
      %2467 = vmatpush1.msra.mxu0 0.0
      %2468 = vmatprep.subr.mxu0 0.0
      %2469 = vmatpush1.msra.mxu0 0.0
      %2470 = vmatprep.mubr.f32.mxu0 0.0
      %2471 = vmatmul.mubr.f32.gmra.mrb[0].mxu0 %v1852
      %v2472 = vpop.f32.mrb[0].mxu0
      %v2473 = vadd.f32 0.0, %v2472
      %v2474 = vpop.f32.mrb[0].mxu0
      %2475 = vmatprep.mubr.f32.mxu0 0.0
      %2476 = vmatmul.mubr.f32.gmra.mrb[0].mxu0 %v1855
      %v2477 = vpop.f32.mrb[0].mxu0
      %v2478 = vadd.f32 0.0, %v2477
      %v2479 = vpop.f32.mrb[0].mxu0
      %2480 = vmatprep.mubr.f32.mxu0 0.0
      %2481 = vmatmul.mubr.f32.gmra.mrb[0].mxu0 %v1858
      %v2482 = vpop.f32.mrb[0].mxu0
      %v2483 = vadd.f32 0.0, %v2482
      %v2484 = vpop.f32.mrb[0].mxu0
      %2485 = vmatprep.mubr.f32.mxu0 0.0
      %2486 = vmatmul.mubr.f32.gmra.mrb[0].mxu0 %v1861
      %v2487 = vpop.f32.mrb[0].mxu0
      %v2488 = vadd.f32 0.0, %v2487
      %v2489 = vpop.f32.mrb[0].mxu0
      %2490 = vmatprep.mubr.f32.mxu0 0.0
      %2491 = vmatmul.mubr.f32.gmra.mrb[0].mxu0 %v1864
      %v2492 = vpop.f32.mrb[0].mxu0
      %v2493 = vadd.f32 0.0, %v2492
      %v2494 = vpop.f32.mrb[0].mxu0
      %2495 = vmatprep.mubr.f32.mxu0 0.0
      %2496 = vmatmul.mubr.f32.gmra.mrb[0].mxu0 %v1867
      %v2497 = vpop.f32.mrb[0].mxu0
      %v2498 = vadd.f32 0.0, %v2497
      %v2499 = vpop.f32.mrb[0].mxu0
      %2500 = vmatprep.mubr.f32.mxu0 0.0
      %2501 = vmatmul.mubr.f32.gmra.mrb[0].mxu0 %v1870
      %v2502 = vpop.f32.mrb[0].mxu0
      %v2503 = vadd.f32 0.0, %v2502
      %v2504 = vpop.f32.mrb[0].mxu0
      %2505 = vmatprep.mubr.f32.mxu0 0.0
      %2506 = vmatmul.mubr.f32.gmra.mrb[0].mxu0 %v1873
      %v2507 = vpop.f32.mrb[0].mxu0
      %v2508 = vadd.f32 0.0, %v2507
      %v2509 = vpop.f32.mrb[0].mxu0
      %2510 = vmatprep.mubr.f32.mxu0 0.0
      %2511 = vmatmul.mubr.f32.gmra.mrb[0].mxu0 %v1876
      %v2512 = vpop.f32.mrb[0].mxu0
      %v2513 = vadd.f32 0.0, %v2512
      %v2514 = vpop.f32.mrb[0].mxu0
      %2515 = vmatprep.mubr.f32.mxu0 0.0
      %2516 = vmatmul.mubr.f32.gmra.mrb[0].mxu0 %v1879
      %v2517 = vpop.f32.mrb[0].mxu0
      %v2518 = vadd.f32 0.0, %v2517
      %v2519 = vpop.f32.mrb[0].mxu0
      %2520 = vmatprep.mubr.f32.mxu0 0.0
      %2521 = vmatmul.mubr.f32.gmra.mrb[0].mxu0 %v1882
      %v2522 = vpop.f32.mrb[0].mxu0
      %v2523 = vadd.f32 0.0, %v2522
      %v2524 = vpop.f32.mrb[0].mxu0
      %2525 = vmatprep.mubr.f32.mxu0 0.0
      %2526 = vmatmul.mubr.f32.gmra.mrb[0].mxu0 %v1885
      %v2527 = vpop.f32.mrb[0].mxu0
      %v2528 = vadd.f32 0.0, %v2527
      %v2529 = vpop.f32.mrb[0].mxu0
      %2530 = vmatprep.mubr.f32.mxu0 0.0
      %2531 = vmatmul.mubr.f32.gmra.mrb[0].mxu0 %v1888
      %v2532 = vpop.f32.mrb[0].mxu0
      %v2533 = vadd.f32 0.0, %v2532
      %v2534 = vpop.f32.mrb[0].mxu0
      %2535 = vmatprep.mubr.f32.mxu0 0.0
      %2536 = vmatmul.mubr.f32.gmra.mrb[0].mxu0 %v1891
      %v2537 = vpop.f32.mrb[0].mxu0
      %v2538 = vadd.f32 0.0, %v2537
      %v2539 = vpop.f32.mrb[0].mxu0
      %2540 = vmatprep.mubr.f32.mxu0 0.0
      %2541 = vmatmul.mubr.f32.gmra.mrb[0].mxu0 %v1894
      %v2542 = vpop.f32.mrb[0].mxu0
      %v2543 = vadd.f32 0.0, %v2542
      %v2544 = vpop.f32.mrb[0].mxu0
      %2545 = vmatprep.mubr.f32.mxu0 0.0
      %2546 = vmatmul.mubr.f32.gmra.mrb[0].mxu0 %v1897
      %v2547 = vpop.f32.mrb[0].mxu0
      %v2548 = vadd.f32 0.0, %v2547
      %v2549 = vpop.f32.mrb[0].mxu0
      %2550 = vmatprep.mubr.f32.mxu0 0.0
      %2551 = vmatmul.mubr.f32.gmra.mrb[0].mxu0 %v1900
      %v2552 = vpop.f32.mrb[0].mxu0
      %v2553 = vadd.f32 0.0, %v2552
      %v2554 = vpop.f32.mrb[0].mxu0
      %2555 = vmatprep.mubr.f32.mxu0 0.0
      %2556 = vmatmul.mubr.f32.gmra.mrb[0].mxu0 %v1903
      %v2557 = vpop.f32.mrb[0].mxu0
      %v2558 = vadd.f32 0.0, %v2557
      %v2559 = vpop.f32.mrb[0].mxu0
      %2560 = vmatprep.mubr.f32.mxu0 0.0
      %2561 = vmatmul.mubr.f32.gmra.mrb[0].mxu0 %v1906
      %v2562 = vpop.f32.mrb[0].mxu0
      %v2563 = vadd.f32 0.0, %v2562
      %v2564 = vpop.f32.mrb[0].mxu0
      %2565 = vmatprep.mubr.f32.mxu0 0.0
      %2566 = vmatmul.mubr.f32.gmra.mrb[0].mxu0 %v1909
      %v2567 = vpop.f32.mrb[0].mxu0
      %v2568 = vadd.f32 0.0, %v2567
      %v2569 = vpop.f32.mrb[0].mxu0
      %2570 = vmatprep.mubr.f32.mxu0 0.0
      %2571 = vmatmul.mubr.f32.gmra.mrb[0].mxu0 %v1912
      %v2572 = vpop.f32.mrb[0].mxu0
      %v2573 = vadd.f32 0.0, %v2572
      %v2574 = vpop.f32.mrb[0].mxu0
      %2575 = vmatprep.mubr.f32.mxu0 0.0
      %2576 = vmatmul.mubr.f32.gmra.mrb[0].mxu0 %v1915
      %v2577 = vpop.f32.mrb[0].mxu0
      %v2578 = vadd.f32 0.0, %v2577
      %v2579 = vpop.f32.mrb[0].mxu0
      %2580 = vmatprep.mubr.f32.mxu0 0.0
      %2581 = vmatmul.mubr.f32.gmra.mrb[0].mxu0 %v1918
      %v2582 = vpop.f32.mrb[0].mxu0
      %v2583 = vadd.f32 0.0, %v2582
      %v2584 = vpop.f32.mrb[0].mxu0
      %2585 = vmatprep.mubr.f32.mxu0 0.0
      %2586 = vmatmul.mubr.f32.gmra.mrb[0].mxu0 %v1921
      %v2587 = vpop.f32.mrb[0].mxu0
      %v2588 = vadd.f32 0.0, %v2587
      %v2589 = vpop.f32.mrb[0].mxu0
      %2590 = vmatprep.mubr.f32.mxu0 0.0
      %2591 = vmatmul.mubr.f32.gmra.mrb[0].mxu0 %v1924
      %v2592 = vpop.f32.mrb[0].mxu0
      %v2593 = vadd.f32 0.0, %v2592
      %v2594 = vpop.f32.mrb[0].mxu0
      %2595 = vmatprep.mubr.f32.mxu0 0.0
      %2596 = vmatmul.mubr.f32.gmra.mrb[0].mxu0 %v1927
      %v2597 = vpop.f32.mrb[0].mxu0
      %v2598 = vadd.f32 0.0, %v2597
      %v2599 = vpop.f32.mrb[0].mxu0
      %2600 = vmatprep.mubr.f32.mxu0 0.0
      %2601 = vmatmul.mubr.f32.gmra.mrb[0].mxu0 %v1930
      %v2602 = vpop.f32.mrb[0].mxu0
      %v2603 = vadd.f32 0.0, %v2602
      %v2604 = vpop.f32.mrb[0].mxu0
      %2605 = vmatprep.mubr.f32.mxu0 0.0
      %2606 = vmatmul.mubr.f32.gmra.mrb[0].mxu0 %v1933
      %v2607 = vpop.f32.mrb[0].mxu0
      %v2608 = vadd.f32 0.0, %v2607
      %v2609 = vpop.f32.mrb[0].mxu0
      %2610 = vmatprep.mubr.f32.mxu0 0.0
      %2611 = vmatmul.mubr.f32.gmra.mrb[0].mxu0 %v1936
      %v2612 = vpop.f32.mrb[0].mxu0
      %v2613 = vadd.f32 0.0, %v2612
      %v2614 = vpop.f32.mrb[0].mxu0
      %2615 = vmatprep.mubr.f32.mxu0 0.0
      %2616 = vmatmul.mubr.f32.gmra.mrb[0].mxu0 %v1939
      %v2617 = vpop.f32.mrb[0].mxu0
      %v2618 = vadd.f32 0.0, %v2617
      %v2619 = vpop.f32.mrb[0].mxu0
      %2620 = vmatprep.mubr.f32.mxu0 0.0
      %2621 = vmatmul.mubr.f32.gmra.mrb[0].mxu0 %v2170
      %v2622 = vpop.f32.mrb[0].mxu0
      %v2623 = vadd.f32 0.0, %v2622
      %v2624 = vpop.f32.mrb[0].mxu0
      %2625 = vmatprep.mubr.f32.mxu0 0.0
      %2626 = vmatmul.mubr.f32.gmra.mrb[0].mxu0 %v2170
      %v2627 = vpop.f32.mrb[0].mxu0
      %v2628 = vadd.f32 0.0, %v2627
      %v2629 = vpop.f32.mrb[0].mxu0
      %2630 = vdwg.mxu0
      %v2631 = vadd.f32 %v2242, %v2473
      %v2632 = vadd.f32 %v2247, %v2478
      %v2633 = vadd.f32 %v2252, %v2483
      %v2634 = vadd.f32 %v2257, %v2488
      %v2635 = vadd.f32 %v2262, %v2493
      %v2636 = vadd.f32 %v2267, %v2498
      %v2637 = vadd.f32 %v2272, %v2503
      %v2638 = vadd.f32 %v2277, %v2508
      %v2639 = vadd.f32 %v2282, %v2513
      %v2640 = vadd.f32 %v2287, %v2518
      %v2641 = vadd.f32 %v2292, %v2523
      %v2642 = vadd.f32 %v2297, %v2528
      %v2643 = vadd.f32 %v2302, %v2533
      %v2644 = vadd.f32 %v2307, %v2538
      %v2645 = vadd.f32 %v2312, %v2543
      %v2646 = vadd.f32 %v2317, %v2548
      %v2647 = vadd.f32 %v2322, %v2553
      %v2648 = vadd.f32 %v2327, %v2558
      %v2649 = vadd.f32 %v2332, %v2563
      %v2650 = vadd.f32 %v2337, %v2568
      %v2651 = vadd.f32 %v2342, %v2573
      %v2652 = vadd.f32 %v2347, %v2578
      %v2653 = vadd.f32 %v2352, %v2583
      %v2654 = vadd.f32 %v2357, %v2588
      %v2655 = vadd.f32 %v2362, %v2593
      %v2656 = vadd.f32 %v2367, %v2598
      %v2657 = vadd.f32 %v2372, %v2603
      %v2658 = vadd.f32 %v2377, %v2608
      %v2659 = vadd.f32 %v2382, %v2613
      %v2660 = vadd.f32 %v2387, %v2618
      %v2661 = vadd.f32 %v2392, %v2623
      %v2662 = vadd.f32 %v2397, %v2628
      %v2663 = vld [vmem:[%s6] sm:$0x1]
      %v2665 = vlaneseq
      %v2666 = vshrl.u32 %v2665, 7
      %v2667 = vsub.s32 0, %v2666
      %v2668 = vrot.slane %v2663, %v2667
      %v2670 = vadd.f32 %v2631, %v2668
      %v2671 = vadd.f32 %v2632, %v2668
      %v2672 = vadd.f32 %v2633, %v2668
      %v2673 = vadd.f32 %v2634, %v2668
      %v2674 = vadd.f32 %v2635, %v2668
      %v2675 = vadd.f32 %v2636, %v2668
      %v2676 = vadd.f32 %v2637, %v2668
      %v2677 = vadd.f32 %v2638, %v2668
      %v2678 = vadd.f32 %v2639, %v2668
      %v2679 = vadd.f32 %v2640, %v2668
      %v2680 = vadd.f32 %v2641, %v2668
      %v2681 = vadd.f32 %v2642, %v2668
      %v2682 = vadd.f32 %v2643, %v2668
      %v2683 = vadd.f32 %v2644, %v2668
      %v2684 = vadd.f32 %v2645, %v2668
      %v2685 = vadd.f32 %v2646, %v2668
      %v2686 = vadd.f32 %v2647, %v2668
      %v2687 = vadd.f32 %v2648, %v2668
      %v2688 = vadd.f32 %v2649, %v2668
      %v2689 = vadd.f32 %v2650, %v2668
      %v2690 = vadd.f32 %v2651, %v2668
      %v2691 = vadd.f32 %v2652, %v2668
      %v2692 = vadd.f32 %v2653, %v2668
      %v2693 = vadd.f32 %v2654, %v2668
      %v2694 = vadd.f32 %v2655, %v2668
      %v2695 = vadd.f32 %v2656, %v2668
      %v2696 = vadd.f32 %v2657, %v2668
      %v2697 = vadd.f32 %v2658, %v2668
      %v2698 = vadd.f32 %v2659, %v2668
      %v2699 = vadd.f32 %v2660, %v2668
      %v2700 = vadd.f32 %v2661, %v2668
      %v2701 = vadd.f32 %v2662, %v2668
      %v2702 = vld [vmem:[%s476] sm:$0x1]
      %v2703 = vsub.f32 0.0, %v2702
      %v2704 = vmul.f32 %v2703, 1.442695
      %v2705 = vpow.pop %v2704
      %v2706 = vadd.f32 %v2705, 1.0
      %v2707 = vrcp.pop %v2706
      %v2708 = vmul.f32 1.0, %v2707
      %v2709 = vmul.f32 %v2702, %v2708
      %v2710 = vld [vmem:[%s7] sm:$0xff]
      %v2711 = vld [vmem:[%s7 + $0x8] sm:$0xff]
      %v2712 = vld [vmem:[%s7 + $0x10] sm:$0xff]
      %v2713 = vld [vmem:[%s7 + $0x18] sm:$0xff]
      %v2714 = vld [vmem:[%s8] sm:$0x1]
      %vm2715 = vcmask 261120
      %v2717 = vsel %vm2715, %v2709, 0
      %2719 = vmatprep.subr.mxu0 0.0
      %2720 = vmatpush1.msra.mxu0 %v2710
      %2721 = vmatprep.subr.mxu0 0.0
      %2722 = vmatpush1.msra.mxu0 %v2711
      %2723 = vmatprep.subr.mxu0 0.0
      %2724 = vmatpush1.msra.mxu0 %v2712
      %2725 = vmatprep.subr.mxu0 0.0
      %2726 = vmatpush1.msra.mxu0 %v2713
      %2727 = vmatprep.subr.mxu0 0.0
      %2728 = vmatpush1.msra.mxu0 0.0
      %2729 = vmatprep.subr.mxu0 0.0
      %2730 = vmatpush1.msra.mxu0 0.0
      %2731 = vmatprep.subr.mxu0 0.0
      %2732 = vmatpush1.msra.mxu0 0.0
      %2733 = vmatprep.subr.mxu0 0.0
      %2734 = vmatpush1.msra.mxu0 0.0
      %2735 = vmatprep.subr.mxu0 0.0
      %2736 = vmatpush1.msra.mxu0 0.0
      %2737 = vmatprep.subr.mxu0 0.0
      %2738 = vmatpush1.msra.mxu0 0.0
      %2739 = vmatprep.subr.mxu0 0.0
      %2740 = vmatpush1.msra.mxu0 0.0
      %2741 = vmatprep.subr.mxu0 0.0
      %2742 = vmatpush1.msra.mxu0 0.0
      %2743 = vmatprep.subr.mxu0 0.0
      %2744 = vmatpush1.msra.mxu0 0.0
      %2745 = vmatprep.subr.mxu0 0.0
      %2746 = vmatpush1.msra.mxu0 0.0
      %2747 = vmatprep.subr.mxu0 0.0
      %2748 = vmatpush1.msra.mxu0 0.0
      %2749 = vmatprep.subr.mxu0 0.0
      %2750 = vmatpush1.msra.mxu0 0.0
      %2751 = vmatprep.subr.mxu0 0.0
      %2752 = vmatpush1.msra.mxu0 0.0
      %2753 = vmatprep.subr.mxu0 0.0
      %2754 = vmatpush1.msra.mxu0 0.0
      %2755 = vmatprep.subr.mxu0 0.0
      %2756 = vmatpush1.msra.mxu0 0.0
      %2757 = vmatprep.subr.mxu0 0.0
      %2758 = vmatpush1.msra.mxu0 0.0
      %2759 = vmatprep.subr.mxu0 0.0
      %2760 = vmatpush1.msra.mxu0 0.0
      %2761 = vmatprep.subr.mxu0 0.0
      %2762 = vmatpush1.msra.mxu0 0.0
      %2763 = vmatprep.subr.mxu0 0.0
      %2764 = vmatpush1.msra.mxu0 0.0
      %2765 = vmatprep.subr.mxu0 0.0
      %2766 = vmatpush1.msra.mxu0 0.0
      %2767 = vmatprep.subr.mxu0 0.0
      %2768 = vmatpush1.msra.mxu0 0.0
      %2769 = vmatprep.subr.mxu0 0.0
      %2770 = vmatpush1.msra.mxu0 0.0
      %2771 = vmatprep.subr.mxu0 0.0
      %2772 = vmatpush1.msra.mxu0 0.0
      %2773 = vmatprep.subr.mxu0 0.0
      %2774 = vmatpush1.msra.mxu0 0.0
      %2775 = vmatprep.subr.mxu0 0.0
      %2776 = vmatpush1.msra.mxu0 0.0
      %2777 = vmatprep.subr.mxu0 0.0
      %2778 = vmatpush1.msra.mxu0 0.0
      %2779 = vmatprep.subr.mxu0 0.0
      %2780 = vmatpush1.msra.mxu0 0.0
      %2781 = vmatprep.subr.mxu0 0.0
      %2782 = vmatpush1.msra.mxu0 0.0
      %2783 = vmatprep.mubr.f32.mxu0 0.0
      %2784 = vmatmul.mubr.f32.gmra.mrb[0].mxu0 %v2717
      %v2785 = vpop.f32.mrb[0].mxu0
      %v2786 = vadd.f32 %v2714, %v2785
      %v2787 = vpop.f32.mrb[0].mxu0
      %2788 = vdwg.mxu0
      %v2789 = vlaneseq
      %v2790 = vshrl.u32 %v2789, 7
      %v2791 = vsub.s32 0, %v2790
      %v2792 = vrot.slane %v2786, %v2791
      %v2793 = vadd.f32 %v2670, %v2792
      %v2794 = vadd.f32 %v2671, %v2792
      %v2795 = vadd.f32 %v2672, %v2792
      %v2796 = vadd.f32 %v2673, %v2792
      %v2797 = vadd.f32 %v2674, %v2792
      %v2798 = vadd.f32 %v2675, %v2792
      %v2799 = vadd.f32 %v2676, %v2792
      %v2800 = vadd.f32 %v2677, %v2792
      %v2801 = vadd.f32 %v2678, %v2792
      %v2802 = vadd.f32 %v2679, %v2792
      %v2803 = vadd.f32 %v2680, %v2792
      %v2804 = vadd.f32 %v2681, %v2792
      %v2805 = vadd.f32 %v2682, %v2792
      %v2806 = vadd.f32 %v2683, %v2792
      %v2807 = vadd.f32 %v2684, %v2792
      %v2808 = vadd.f32 %v2685, %v2792
      %v2809 = vadd.f32 %v2686, %v2792
      %v2810 = vadd.f32 %v2687, %v2792
      %v2811 = vadd.f32 %v2688, %v2792
      %v2812 = vadd.f32 %v2689, %v2792
      %v2813 = vadd.f32 %v2690, %v2792
      %v2814 = vadd.f32 %v2691, %v2792
      %v2815 = vadd.f32 %v2692, %v2792
      %v2816 = vadd.f32 %v2693, %v2792
      %v2817 = vadd.f32 %v2694, %v2792
      %v2818 = vadd.f32 %v2695, %v2792
      %v2819 = vadd.f32 %v2696, %v2792
      %v2820 = vadd.f32 %v2697, %v2792
      %v2821 = vadd.f32 %v2698, %v2792
      %v2822 = vadd.f32 %v2699, %v2792
      %v2823 = vadd.f32 %v2700, %v2792
      %v2824 = vadd.f32 %v2701, %v2792
      %v2825 = vsel %vm514, %v2793, 0.0
      %v2826 = vsel %vm514, %v2794, 0.0
      %v2827 = vadd.f32 %v2825, %v2826
      %v2828 = vsel %vm514, %v2795, 0.0
      %v2829 = vadd.f32 %v2827, %v2828
      %v2830 = vsel %vm514, %v2796, 0.0
      %v2831 = vadd.f32 %v2829, %v2830
      %v2832 = vsel %vm514, %v2797, 0.0
      %v2833 = vadd.f32 %v2831, %v2832
      %v2834 = vsel %vm514, %v2798, 0.0
      %v2835 = vadd.f32 %v2833, %v2834
      %v2836 = vsel %vm514, %v2799, 0.0
      %v2837 = vadd.f32 %v2835, %v2836
      %v2838 = vsel %vm514, %v2800, 0.0
      %v2839 = vadd.f32 %v2837, %v2838
      %v2840 = vsel %vm514, %v2801, 0.0
      %v2841 = vadd.f32 %v2839, %v2840
      %v2842 = vsel %vm514, %v2802, 0.0
      %v2843 = vadd.f32 %v2841, %v2842
      %v2844 = vsel %vm514, %v2803, 0.0
      %v2845 = vadd.f32 %v2843, %v2844
      %v2846 = vsel %vm514, %v2804, 0.0
      %v2847 = vadd.f32 %v2845, %v2846
      %v2848 = vsel %vm514, %v2805, 0.0
      %v2849 = vadd.f32 %v2847, %v2848
      %v2850 = vsel %vm514, %v2806, 0.0
      %v2851 = vadd.f32 %v2849, %v2850
      %v2852 = vsel %vm514, %v2807, 0.0
      %v2853 = vadd.f32 %v2851, %v2852
      %v2854 = vsel %vm514, %v2808, 0.0
      %v2855 = vadd.f32 %v2853, %v2854
      %v2856 = vsel %vm514, %v2809, 0.0
      %v2857 = vadd.f32 %v2855, %v2856
      %v2858 = vsel %vm514, %v2810, 0.0
      %v2859 = vadd.f32 %v2857, %v2858
      %v2860 = vsel %vm514, %v2811, 0.0
      %v2861 = vadd.f32 %v2859, %v2860
      %v2862 = vsel %vm514, %v2812, 0.0
      %v2863 = vadd.f32 %v2861, %v2862
      %v2864 = vsel %vm514, %v2813, 0.0
      %v2865 = vadd.f32 %v2863, %v2864
      %v2866 = vsel %vm514, %v2814, 0.0
      %v2867 = vadd.f32 %v2865, %v2866
      %v2868 = vsel %vm514, %v2815, 0.0
      %v2869 = vadd.f32 %v2867, %v2868
      %v2870 = vsel %vm514, %v2816, 0.0
      %v2871 = vadd.f32 %v2869, %v2870
      %v2872 = vsel %vm514, %v2817, 0.0
      %v2873 = vadd.f32 %v2871, %v2872
      %v2874 = vsel %vm514, %v2818, 0.0
      %v2875 = vadd.f32 %v2873, %v2874
      %v2876 = vsel %vm514, %v2819, 0.0
      %v2877 = vadd.f32 %v2875, %v2876
      %v2878 = vsel %vm514, %v2820, 0.0
      %v2879 = vadd.f32 %v2877, %v2878
      %v2880 = vsel %vm514, %v2821, 0.0
      %v2881 = vadd.f32 %v2879, %v2880
      %v2882 = vsel %vm514, %v2822, 0.0
      %v2883 = vadd.f32 %v2881, %v2882
      %v2884 = vsel %vm514, %v2823, 0.0
      %v2885 = vadd.f32 %v2883, %v2884
      %v2886 = vsel %vm514, %v2824, 0.0
      %v2887 = vadd.f32 %v2885, %v2886
      %v2888 = vrot.slane %v2887, 4
      %v2889 = vadd.f32 %v2887, %v2888
      %v2890 = vrot.slane %v2889, 2
      %v2891 = vadd.f32 %v2889, %v2890
      %v2892 = vrot.slane %v2891, 1
      %v2893 = vadd.f32 %v2891, %v2892
      %v2894 = vmul.f32 %v2793, %v2793
      %v2895 = vmul.f32 %v2794, %v2794
      %v2896 = vmul.f32 %v2795, %v2795
      %v2897 = vmul.f32 %v2796, %v2796
      %v2898 = vmul.f32 %v2797, %v2797
      %v2899 = vmul.f32 %v2798, %v2798
      %v2900 = vmul.f32 %v2799, %v2799
      %v2901 = vmul.f32 %v2800, %v2800
      %v2902 = vmul.f32 %v2801, %v2801
      %v2903 = vmul.f32 %v2802, %v2802
      %v2904 = vmul.f32 %v2803, %v2803
      %v2905 = vmul.f32 %v2804, %v2804
      %v2906 = vmul.f32 %v2805, %v2805
      %v2907 = vmul.f32 %v2806, %v2806
      %v2908 = vmul.f32 %v2807, %v2807
      %v2909 = vmul.f32 %v2808, %v2808
      %v2910 = vmul.f32 %v2809, %v2809
      %v2911 = vmul.f32 %v2810, %v2810
      %v2912 = vmul.f32 %v2811, %v2811
      %v2913 = vmul.f32 %v2812, %v2812
      %v2914 = vmul.f32 %v2813, %v2813
      %v2915 = vmul.f32 %v2814, %v2814
      %v2916 = vmul.f32 %v2815, %v2815
      %v2917 = vmul.f32 %v2816, %v2816
      %v2918 = vmul.f32 %v2817, %v2817
      %v2919 = vmul.f32 %v2818, %v2818
      %v2920 = vmul.f32 %v2819, %v2819
      %v2921 = vmul.f32 %v2820, %v2820
      %v2922 = vmul.f32 %v2821, %v2821
      %v2923 = vmul.f32 %v2822, %v2822
      %v2924 = vmul.f32 %v2823, %v2823
      %v2925 = vmul.f32 %v2824, %v2824
      %v2926 = vsel %vm514, %v2894, 0.0
      %v2927 = vsel %vm514, %v2895, 0.0
      %v2928 = vadd.f32 %v2926, %v2927
      %v2929 = vsel %vm514, %v2896, 0.0
      %v2930 = vadd.f32 %v2928, %v2929
      %v2931 = vsel %vm514, %v2897, 0.0
      %v2932 = vadd.f32 %v2930, %v2931
      %v2933 = vsel %vm514, %v2898, 0.0
      %v2934 = vadd.f32 %v2932, %v2933
      %v2935 = vsel %vm514, %v2899, 0.0
      %v2936 = vadd.f32 %v2934, %v2935
      %v2937 = vsel %vm514, %v2900, 0.0
      %v2938 = vadd.f32 %v2936, %v2937
      %v2939 = vsel %vm514, %v2901, 0.0
      %v2940 = vadd.f32 %v2938, %v2939
      %v2941 = vsel %vm514, %v2902, 0.0
      %v2942 = vadd.f32 %v2940, %v2941
      %v2943 = vsel %vm514, %v2903, 0.0
      %v2944 = vadd.f32 %v2942, %v2943
      %v2945 = vsel %vm514, %v2904, 0.0
      %v2946 = vadd.f32 %v2944, %v2945
      %v2947 = vsel %vm514, %v2905, 0.0
      %v2948 = vadd.f32 %v2946, %v2947
      %v2949 = vsel %vm514, %v2906, 0.0
      %v2950 = vadd.f32 %v2948, %v2949
      %v2951 = vsel %vm514, %v2907, 0.0
      %v2952 = vadd.f32 %v2950, %v2951
      %v2953 = vsel %vm514, %v2908, 0.0
      %v2954 = vadd.f32 %v2952, %v2953
      %v2955 = vsel %vm514, %v2909, 0.0
      %v2956 = vadd.f32 %v2954, %v2955
      %v2957 = vsel %vm514, %v2910, 0.0
      %v2958 = vadd.f32 %v2956, %v2957
      %v2959 = vsel %vm514, %v2911, 0.0
      %v2960 = vadd.f32 %v2958, %v2959
      %v2961 = vsel %vm514, %v2912, 0.0
      %v2962 = vadd.f32 %v2960, %v2961
      %v2963 = vsel %vm514, %v2913, 0.0
      %v2964 = vadd.f32 %v2962, %v2963
      %v2965 = vsel %vm514, %v2914, 0.0
      %v2966 = vadd.f32 %v2964, %v2965
      %v2967 = vsel %vm514, %v2915, 0.0
      %v2968 = vadd.f32 %v2966, %v2967
      %v2969 = vsel %vm514, %v2916, 0.0
      %v2970 = vadd.f32 %v2968, %v2969
      %v2971 = vsel %vm514, %v2917, 0.0
      %v2972 = vadd.f32 %v2970, %v2971
      %v2973 = vsel %vm514, %v2918, 0.0
      %v2974 = vadd.f32 %v2972, %v2973
      %v2975 = vsel %vm514, %v2919, 0.0
      %v2976 = vadd.f32 %v2974, %v2975
      %v2977 = vsel %vm514, %v2920, 0.0
      %v2978 = vadd.f32 %v2976, %v2977
      %v2979 = vsel %vm514, %v2921, 0.0
      %v2980 = vadd.f32 %v2978, %v2979
      %v2981 = vsel %vm514, %v2922, 0.0
      %v2982 = vadd.f32 %v2980, %v2981
      %v2983 = vsel %vm514, %v2923, 0.0
      %v2984 = vadd.f32 %v2982, %v2983
      %v2985 = vsel %vm514, %v2924, 0.0
      %v2986 = vadd.f32 %v2984, %v2985
      %v2987 = vsel %vm514, %v2925, 0.0
      %v2988 = vadd.f32 %v2986, %v2987
      %v2989 = vrot.slane %v2988, 4
      %v2990 = vadd.f32 %v2988, %v2989
      %v2991 = vrot.slane %v2990, 2
      %v2992 = vadd.f32 %v2990, %v2991
      %v2993 = vrot.slane %v2992, 1
      %v2994 = vadd.f32 %v2992, %v2993
      %v2995 = vld [vmem:[%s11] sm:$0xf]
      %v2997 = vsel %vm514, %v2893, 0
      %v3000 = vsel %vm689, %v2995, 0
      %3002 = vmatprep.subr.mxu0 0.0
      %3003 = vmatpush1.msra.mxu0 %v3000
      %3004 = vmatprep.subr.mxu0 0.0
      %3005 = vmatpush1.msra.mxu0 0.0
      %3006 = vmatprep.subr.mxu0 0.0
      %3007 = vmatpush1.msra.mxu0 0.0
      %3008 = vmatprep.subr.mxu0 0.0
      %3009 = vmatpush1.msra.mxu0 0.0
      %3010 = vmatprep.subr.mxu0 0.0
      %3011 = vmatpush1.msra.mxu0 0.0
      %3012 = vmatprep.subr.mxu0 0.0
      %3013 = vmatpush1.msra.mxu0 0.0
      %3014 = vmatprep.subr.mxu0 0.0
      %3015 = vmatpush1.msra.mxu0 0.0
      %3016 = vmatprep.subr.mxu0 0.0
      %3017 = vmatpush1.msra.mxu0 0.0
      %3018 = vmatprep.subr.mxu0 0.0
      %3019 = vmatpush1.msra.mxu0 0.0
      %3020 = vmatprep.subr.mxu0 0.0
      %3021 = vmatpush1.msra.mxu0 0.0
      %3022 = vmatprep.subr.mxu0 0.0
      %3023 = vmatpush1.msra.mxu0 0.0
      %3024 = vmatprep.subr.mxu0 0.0
      %3025 = vmatpush1.msra.mxu0 0.0
      %3026 = vmatprep.subr.mxu0 0.0
      %3027 = vmatpush1.msra.mxu0 0.0
      %3028 = vmatprep.subr.mxu0 0.0
      %3029 = vmatpush1.msra.mxu0 0.0
      %3030 = vmatprep.subr.mxu0 0.0
      %3031 = vmatpush1.msra.mxu0 0.0
      %3032 = vmatprep.subr.mxu0 0.0
      %3033 = vmatpush1.msra.mxu0 0.0
      %3034 = vmatprep.subr.mxu0 0.0
      %3035 = vmatpush1.msra.mxu0 0.0
      %3036 = vmatprep.subr.mxu0 0.0
      %3037 = vmatpush1.msra.mxu0 0.0
      %3038 = vmatprep.subr.mxu0 0.0
      %3039 = vmatpush1.msra.mxu0 0.0
      %3040 = vmatprep.subr.mxu0 0.0
      %3041 = vmatpush1.msra.mxu0 0.0
      %3042 = vmatprep.subr.mxu0 0.0
      %3043 = vmatpush1.msra.mxu0 0.0
      %3044 = vmatprep.subr.mxu0 0.0
      %3045 = vmatpush1.msra.mxu0 0.0
      %3046 = vmatprep.subr.mxu0 0.0
      %3047 = vmatpush1.msra.mxu0 0.0
      %3048 = vmatprep.subr.mxu0 0.0
      %3049 = vmatpush1.msra.mxu0 0.0
      %3050 = vmatprep.subr.mxu0 0.0
      %3051 = vmatpush1.msra.mxu0 0.0
      %3052 = vmatprep.subr.mxu0 0.0
      %3053 = vmatpush1.msra.mxu0 0.0
      %3054 = vmatprep.subr.mxu0 0.0
      %3055 = vmatpush1.msra.mxu0 0.0
      %3056 = vmatprep.subr.mxu0 0.0
      %3057 = vmatpush1.msra.mxu0 0.0
      %3058 = vmatprep.subr.mxu0 0.0
      %3059 = vmatpush1.msra.mxu0 0.0
      %3060 = vmatprep.subr.mxu0 0.0
      %3061 = vmatpush1.msra.mxu0 0.0
      %3062 = vmatprep.subr.mxu0 0.0
      %3063 = vmatpush1.msra.mxu0 0.0
      %3064 = vmatprep.subr.mxu0 0.0
      %3065 = vmatpush1.msra.mxu0 0.0
      %3066 = vmatprep.mubr.f32.mxu0 0.0
      %3067 = vmatmul.mubr.f32.gmra.mrb[0].mxu0 %v2997
      %v3068 = vpop.f32.mrb[0].mxu0
      %v3069 = vadd.f32 0.0, %v3068
      %v3070 = vpop.f32.mrb[0].mxu0
      %3071 = vdwg.mxu0
      %v3073 = vsel %vm514, %v2994, 0
      %3075 = vmatprep.subr.mxu0 0.0
      %3076 = vmatpush1.msra.mxu0 %v3000
      %3077 = vmatprep.subr.mxu0 0.0
      %3078 = vmatpush1.msra.mxu0 0.0
      %3079 = vmatprep.subr.mxu0 0.0
      %3080 = vmatpush1.msra.mxu0 0.0
      %3081 = vmatprep.subr.mxu0 0.0
      %3082 = vmatpush1.msra.mxu0 0.0
      %3083 = vmatprep.subr.mxu0 0.0
      %3084 = vmatpush1.msra.mxu0 0.0
      %3085 = vmatprep.subr.mxu0 0.0
      %3086 = vmatpush1.msra.mxu0 0.0
      %3087 = vmatprep.subr.mxu0 0.0
      %3088 = vmatpush1.msra.mxu0 0.0
      %3089 = vmatprep.subr.mxu0 0.0
      %3090 = vmatpush1.msra.mxu0 0.0
      %3091 = vmatprep.subr.mxu0 0.0
      %3092 = vmatpush1.msra.mxu0 0.0
      %3093 = vmatprep.subr.mxu0 0.0
      %3094 = vmatpush1.msra.mxu0 0.0
      %3095 = vmatprep.subr.mxu0 0.0
      %3096 = vmatpush1.msra.mxu0 0.0
      %3097 = vmatprep.subr.mxu0 0.0
      %3098 = vmatpush1.msra.mxu0 0.0
      %3099 = vmatprep.subr.mxu0 0.0
      %3100 = vmatpush1.msra.mxu0 0.0
      %3101 = vmatprep.subr.mxu0 0.0
      %3102 = vmatpush1.msra.mxu0 0.0
      %3103 = vmatprep.subr.mxu0 0.0
      %3104 = vmatpush1.msra.mxu0 0.0
      %3105 = vmatprep.subr.mxu0 0.0
      %3106 = vmatpush1.msra.mxu0 0.0
      %3107 = vmatprep.subr.mxu0 0.0
      %3108 = vmatpush1.msra.mxu0 0.0
      %3109 = vmatprep.subr.mxu0 0.0
      %3110 = vmatpush1.msra.mxu0 0.0
      %3111 = vmatprep.subr.mxu0 0.0
      %3112 = vmatpush1.msra.mxu0 0.0
      %3113 = vmatprep.subr.mxu0 0.0
      %3114 = vmatpush1.msra.mxu0 0.0
      %3115 = vmatprep.subr.mxu0 0.0
      %3116 = vmatpush1.msra.mxu0 0.0
      %3117 = vmatprep.subr.mxu0 0.0
      %3118 = vmatpush1.msra.mxu0 0.0
      %3119 = vmatprep.subr.mxu0 0.0
      %3120 = vmatpush1.msra.mxu0 0.0
      %3121 = vmatprep.subr.mxu0 0.0
      %3122 = vmatpush1.msra.mxu0 0.0
      %3123 = vmatprep.subr.mxu0 0.0
      %3124 = vmatpush1.msra.mxu0 0.0
      %3125 = vmatprep.subr.mxu0 0.0
      %3126 = vmatpush1.msra.mxu0 0.0
      %3127 = vmatprep.subr.mxu0 0.0
      %3128 = vmatpush1.msra.mxu0 0.0
      %3129 = vmatprep.subr.mxu0 0.0
      %3130 = vmatpush1.msra.mxu0 0.0
      %3131 = vmatprep.subr.mxu0 0.0
      %3132 = vmatpush1.msra.mxu0 0.0
      %3133 = vmatprep.subr.mxu0 0.0
      %3134 = vmatpush1.msra.mxu0 0.0
      %3135 = vmatprep.subr.mxu0 0.0
      %3136 = vmatpush1.msra.mxu0 0.0
      %3137 = vmatprep.subr.mxu0 0.0
      %3138 = vmatpush1.msra.mxu0 0.0
      %3139 = vmatprep.mubr.f32.mxu0 0.0
      %3140 = vmatmul.mubr.f32.gmra.mrb[0].mxu0 %v3073
      %v3141 = vpop.f32.mrb[0].mxu0
      %v3142 = vadd.f32 0.0, %v3141
      %v3143 = vpop.f32.mrb[0].mxu0
      %3144 = vdwg.mxu0
      %v3145 = vmul.f32 %v3069, %v3069
      %v3146 = vsub.f32 %v3142, %v3145
      %v3147 = vadd.f32 %v3146, 1e-06
      %v3148 = vrsqrt.pop %v3147
      %v3149 = vlaneseq
      %v3150 = vshrl.u32 %v3149, 7
      %v3151 = vsub.s32 0, %v3150
      %v3152 = vrot.slane %v3069, %v3151
      %v3153 = vsub.f32 %v2793, %v3152
      %v3154 = vsub.f32 %v2794, %v3152
      %v3155 = vsub.f32 %v2795, %v3152
      %v3156 = vsub.f32 %v2796, %v3152
      %v3157 = vsub.f32 %v2797, %v3152
      %v3158 = vsub.f32 %v2798, %v3152
      %v3159 = vsub.f32 %v2799, %v3152
      %v3160 = vsub.f32 %v2800, %v3152
      %v3161 = vsub.f32 %v2801, %v3152
      %v3162 = vsub.f32 %v2802, %v3152
      %v3163 = vsub.f32 %v2803, %v3152
      %v3164 = vsub.f32 %v2804, %v3152
      %v3165 = vsub.f32 %v2805, %v3152
      %v3166 = vsub.f32 %v2806, %v3152
      %v3167 = vsub.f32 %v2807, %v3152
      %v3168 = vsub.f32 %v2808, %v3152
      %v3169 = vsub.f32 %v2809, %v3152
      %v3170 = vsub.f32 %v2810, %v3152
      %v3171 = vsub.f32 %v2811, %v3152
      %v3172 = vsub.f32 %v2812, %v3152
      %v3173 = vsub.f32 %v2813, %v3152
      %v3174 = vsub.f32 %v2814, %v3152
      %v3175 = vsub.f32 %v2815, %v3152
      %v3176 = vsub.f32 %v2816, %v3152
      %v3177 = vsub.f32 %v2817, %v3152
      %v3178 = vsub.f32 %v2818, %v3152
      %v3179 = vsub.f32 %v2819, %v3152
      %v3180 = vsub.f32 %v2820, %v3152
      %v3181 = vsub.f32 %v2821, %v3152
      %v3182 = vsub.f32 %v2822, %v3152
      %v3183 = vsub.f32 %v2823, %v3152
      %v3184 = vsub.f32 %v2824, %v3152
      %v3185 = vlaneseq
      %v3186 = vshrl.u32 %v3185, 7
      %v3187 = vsub.s32 0, %v3186
      %v3188 = vrot.slane %v3148, %v3187
      %v3189 = vmul.f32 %v3153, %v3188
      %v3190 = vmul.f32 %v3154, %v3188
      %v3191 = vmul.f32 %v3155, %v3188
      %v3192 = vmul.f32 %v3156, %v3188
      %v3193 = vmul.f32 %v3157, %v3188
      %v3194 = vmul.f32 %v3158, %v3188
      %v3195 = vmul.f32 %v3159, %v3188
      %v3196 = vmul.f32 %v3160, %v3188
      %v3197 = vmul.f32 %v3161, %v3188
      %v3198 = vmul.f32 %v3162, %v3188
      %v3199 = vmul.f32 %v3163, %v3188
      %v3200 = vmul.f32 %v3164, %v3188
      %v3201 = vmul.f32 %v3165, %v3188
      %v3202 = vmul.f32 %v3166, %v3188
      %v3203 = vmul.f32 %v3167, %v3188
      %v3204 = vmul.f32 %v3168, %v3188
      %v3205 = vmul.f32 %v3169, %v3188
      %v3206 = vmul.f32 %v3170, %v3188
      %v3207 = vmul.f32 %v3171, %v3188
      %v3208 = vmul.f32 %v3172, %v3188
      %v3209 = vmul.f32 %v3173, %v3188
      %v3210 = vmul.f32 %v3174, %v3188
      %v3211 = vmul.f32 %v3175, %v3188
      %v3212 = vmul.f32 %v3176, %v3188
      %v3213 = vmul.f32 %v3177, %v3188
      %v3214 = vmul.f32 %v3178, %v3188
      %v3215 = vmul.f32 %v3179, %v3188
      %v3216 = vmul.f32 %v3180, %v3188
      %v3217 = vmul.f32 %v3181, %v3188
      %v3218 = vmul.f32 %v3182, %v3188
      %v3219 = vmul.f32 %v3183, %v3188
      %v3220 = vmul.f32 %v3184, %v3188
      %v3221 = vld [vmem:[%s9] sm:$0x1]
      %v3223 = vlaneseq
      %v3224 = vshrl.u32 %v3223, 7
      %v3225 = vsub.s32 0, %v3224
      %v3226 = vrot.slane %v3221, %v3225
      %v3228 = vmul.f32 %v3189, %v3226
      %v3229 = vmul.f32 %v3190, %v3226
      %v3230 = vmul.f32 %v3191, %v3226
      %v3231 = vmul.f32 %v3192, %v3226
      %v3232 = vmul.f32 %v3193, %v3226
      %v3233 = vmul.f32 %v3194, %v3226
      %v3234 = vmul.f32 %v3195, %v3226
      %v3235 = vmul.f32 %v3196, %v3226
      %v3236 = vmul.f32 %v3197, %v3226
      %v3237 = vmul.f32 %v3198, %v3226
      %v3238 = vmul.f32 %v3199, %v3226
      %v3239 = vmul.f32 %v3200, %v3226
      %v3240 = vmul.f32 %v3201, %v3226
      %v3241 = vmul.f32 %v3202, %v3226
      %v3242 = vmul.f32 %v3203, %v3226
      %v3243 = vmul.f32 %v3204, %v3226
      %v3244 = vmul.f32 %v3205, %v3226
      %v3245 = vmul.f32 %v3206, %v3226
      %v3246 = vmul.f32 %v3207, %v3226
      %v3247 = vmul.f32 %v3208, %v3226
      %v3248 = vmul.f32 %v3209, %v3226
      %v3249 = vmul.f32 %v3210, %v3226
      %v3250 = vmul.f32 %v3211, %v3226
      %v3251 = vmul.f32 %v3212, %v3226
      %v3252 = vmul.f32 %v3213, %v3226
      %v3253 = vmul.f32 %v3214, %v3226
      %v3254 = vmul.f32 %v3215, %v3226
      %v3255 = vmul.f32 %v3216, %v3226
      %v3256 = vmul.f32 %v3217, %v3226
      %v3257 = vmul.f32 %v3218, %v3226
      %v3258 = vmul.f32 %v3219, %v3226
      %v3259 = vmul.f32 %v3220, %v3226
      %v3260 = vld [vmem:[%s10] sm:$0x1]
      %v3262 = vlaneseq
      %v3263 = vshrl.u32 %v3262, 7
      %v3264 = vsub.s32 0, %v3263
      %v3265 = vrot.slane %v3260, %v3264
      %v3267 = vadd.f32 %v3228, %v3265
      %v3268 = vadd.f32 %v3229, %v3265
      %v3269 = vadd.f32 %v3230, %v3265
      %v3270 = vadd.f32 %v3231, %v3265
      %v3271 = vadd.f32 %v3232, %v3265
      %v3272 = vadd.f32 %v3233, %v3265
      %v3273 = vadd.f32 %v3234, %v3265
      %v3274 = vadd.f32 %v3235, %v3265
      %v3275 = vadd.f32 %v3236, %v3265
      %v3276 = vadd.f32 %v3237, %v3265
      %v3277 = vadd.f32 %v3238, %v3265
      %v3278 = vadd.f32 %v3239, %v3265
      %v3279 = vadd.f32 %v3240, %v3265
      %v3280 = vadd.f32 %v3241, %v3265
      %v3281 = vadd.f32 %v3242, %v3265
      %v3282 = vadd.f32 %v3243, %v3265
      %v3283 = vadd.f32 %v3244, %v3265
      %v3284 = vadd.f32 %v3245, %v3265
      %v3285 = vadd.f32 %v3246, %v3265
      %v3286 = vadd.f32 %v3247, %v3265
      %v3287 = vadd.f32 %v3248, %v3265
      %v3288 = vadd.f32 %v3249, %v3265
      %v3289 = vadd.f32 %v3250, %v3265
      %v3290 = vadd.f32 %v3251, %v3265
      %v3291 = vadd.f32 %v3252, %v3265
      %v3292 = vadd.f32 %v3253, %v3265
      %v3293 = vadd.f32 %v3254, %v3265
      %v3294 = vadd.f32 %v3255, %v3265
      %v3295 = vadd.f32 %v3256, %v3265
      %v3296 = vadd.f32 %v3257, %v3265
      %v3297 = vadd.f32 %v3258, %v3265
      %v3298 = vadd.f32 %v3259, %v3265
      %v3299 = vsub.f32 0.0, %v3267
      %v3300 = vsub.f32 0.0, %v3268
      %v3301 = vsub.f32 0.0, %v3269
      %v3302 = vsub.f32 0.0, %v3270
      %v3303 = vsub.f32 0.0, %v3271
      %v3304 = vsub.f32 0.0, %v3272
      %v3305 = vsub.f32 0.0, %v3273
      %v3306 = vsub.f32 0.0, %v3274
      %v3307 = vsub.f32 0.0, %v3275
      %v3308 = vsub.f32 0.0, %v3276
      %v3309 = vsub.f32 0.0, %v3277
      %v3310 = vsub.f32 0.0, %v3278
      %v3311 = vsub.f32 0.0, %v3279
      %v3312 = vsub.f32 0.0, %v3280
      %v3313 = vsub.f32 0.0, %v3281
      %v3314 = vsub.f32 0.0, %v3282
      %v3315 = vsub.f32 0.0, %v3283
      %v3316 = vsub.f32 0.0, %v3284
      %v3317 = vsub.f32 0.0, %v3285
      %v3318 = vsub.f32 0.0, %v3286
      %v3319 = vsub.f32 0.0, %v3287
      %v3320 = vsub.f32 0.0, %v3288
      %v3321 = vsub.f32 0.0, %v3289
      %v3322 = vsub.f32 0.0, %v3290
      %v3323 = vsub.f32 0.0, %v3291
      %v3324 = vsub.f32 0.0, %v3292
      %v3325 = vsub.f32 0.0, %v3293
      %v3326 = vsub.f32 0.0, %v3294
      %v3327 = vsub.f32 0.0, %v3295
      %v3328 = vsub.f32 0.0, %v3296
      %v3329 = vsub.f32 0.0, %v3297
      %v3330 = vsub.f32 0.0, %v3298
      %v3331 = vmul.f32 %v3299, 1.442695
      %v3332 = vpow.pop %v3331
      %v3333 = vmul.f32 %v3300, 1.442695
      %v3334 = vpow.pop %v3333
      %v3335 = vmul.f32 %v3301, 1.442695
      %v3336 = vpow.pop %v3335
      %v3337 = vmul.f32 %v3302, 1.442695
      %v3338 = vpow.pop %v3337
      %v3339 = vmul.f32 %v3303, 1.442695
      %v3340 = vpow.pop %v3339
      %v3341 = vmul.f32 %v3304, 1.442695
      %v3342 = vpow.pop %v3341
      %v3343 = vmul.f32 %v3305, 1.442695
      %v3344 = vpow.pop %v3343
      %v3345 = vmul.f32 %v3306, 1.442695
      %v3346 = vpow.pop %v3345
      %v3347 = vmul.f32 %v3307, 1.442695
      %v3348 = vpow.pop %v3347
      %v3349 = vmul.f32 %v3308, 1.442695
      %v3350 = vpow.pop %v3349
      %v3351 = vmul.f32 %v3309, 1.442695
      %v3352 = vpow.pop %v3351
      %v3353 = vmul.f32 %v3310, 1.442695
      %v3354 = vpow.pop %v3353
      %v3355 = vmul.f32 %v3311, 1.442695
      %v3356 = vpow.pop %v3355
      %v3357 = vmul.f32 %v3312, 1.442695
      %v3358 = vpow.pop %v3357
      %v3359 = vmul.f32 %v3313, 1.442695
      %v3360 = vpow.pop %v3359
      %v3361 = vmul.f32 %v3314, 1.442695
      %v3362 = vpow.pop %v3361
      %v3363 = vmul.f32 %v3315, 1.442695
      %v3364 = vpow.pop %v3363
      %v3365 = vmul.f32 %v3316, 1.442695
      %v3366 = vpow.pop %v3365
      %v3367 = vmul.f32 %v3317, 1.442695
      %v3368 = vpow.pop %v3367
      %v3369 = vmul.f32 %v3318, 1.442695
      %v3370 = vpow.pop %v3369
      %v3371 = vmul.f32 %v3319, 1.442695
      %v3372 = vpow.pop %v3371
      %v3373 = vmul.f32 %v3320, 1.442695
      %v3374 = vpow.pop %v3373
      %v3375 = vmul.f32 %v3321, 1.442695
      %v3376 = vpow.pop %v3375
      %v3377 = vmul.f32 %v3322, 1.442695
      %v3378 = vpow.pop %v3377
      %v3379 = vmul.f32 %v3323, 1.442695
      %v3380 = vpow.pop %v3379
      %v3381 = vmul.f32 %v3324, 1.442695
      %v3382 = vpow.pop %v3381
      %v3383 = vmul.f32 %v3325, 1.442695
      %v3384 = vpow.pop %v3383
      %v3385 = vmul.f32 %v3326, 1.442695
      %v3386 = vpow.pop %v3385
      %v3387 = vmul.f32 %v3327, 1.442695
      %v3388 = vpow.pop %v3387
      %v3389 = vmul.f32 %v3328, 1.442695
      %v3390 = vpow.pop %v3389
      %v3391 = vmul.f32 %v3329, 1.442695
      %v3392 = vpow.pop %v3391
      %v3393 = vmul.f32 %v3330, 1.442695
      %v3394 = vpow.pop %v3393
      %v3395 = vadd.f32 %v3332, 1.0
      %v3396 = vadd.f32 %v3334, 1.0
      %v3397 = vadd.f32 %v3336, 1.0
      %v3398 = vadd.f32 %v3338, 1.0
      %v3399 = vadd.f32 %v3340, 1.0
      %v3400 = vadd.f32 %v3342, 1.0
      %v3401 = vadd.f32 %v3344, 1.0
      %v3402 = vadd.f32 %v3346, 1.0
      %v3403 = vadd.f32 %v3348, 1.0
      %v3404 = vadd.f32 %v3350, 1.0
      %v3405 = vadd.f32 %v3352, 1.0
      %v3406 = vadd.f32 %v3354, 1.0
      %v3407 = vadd.f32 %v3356, 1.0
      %v3408 = vadd.f32 %v3358, 1.0
      %v3409 = vadd.f32 %v3360, 1.0
      %v3410 = vadd.f32 %v3362, 1.0
      %v3411 = vadd.f32 %v3364, 1.0
      %v3412 = vadd.f32 %v3366, 1.0
      %v3413 = vadd.f32 %v3368, 1.0
      %v3414 = vadd.f32 %v3370, 1.0
      %v3415 = vadd.f32 %v3372, 1.0
      %v3416 = vadd.f32 %v3374, 1.0
      %v3417 = vadd.f32 %v3376, 1.0
      %v3418 = vadd.f32 %v3378, 1.0
      %v3419 = vadd.f32 %v3380, 1.0
      %v3420 = vadd.f32 %v3382, 1.0
      %v3421 = vadd.f32 %v3384, 1.0
      %v3422 = vadd.f32 %v3386, 1.0
      %v3423 = vadd.f32 %v3388, 1.0
      %v3424 = vadd.f32 %v3390, 1.0
      %v3425 = vadd.f32 %v3392, 1.0
      %v3426 = vadd.f32 %v3394, 1.0
      %v3427 = vrcp.pop %v3395
      %v3428 = vmul.f32 1.0, %v3427
      %v3429 = vrcp.pop %v3396
      %v3430 = vmul.f32 1.0, %v3429
      %v3431 = vrcp.pop %v3397
      %v3432 = vmul.f32 1.0, %v3431
      %v3433 = vrcp.pop %v3398
      %v3434 = vmul.f32 1.0, %v3433
      %v3435 = vrcp.pop %v3399
      %v3436 = vmul.f32 1.0, %v3435
      %v3437 = vrcp.pop %v3400
      %v3438 = vmul.f32 1.0, %v3437
      %v3439 = vrcp.pop %v3401
      %v3440 = vmul.f32 1.0, %v3439
      %v3441 = vrcp.pop %v3402
      %v3442 = vmul.f32 1.0, %v3441
      %v3443 = vrcp.pop %v3403
      %v3444 = vmul.f32 1.0, %v3443
      %v3445 = vrcp.pop %v3404
      %v3446 = vmul.f32 1.0, %v3445
      %v3447 = vrcp.pop %v3405
      %v3448 = vmul.f32 1.0, %v3447
      %v3449 = vrcp.pop %v3406
      %v3450 = vmul.f32 1.0, %v3449
      %v3451 = vrcp.pop %v3407
      %v3452 = vmul.f32 1.0, %v3451
      %v3453 = vrcp.pop %v3408
      %v3454 = vmul.f32 1.0, %v3453
      %v3455 = vrcp.pop %v3409
      %v3456 = vmul.f32 1.0, %v3455
      %v3457 = vrcp.pop %v3410
      %v3458 = vmul.f32 1.0, %v3457
      %v3459 = vrcp.pop %v3411
      %v3460 = vmul.f32 1.0, %v3459
      %v3461 = vrcp.pop %v3412
      %v3462 = vmul.f32 1.0, %v3461
      %v3463 = vrcp.pop %v3413
      %v3464 = vmul.f32 1.0, %v3463
      %v3465 = vrcp.pop %v3414
      %v3466 = vmul.f32 1.0, %v3465
      %v3467 = vrcp.pop %v3415
      %v3468 = vmul.f32 1.0, %v3467
      %v3469 = vrcp.pop %v3416
      %v3470 = vmul.f32 1.0, %v3469
      %v3471 = vrcp.pop %v3417
      %v3472 = vmul.f32 1.0, %v3471
      %v3473 = vrcp.pop %v3418
      %v3474 = vmul.f32 1.0, %v3473
      %v3475 = vrcp.pop %v3419
      %v3476 = vmul.f32 1.0, %v3475
      %v3477 = vrcp.pop %v3420
      %v3478 = vmul.f32 1.0, %v3477
      %v3479 = vrcp.pop %v3421
      %v3480 = vmul.f32 1.0, %v3479
      %v3481 = vrcp.pop %v3422
      %v3482 = vmul.f32 1.0, %v3481
      %v3483 = vrcp.pop %v3423
      %v3484 = vmul.f32 1.0, %v3483
      %v3485 = vrcp.pop %v3424
      %v3486 = vmul.f32 1.0, %v3485
      %v3487 = vrcp.pop %v3425
      %v3488 = vmul.f32 1.0, %v3487
      %v3489 = vrcp.pop %v3426
      %v3490 = vmul.f32 1.0, %v3489
      %v3491 = vmul.f32 %v3267, %v3428
      %v3492 = vmul.f32 %v3268, %v3430
      %v3493 = vmul.f32 %v3269, %v3432
      %v3494 = vmul.f32 %v3270, %v3434
      %v3495 = vmul.f32 %v3271, %v3436
      %v3496 = vmul.f32 %v3272, %v3438
      %v3497 = vmul.f32 %v3273, %v3440
      %v3498 = vmul.f32 %v3274, %v3442
      %v3499 = vmul.f32 %v3275, %v3444
      %v3500 = vmul.f32 %v3276, %v3446
      %v3501 = vmul.f32 %v3277, %v3448
      %v3502 = vmul.f32 %v3278, %v3450
      %v3503 = vmul.f32 %v3279, %v3452
      %v3504 = vmul.f32 %v3280, %v3454
      %v3505 = vmul.f32 %v3281, %v3456
      %v3506 = vmul.f32 %v3282, %v3458
      %v3507 = vmul.f32 %v3283, %v3460
      %v3508 = vmul.f32 %v3284, %v3462
      %v3509 = vmul.f32 %v3285, %v3464
      %v3510 = vmul.f32 %v3286, %v3466
      %v3511 = vmul.f32 %v3287, %v3468
      %v3512 = vmul.f32 %v3288, %v3470
      %v3513 = vmul.f32 %v3289, %v3472
      %v3514 = vmul.f32 %v3290, %v3474
      %v3515 = vmul.f32 %v3291, %v3476
      %v3516 = vmul.f32 %v3292, %v3478
      %v3517 = vmul.f32 %v3293, %v3480
      %v3518 = vmul.f32 %v3294, %v3482
      %v3519 = vmul.f32 %v3295, %v3484
      %v3520 = vmul.f32 %v3296, %v3486
      %v3521 = vmul.f32 %v3297, %v3488
      %v3522 = vmul.f32 %v3298, %v3490
      %v3555 = vrot.slane %v3491, 7
      %v3556 = vrot.slane %v3492, 7
      %v3557 = vsel %vm1246, %v3555, %v3556
      %v3558 = vrot.slane %v3493, 7
      %v3559 = vrot.slane %v3494, 7
      %v3560 = vsel %vm1246, %v3558, %v3559
      %v3561 = vrot.slane %v3495, 7
      %v3562 = vrot.slane %v3496, 7
      %v3563 = vsel %vm1246, %v3561, %v3562
      %v3564 = vrot.slane %v3497, 7
      %v3565 = vrot.slane %v3498, 7
      %v3566 = vsel %vm1246, %v3564, %v3565
      %v3567 = vrot.slane %v3499, 7
      %v3568 = vrot.slane %v3500, 7
      %v3569 = vsel %vm1246, %v3567, %v3568
      %v3570 = vrot.slane %v3501, 7
      %v3571 = vrot.slane %v3502, 7
      %v3572 = vsel %vm1246, %v3570, %v3571
      %v3573 = vrot.slane %v3503, 7
      %v3574 = vrot.slane %v3504, 7
      %v3575 = vsel %vm1246, %v3573, %v3574
      %v3576 = vrot.slane %v3505, 7
      %v3577 = vrot.slane %v3506, 7
      %v3578 = vsel %vm1246, %v3576, %v3577
      %v3579 = vrot.slane %v3507, 7
      %v3580 = vrot.slane %v3508, 7
      %v3581 = vsel %vm1246, %v3579, %v3580
      %v3582 = vrot.slane %v3509, 7
      %v3583 = vrot.slane %v3510, 7
      %v3584 = vsel %vm1246, %v3582, %v3583
      %v3585 = vrot.slane %v3511, 7
      %v3586 = vrot.slane %v3512, 7
      %v3587 = vsel %vm1246, %v3585, %v3586
      %v3588 = vrot.slane %v3513, 7
      %v3589 = vrot.slane %v3514, 7
      %v3590 = vsel %vm1246, %v3588, %v3589
      %v3591 = vrot.slane %v3515, 7
      %v3592 = vrot.slane %v3516, 7
      %v3593 = vsel %vm1246, %v3591, %v3592
      %v3594 = vrot.slane %v3517, 7
      %v3595 = vrot.slane %v3518, 7
      %v3596 = vsel %vm1246, %v3594, %v3595
      %v3597 = vrot.slane %v3519, 7
      %v3598 = vrot.slane %v3520, 7
      %v3599 = vsel %vm1246, %v3597, %v3598
      %v3600 = vrot.slane %v3521, 7
      %v3601 = vrot.slane %v3522, 7
      %v3602 = vsel %vm1246, %v3600, %v3601
      %v3651 = vsel %vm1246, 0.0, %v3555
      %v3652 = vsel %vm1246, 0.0, %v3558
      %v3653 = vsel %vm1246, 0.0, %v3561
      %v3654 = vsel %vm1246, 0.0, %v3564
      %v3655 = vsel %vm1246, 0.0, %v3567
      %v3656 = vsel %vm1246, 0.0, %v3570
      %v3657 = vsel %vm1246, 0.0, %v3573
      %v3658 = vsel %vm1246, 0.0, %v3576
      %v3659 = vsel %vm1246, 0.0, %v3579
      %v3660 = vsel %vm1246, 0.0, %v3582
      %v3661 = vsel %vm1246, 0.0, %v3585
      %v3662 = vsel %vm1246, 0.0, %v3588
      %v3663 = vsel %vm1246, 0.0, %v3591
      %v3664 = vsel %vm1246, 0.0, %v3594
      %v3665 = vsel %vm1246, 0.0, %v3597
      %v3666 = vsel %vm1246, 0.0, %v3600
      %v3667 = vsel %vm1246, %v3556, 0.0
      %v3668 = vsel %vm1246, %v3559, 0.0
      %v3669 = vsel %vm1246, %v3562, 0.0
      %v3670 = vsel %vm1246, %v3565, 0.0
      %v3671 = vsel %vm1246, %v3568, 0.0
      %v3672 = vsel %vm1246, %v3571, 0.0
      %v3673 = vsel %vm1246, %v3574, 0.0
      %v3674 = vsel %vm1246, %v3577, 0.0
      %v3675 = vsel %vm1246, %v3580, 0.0
      %v3676 = vsel %vm1246, %v3583, 0.0
      %v3677 = vsel %vm1246, %v3586, 0.0
      %v3678 = vsel %vm1246, %v3589, 0.0
      %v3679 = vsel %vm1246, %v3592, 0.0
      %v3680 = vsel %vm1246, %v3595, 0.0
      %v3681 = vsel %vm1246, %v3598, 0.0
      %v3682 = vsel %vm1246, %v3601, 0.0
      %v3713 = vrot.slane %v3651, 1
      %v3714 = vrot.slane %v3557, 1
      %v3715 = vsel %vm1406, %v3713, %v3714
      %v3716 = vrot.slane %v3667, 1
      %v3717 = vsel %vm1406, %v3714, %v3716
      %v3718 = vrot.slane %v3652, 1
      %v3719 = vrot.slane %v3560, 1
      %v3720 = vsel %vm1406, %v3718, %v3719
      %v3721 = vrot.slane %v3668, 1
      %v3722 = vsel %vm1406, %v3719, %v3721
      %v3723 = vrot.slane %v3653, 1
      %v3724 = vrot.slane %v3563, 1
      %v3725 = vsel %vm1406, %v3723, %v3724
      %v3726 = vrot.slane %v3669, 1
      %v3727 = vsel %vm1406, %v3724, %v3726
      %v3728 = vrot.slane %v3654, 1
      %v3729 = vrot.slane %v3566, 1
      %v3730 = vsel %vm1406, %v3728, %v3729
      %v3731 = vrot.slane %v3670, 1
      %v3732 = vsel %vm1406, %v3729, %v3731
      %v3733 = vrot.slane %v3655, 1
      %v3734 = vrot.slane %v3569, 1
      %v3735 = vsel %vm1406, %v3733, %v3734
      %v3736 = vrot.slane %v3671, 1
      %v3737 = vsel %vm1406, %v3734, %v3736
      %v3738 = vrot.slane %v3656, 1
      %v3739 = vrot.slane %v3572, 1
      %v3740 = vsel %vm1406, %v3738, %v3739
      %v3741 = vrot.slane %v3672, 1
      %v3742 = vsel %vm1406, %v3739, %v3741
      %v3743 = vrot.slane %v3657, 1
      %v3744 = vrot.slane %v3575, 1
      %v3745 = vsel %vm1406, %v3743, %v3744
      %v3746 = vrot.slane %v3673, 1
      %v3747 = vsel %vm1406, %v3744, %v3746
      %v3748 = vrot.slane %v3658, 1
      %v3749 = vrot.slane %v3578, 1
      %v3750 = vsel %vm1406, %v3748, %v3749
      %v3751 = vrot.slane %v3674, 1
      %v3752 = vsel %vm1406, %v3749, %v3751
      %v3753 = vrot.slane %v3659, 1
      %v3754 = vrot.slane %v3581, 1
      %v3755 = vsel %vm1406, %v3753, %v3754
      %v3756 = vrot.slane %v3675, 1
      %v3757 = vsel %vm1406, %v3754, %v3756
      %v3758 = vrot.slane %v3660, 1
      %v3759 = vrot.slane %v3584, 1
      %v3760 = vsel %vm1406, %v3758, %v3759
      %v3761 = vrot.slane %v3676, 1
      %v3762 = vsel %vm1406, %v3759, %v3761
      %v3763 = vrot.slane %v3661, 1
      %v3764 = vrot.slane %v3587, 1
      %v3765 = vsel %vm1406, %v3763, %v3764
      %v3766 = vrot.slane %v3677, 1
      %v3767 = vsel %vm1406, %v3764, %v3766
      %v3768 = vrot.slane %v3662, 1
      %v3769 = vrot.slane %v3590, 1
      %v3770 = vsel %vm1406, %v3768, %v3769
      %v3771 = vrot.slane %v3678, 1
      %v3772 = vsel %vm1406, %v3769, %v3771
      %v3773 = vrot.slane %v3663, 1
      %v3774 = vrot.slane %v3593, 1
      %v3775 = vsel %vm1406, %v3773, %v3774
      %v3776 = vrot.slane %v3679, 1
      %v3777 = vsel %vm1406, %v3774, %v3776
      %v3778 = vrot.slane %v3664, 1
      %v3779 = vrot.slane %v3596, 1
      %v3780 = vsel %vm1406, %v3778, %v3779
      %v3781 = vrot.slane %v3680, 1
      %v3782 = vsel %vm1406, %v3779, %v3781
      %v3783 = vrot.slane %v3665, 1
      %v3784 = vrot.slane %v3599, 1
      %v3785 = vsel %vm1406, %v3783, %v3784
      %v3786 = vrot.slane %v3681, 1
      %v3787 = vsel %vm1406, %v3784, %v3786
      %3788 = vrot.lane.b32.xlu0 %v3715, 4
      %v3789 = vpop.permute.xlu0 %3788
      %3790 = vrot.lane.b32.xlu0 %v3717, 4
      %v3791 = vpop.permute.xlu0 %3790
      %3792 = vrot.lane.b32.xlu0 %v3720, 4
      %v3793 = vpop.permute.xlu0 %3792
      %3794 = vrot.lane.b32.xlu0 %v3722, 4
      %v3795 = vpop.permute.xlu0 %3794
      %3796 = vrot.lane.b32.xlu0 %v3725, 4
      %v3797 = vpop.permute.xlu0 %3796
      %3798 = vrot.lane.b32.xlu0 %v3727, 4
      %v3799 = vpop.permute.xlu0 %3798
      %3800 = vrot.lane.b32.xlu0 %v3730, 4
      %v3801 = vpop.permute.xlu0 %3800
      %3802 = vrot.lane.b32.xlu0 %v3732, 4
      %v3803 = vpop.permute.xlu0 %3802
      %3804 = vrot.lane.b32.xlu0 %v3735, 4
      %v3805 = vpop.permute.xlu0 %3804
      %3806 = vrot.lane.b32.xlu0 %v3737, 4
      %v3807 = vpop.permute.xlu0 %3806
      %3808 = vrot.lane.b32.xlu0 %v3740, 4
      %v3809 = vpop.permute.xlu0 %3808
      %3810 = vrot.lane.b32.xlu0 %v3742, 4
      %v3811 = vpop.permute.xlu0 %3810
      %3812 = vrot.lane.b32.xlu0 %v3745, 4
      %v3813 = vpop.permute.xlu0 %3812
      %3814 = vrot.lane.b32.xlu0 %v3747, 4
      %v3815 = vpop.permute.xlu0 %3814
      %3816 = vrot.lane.b32.xlu0 %v3750, 4
      %v3817 = vpop.permute.xlu0 %3816
      %3818 = vrot.lane.b32.xlu0 %v3752, 4
      %v3819 = vpop.permute.xlu0 %3818
      %3820 = vrot.lane.b32.xlu0 %v3755, 4
      %v3821 = vpop.permute.xlu0 %3820
      %3822 = vrot.lane.b32.xlu0 %v3757, 4
      %v3823 = vpop.permute.xlu0 %3822
      %3824 = vrot.lane.b32.xlu0 %v3760, 4
      %v3825 = vpop.permute.xlu0 %3824
      %3826 = vrot.lane.b32.xlu0 %v3762, 4
      %v3827 = vpop.permute.xlu0 %3826
      %3828 = vrot.lane.b32.xlu0 %v3765, 4
      %v3829 = vpop.permute.xlu0 %3828
      %3830 = vrot.lane.b32.xlu0 %v3767, 4
      %v3831 = vpop.permute.xlu0 %3830
      %3832 = vrot.lane.b32.xlu0 %v3770, 4
      %v3833 = vpop.permute.xlu0 %3832
      %3834 = vrot.lane.b32.xlu0 %v3772, 4
      %v3835 = vpop.permute.xlu0 %3834
      %3836 = vrot.lane.b32.xlu0 %v3775, 4
      %v3837 = vpop.permute.xlu0 %3836
      %3838 = vrot.lane.b32.xlu0 %v3777, 4
      %v3839 = vpop.permute.xlu0 %3838
      %3840 = vrot.lane.b32.xlu0 %v3780, 4
      %v3841 = vpop.permute.xlu0 %3840
      %3842 = vrot.lane.b32.xlu0 %v3782, 4
      %v3843 = vpop.permute.xlu0 %3842
      %3844 = vrot.lane.b32.xlu0 %v3785, 4
      %v3845 = vpop.permute.xlu0 %3844
      %3846 = vrot.lane.b32.xlu0 %v3787, 4
      %v3847 = vpop.permute.xlu0 %3846
      %v3878 = vrot.slane %v3651, 2
      %v3879 = vrot.slane %v3557, 2
      %v3880 = vsel %vm1577, %v3878, %v3879
      %v3881 = vrot.slane %v3667, 2
      %v3882 = vsel %vm1577, %v3879, %v3881
      %v3883 = vrot.slane %v3652, 2
      %v3884 = vrot.slane %v3560, 2
      %v3885 = vsel %vm1577, %v3883, %v3884
      %v3886 = vrot.slane %v3668, 2
      %v3887 = vsel %vm1577, %v3884, %v3886
      %v3888 = vrot.slane %v3653, 2
      %v3889 = vrot.slane %v3563, 2
      %v3890 = vsel %vm1577, %v3888, %v3889
      %v3891 = vrot.slane %v3669, 2
      %v3892 = vsel %vm1577, %v3889, %v3891
      %v3893 = vrot.slane %v3654, 2
      %v3894 = vrot.slane %v3566, 2
      %v3895 = vsel %vm1577, %v3893, %v3894
      %v3896 = vrot.slane %v3670, 2
      %v3897 = vsel %vm1577, %v3894, %v3896
      %v3898 = vrot.slane %v3655, 2
      %v3899 = vrot.slane %v3569, 2
      %v3900 = vsel %vm1577, %v3898, %v3899
      %v3901 = vrot.slane %v3671, 2
      %v3902 = vsel %vm1577, %v3899, %v3901
      %v3903 = vrot.slane %v3656, 2
      %v3904 = vrot.slane %v3572, 2
      %v3905 = vsel %vm1577, %v3903, %v3904
      %v3906 = vrot.slane %v3672, 2
      %v3907 = vsel %vm1577, %v3904, %v3906
      %v3908 = vrot.slane %v3657, 2
      %v3909 = vrot.slane %v3575, 2
      %v3910 = vsel %vm1577, %v3908, %v3909
      %v3911 = vrot.slane %v3673, 2
      %v3912 = vsel %vm1577, %v3909, %v3911
      %v3913 = vrot.slane %v3658, 2
      %v3914 = vrot.slane %v3578, 2
      %v3915 = vsel %vm1577, %v3913, %v3914
      %v3916 = vrot.slane %v3674, 2
      %v3917 = vsel %vm1577, %v3914, %v3916
      %v3918 = vrot.slane %v3659, 2
      %v3919 = vrot.slane %v3581, 2
      %v3920 = vsel %vm1577, %v3918, %v3919
      %v3921 = vrot.slane %v3675, 2
      %v3922 = vsel %vm1577, %v3919, %v3921
      %v3923 = vrot.slane %v3660, 2
      %v3924 = vrot.slane %v3584, 2
      %v3925 = vsel %vm1577, %v3923, %v3924
      %v3926 = vrot.slane %v3676, 2
      %v3927 = vsel %vm1577, %v3924, %v3926
      %v3928 = vrot.slane %v3661, 2
      %v3929 = vrot.slane %v3587, 2
      %v3930 = vsel %vm1577, %v3928, %v3929
      %v3931 = vrot.slane %v3677, 2
      %v3932 = vsel %vm1577, %v3929, %v3931
      %v3933 = vrot.slane %v3662, 2
      %v3934 = vrot.slane %v3590, 2
      %v3935 = vsel %vm1577, %v3933, %v3934
      %v3936 = vrot.slane %v3678, 2
      %v3937 = vsel %vm1577, %v3934, %v3936
      %v3938 = vrot.slane %v3663, 2
      %v3939 = vrot.slane %v3593, 2
      %v3940 = vsel %vm1577, %v3938, %v3939
      %v3941 = vrot.slane %v3679, 2
      %v3942 = vsel %vm1577, %v3939, %v3941
      %v3943 = vrot.slane %v3664, 2
      %v3944 = vrot.slane %v3596, 2
      %v3945 = vsel %vm1577, %v3943, %v3944
      %v3946 = vrot.slane %v3680, 2
      %v3947 = vsel %vm1577, %v3944, %v3946
      %v3948 = vrot.slane %v3665, 2
      %v3949 = vrot.slane %v3599, 2
      %v3950 = vsel %vm1577, %v3948, %v3949
      %v3951 = vrot.slane %v3681, 2
      %v3952 = vsel %vm1577, %v3949, %v3951
      %3953 = vrot.lane.b32.xlu0 %v3880, 8
      %v3954 = vpop.permute.xlu0 %3953
      %3955 = vrot.lane.b32.xlu0 %v3882, 8
      %v3956 = vpop.permute.xlu0 %3955
      %3957 = vrot.lane.b32.xlu0 %v3885, 8
      %v3958 = vpop.permute.xlu0 %3957
      %3959 = vrot.lane.b32.xlu0 %v3887, 8
      %v3960 = vpop.permute.xlu0 %3959
      %3961 = vrot.lane.b32.xlu0 %v3890, 8
      %v3962 = vpop.permute.xlu0 %3961
      %3963 = vrot.lane.b32.xlu0 %v3892, 8
      %v3964 = vpop.permute.xlu0 %3963
      %3965 = vrot.lane.b32.xlu0 %v3895, 8
      %v3966 = vpop.permute.xlu0 %3965
      %3967 = vrot.lane.b32.xlu0 %v3897, 8
      %v3968 = vpop.permute.xlu0 %3967
      %3969 = vrot.lane.b32.xlu0 %v3900, 8
      %v3970 = vpop.permute.xlu0 %3969
      %3971 = vrot.lane.b32.xlu0 %v3902, 8
      %v3972 = vpop.permute.xlu0 %3971
      %3973 = vrot.lane.b32.xlu0 %v3905, 8
      %v3974 = vpop.permute.xlu0 %3973
      %3975 = vrot.lane.b32.xlu0 %v3907, 8
      %v3976 = vpop.permute.xlu0 %3975
      %3977 = vrot.lane.b32.xlu0 %v3910, 8
      %v3978 = vpop.permute.xlu0 %3977
      %3979 = vrot.lane.b32.xlu0 %v3912, 8
      %v3980 = vpop.permute.xlu0 %3979
      %3981 = vrot.lane.b32.xlu0 %v3915, 8
      %v3982 = vpop.permute.xlu0 %3981
      %3983 = vrot.lane.b32.xlu0 %v3917, 8
      %v3984 = vpop.permute.xlu0 %3983
      %3985 = vrot.lane.b32.xlu0 %v3920, 8
      %v3986 = vpop.permute.xlu0 %3985
      %3987 = vrot.lane.b32.xlu0 %v3922, 8
      %v3988 = vpop.permute.xlu0 %3987
      %3989 = vrot.lane.b32.xlu0 %v3925, 8
      %v3990 = vpop.permute.xlu0 %3989
      %3991 = vrot.lane.b32.xlu0 %v3927, 8
      %v3992 = vpop.permute.xlu0 %3991
      %3993 = vrot.lane.b32.xlu0 %v3930, 8
      %v3994 = vpop.permute.xlu0 %3993
      %3995 = vrot.lane.b32.xlu0 %v3932, 8
      %v3996 = vpop.permute.xlu0 %3995
      %3997 = vrot.lane.b32.xlu0 %v3935, 8
      %v3998 = vpop.permute.xlu0 %3997
      %3999 = vrot.lane.b32.xlu0 %v3937, 8
      %v4000 = vpop.permute.xlu0 %3999
      %4001 = vrot.lane.b32.xlu0 %v3940, 8
      %v4002 = vpop.permute.xlu0 %4001
      %4003 = vrot.lane.b32.xlu0 %v3942, 8
      %v4004 = vpop.permute.xlu0 %4003
      %4005 = vrot.lane.b32.xlu0 %v3945, 8
      %v4006 = vpop.permute.xlu0 %4005
      %4007 = vrot.lane.b32.xlu0 %v3947, 8
      %v4008 = vpop.permute.xlu0 %4007
      %4009 = vrot.lane.b32.xlu0 %v3950, 8
      %v4010 = vpop.permute.xlu0 %4009
      %4011 = vrot.lane.b32.xlu0 %v3952, 8
      %v4012 = vpop.permute.xlu0 %4011
      %v4043 = vsel %vm514, %v3651, %v3789
      %v4044 = vsel %vm514, %v3557, %v3791
      %v4045 = vsel %vm514, %v3652, %v3793
      %v4046 = vsel %vm514, %v3560, %v3795
      %v4047 = vsel %vm514, %v3653, %v3797
      %v4048 = vsel %vm514, %v3563, %v3799
      %v4049 = vsel %vm514, %v3654, %v3801
      %v4050 = vsel %vm514, %v3566, %v3803
      %v4051 = vsel %vm514, %v3655, %v3805
      %v4052 = vsel %vm514, %v3569, %v3807
      %v4053 = vsel %vm514, %v3656, %v3809
      %v4054 = vsel %vm514, %v3572, %v3811
      %v4055 = vsel %vm514, %v3657, %v3813
      %v4056 = vsel %vm514, %v3575, %v3815
      %v4057 = vsel %vm514, %v3658, %v3817
      %v4058 = vsel %vm514, %v3578, %v3819
      %v4059 = vsel %vm514, %v3659, %v3821
      %v4060 = vsel %vm514, %v3581, %v3823
      %v4061 = vsel %vm514, %v3660, %v3825
      %v4062 = vsel %vm514, %v3584, %v3827
      %v4063 = vsel %vm514, %v3661, %v3829
      %v4064 = vsel %vm514, %v3587, %v3831
      %v4065 = vsel %vm514, %v3662, %v3833
      %v4066 = vsel %vm514, %v3590, %v3835
      %v4067 = vsel %vm514, %v3663, %v3837
      %v4068 = vsel %vm514, %v3593, %v3839
      %v4069 = vsel %vm514, %v3664, %v3841
      %v4070 = vsel %vm514, %v3596, %v3843
      %v4071 = vsel %vm514, %v3665, %v3845
      %v4072 = vsel %vm514, %v3599, %v3847
      %v4073 = vsel %vm1779, %v4043, %v3954
      %v4074 = vsel %vm1779, %v4044, %v3956
      %v4075 = vsel %vm1779, %v4045, %v3958
      %v4076 = vsel %vm1779, %v4046, %v3960
      %v4077 = vsel %vm1779, %v4047, %v3962
      %v4078 = vsel %vm1779, %v4048, %v3964
      %v4079 = vsel %vm1779, %v4049, %v3966
      %v4080 = vsel %vm1779, %v4050, %v3968
      %v4081 = vsel %vm1779, %v4051, %v3970
      %v4082 = vsel %vm1779, %v4052, %v3972
      %v4083 = vsel %vm1779, %v4053, %v3974
      %v4084 = vsel %vm1779, %v4054, %v3976
      %v4085 = vsel %vm1779, %v4055, %v3978
      %v4086 = vsel %vm1779, %v4056, %v3980
      %v4087 = vsel %vm1779, %v4057, %v3982
      %v4088 = vsel %vm1779, %v4058, %v3984
      %v4089 = vsel %vm1779, %v4059, %v3986
      %v4090 = vsel %vm1779, %v4060, %v3988
      %v4091 = vsel %vm1779, %v4061, %v3990
      %v4092 = vsel %vm1779, %v4062, %v3992
      %v4093 = vsel %vm1779, %v4063, %v3994
      %v4094 = vsel %vm1779, %v4064, %v3996
      %v4095 = vsel %vm1779, %v4065, %v3998
      %v4096 = vsel %vm1779, %v4066, %v4000
      %v4097 = vsel %vm1779, %v4067, %v4002
      %v4098 = vsel %vm1779, %v4068, %v4004
      %v4099 = vsel %vm1779, %v4069, %v4006
      %v4100 = vsel %vm1779, %v4070, %v4008
      %v4101 = vsel %vm1779, %v4071, %v4010
      %v4102 = vsel %vm1779, %v4072, %v4012
      %v4103 = vld [vmem:[%s12] sm:$0xff]
      %v4104 = vld [vmem:[%s12 + $0x8] sm:$0xf]
      %v4107 = vrot.slane %v3666, 1
      %v4108 = vrot.slane %v3602, 1
      %v4109 = vsel %vm1406, %v4107, %v4108
      %v4110 = vrot.slane %v3682, 1
      %v4111 = vsel %vm1406, %v4108, %v4110
      %4112 = vrot.lane.b32.xlu0 %v4109, 4
      %v4113 = vpop.permute.xlu0 %4112
      %4114 = vrot.lane.b32.xlu0 %v4111, 4
      %v4115 = vpop.permute.xlu0 %4114
      %v4118 = vrot.slane %v3666, 2
      %v4119 = vrot.slane %v3602, 2
      %v4120 = vsel %vm1577, %v4118, %v4119
      %v4121 = vrot.slane %v3682, 2
      %v4122 = vsel %vm1577, %v4119, %v4121
      %4123 = vrot.lane.b32.xlu0 %v4120, 8
      %v4124 = vpop.permute.xlu0 %4123
      %4125 = vrot.lane.b32.xlu0 %v4122, 8
      %v4126 = vpop.permute.xlu0 %4125
      %v4129 = vsel %vm514, %v3666, %v4113
      %v4130 = vsel %vm514, %v3602, %v4115
      %v4131 = vsel %vm1779, %v4129, %v4124
      %v4132 = vsel %vm1779, %v4130, %v4126
      %s4133 = scalar_lea.vmem %s12, 16
      %v4134 = vld [vmem:[%s4133] sm:$0xff]
      %v4135 = vld [vmem:[%s4133 + $0x8] sm:$0xf]
      %v4137 = vsel %vm1844, %v4073, 0
      %v4140 = vsel %vm1844, %v4074, 0
      %v4143 = vsel %vm1844, %v4075, 0
      %v4146 = vsel %vm1844, %v4076, 0
      %v4149 = vsel %vm1844, %v4077, 0
      %v4152 = vsel %vm1844, %v4078, 0
      %v4155 = vsel %vm1844, %v4079, 0
      %v4158 = vsel %vm1844, %v4080, 0
      %v4161 = vsel %vm1844, %v4081, 0
      %v4164 = vsel %vm1844, %v4082, 0
      %v4167 = vsel %vm1844, %v4083, 0
      %v4170 = vsel %vm1844, %v4084, 0
      %v4173 = vsel %vm1844, %v4085, 0
      %v4176 = vsel %vm1844, %v4086, 0
      %v4179 = vsel %vm1844, %v4087, 0
      %v4182 = vsel %vm1844, %v4088, 0
      %v4185 = vsel %vm1844, %v4089, 0
      %v4188 = vsel %vm1844, %v4090, 0
      %v4191 = vsel %vm1844, %v4091, 0
      %v4194 = vsel %vm1844, %v4092, 0
      %v4197 = vsel %vm1844, %v4093, 0
      %v4200 = vsel %vm1844, %v4094, 0
      %v4203 = vsel %vm1844, %v4095, 0
      %v4206 = vsel %vm1844, %v4096, 0
      %v4209 = vsel %vm1844, %v4097, 0
      %v4212 = vsel %vm1844, %v4098, 0
      %v4215 = vsel %vm1844, %v4099, 0
      %v4218 = vsel %vm1844, %v4100, 0
      %v4221 = vsel %vm1844, %v4101, 0
      %v4224 = vsel %vm1844, %v4102, 0
      %v4227 = vsel %vm1844, %v4131, 0
      %v4230 = vsel %vm1844, %v4132, 0
      %v4233 = vsel %vm689, %v4135, 0
      %4235 = vmatprep.subr.mxu0 0.0
      %4236 = vmatpush1.msra.mxu0 %v4134
      %4237 = vmatprep.subr.mxu0 0.0
      %4238 = vmatpush1.msra.mxu0 %v4233
      %4239 = vmatprep.subr.mxu0 0.0
      %4240 = vmatpush1.msra.mxu0 0.0
      %4241 = vmatprep.subr.mxu0 0.0
      %4242 = vmatpush1.msra.mxu0 0.0
      %4243 = vmatprep.subr.mxu0 0.0
      %4244 = vmatpush1.msra.mxu0 0.0
      %4245 = vmatprep.subr.mxu0 0.0
      %4246 = vmatpush1.msra.mxu0 0.0
      %4247 = vmatprep.subr.mxu0 0.0
      %4248 = vmatpush1.msra.mxu0 0.0
      %4249 = vmatprep.subr.mxu0 0.0
      %4250 = vmatpush1.msra.mxu0 0.0
      %4251 = vmatprep.subr.mxu0 0.0
      %4252 = vmatpush1.msra.mxu0 0.0
      %4253 = vmatprep.subr.mxu0 0.0
      %4254 = vmatpush1.msra.mxu0 0.0
      %4255 = vmatprep.subr.mxu0 0.0
      %4256 = vmatpush1.msra.mxu0 0.0
      %4257 = vmatprep.subr.mxu0 0.0
      %4258 = vmatpush1.msra.mxu0 0.0
      %4259 = vmatprep.subr.mxu0 0.0
      %4260 = vmatpush1.msra.mxu0 0.0
      %4261 = vmatprep.subr.mxu0 0.0
      %4262 = vmatpush1.msra.mxu0 0.0
      %4263 = vmatprep.subr.mxu0 0.0
      %4264 = vmatpush1.msra.mxu0 0.0
      %4265 = vmatprep.subr.mxu0 0.0
      %4266 = vmatpush1.msra.mxu0 0.0
      %4267 = vmatprep.subr.mxu0 0.0
      %4268 = vmatpush1.msra.mxu0 0.0
      %4269 = vmatprep.subr.mxu0 0.0
      %4270 = vmatpush1.msra.mxu0 0.0
      %4271 = vmatprep.subr.mxu0 0.0
      %4272 = vmatpush1.msra.mxu0 0.0
      %4273 = vmatprep.subr.mxu0 0.0
      %4274 = vmatpush1.msra.mxu0 0.0
      %4275 = vmatprep.subr.mxu0 0.0
      %4276 = vmatpush1.msra.mxu0 0.0
      %4277 = vmatprep.subr.mxu0 0.0
      %4278 = vmatpush1.msra.mxu0 0.0
      %4279 = vmatprep.subr.mxu0 0.0
      %4280 = vmatpush1.msra.mxu0 0.0
      %4281 = vmatprep.subr.mxu0 0.0
      %4282 = vmatpush1.msra.mxu0 0.0
      %4283 = vmatprep.subr.mxu0 0.0
      %4284 = vmatpush1.msra.mxu0 0.0
      %4285 = vmatprep.subr.mxu0 0.0
      %4286 = vmatpush1.msra.mxu0 0.0
      %4287 = vmatprep.subr.mxu0 0.0
      %4288 = vmatpush1.msra.mxu0 0.0
      %4289 = vmatprep.subr.mxu0 0.0
      %4290 = vmatpush1.msra.mxu0 0.0
      %4291 = vmatprep.subr.mxu0 0.0
      %4292 = vmatpush1.msra.mxu0 0.0
      %4293 = vmatprep.subr.mxu0 0.0
      %4294 = vmatpush1.msra.mxu0 0.0
      %4295 = vmatprep.subr.mxu0 0.0
      %4296 = vmatpush1.msra.mxu0 0.0
      %4297 = vmatprep.subr.mxu0 0.0
      %4298 = vmatpush1.msra.mxu0 0.0
      %4299 = vmatprep.mubr.f32.mxu0 0.0
      %4300 = vmatmul.mubr.f32.gmra.mrb[0].mxu0 %v4137
      %v4301 = vpop.f32.mrb[0].mxu0
      %v4302 = vadd.f32 0.0, %v4301
      %v4303 = vpop.f32.mrb[0].mxu0
      %4304 = vmatprep.mubr.f32.mxu0 0.0
      %4305 = vmatmul.mubr.f32.gmra.mrb[0].mxu0 %v4140
      %v4306 = vpop.f32.mrb[0].mxu0
      %v4307 = vadd.f32 0.0, %v4306
      %v4308 = vpop.f32.mrb[0].mxu0
      %4309 = vmatprep.mubr.f32.mxu0 0.0
      %4310 = vmatmul.mubr.f32.gmra.mrb[0].mxu0 %v4143
      %v4311 = vpop.f32.mrb[0].mxu0
      %v4312 = vadd.f32 0.0, %v4311
      %v4313 = vpop.f32.mrb[0].mxu0
      %4314 = vmatprep.mubr.f32.mxu0 0.0
      %4315 = vmatmul.mubr.f32.gmra.mrb[0].mxu0 %v4146
      %v4316 = vpop.f32.mrb[0].mxu0
      %v4317 = vadd.f32 0.0, %v4316
      %v4318 = vpop.f32.mrb[0].mxu0
      %4319 = vmatprep.mubr.f32.mxu0 0.0
      %4320 = vmatmul.mubr.f32.gmra.mrb[0].mxu0 %v4149
      %v4321 = vpop.f32.mrb[0].mxu0
      %v4322 = vadd.f32 0.0, %v4321
      %v4323 = vpop.f32.mrb[0].mxu0
      %4324 = vmatprep.mubr.f32.mxu0 0.0
      %4325 = vmatmul.mubr.f32.gmra.mrb[0].mxu0 %v4152
      %v4326 = vpop.f32.mrb[0].mxu0
      %v4327 = vadd.f32 0.0, %v4326
      %v4328 = vpop.f32.mrb[0].mxu0
      %4329 = vmatprep.mubr.f32.mxu0 0.0
      %4330 = vmatmul.mubr.f32.gmra.mrb[0].mxu0 %v4155
      %v4331 = vpop.f32.mrb[0].mxu0
      %v4332 = vadd.f32 0.0, %v4331
      %v4333 = vpop.f32.mrb[0].mxu0
      %4334 = vmatprep.mubr.f32.mxu0 0.0
      %4335 = vmatmul.mubr.f32.gmra.mrb[0].mxu0 %v4158
      %v4336 = vpop.f32.mrb[0].mxu0
      %v4337 = vadd.f32 0.0, %v4336
      %v4338 = vpop.f32.mrb[0].mxu0
      %4339 = vmatprep.mubr.f32.mxu0 0.0
      %4340 = vmatmul.mubr.f32.gmra.mrb[0].mxu0 %v4161
      %v4341 = vpop.f32.mrb[0].mxu0
      %v4342 = vadd.f32 0.0, %v4341
      %v4343 = vpop.f32.mrb[0].mxu0
      %4344 = vmatprep.mubr.f32.mxu0 0.0
      %4345 = vmatmul.mubr.f32.gmra.mrb[0].mxu0 %v4164
      %v4346 = vpop.f32.mrb[0].mxu0
      %v4347 = vadd.f32 0.0, %v4346
      %v4348 = vpop.f32.mrb[0].mxu0
      %4349 = vmatprep.mubr.f32.mxu0 0.0
      %4350 = vmatmul.mubr.f32.gmra.mrb[0].mxu0 %v4167
      %v4351 = vpop.f32.mrb[0].mxu0
      %v4352 = vadd.f32 0.0, %v4351
      %v4353 = vpop.f32.mrb[0].mxu0
      %4354 = vmatprep.mubr.f32.mxu0 0.0
      %4355 = vmatmul.mubr.f32.gmra.mrb[0].mxu0 %v4170
      %v4356 = vpop.f32.mrb[0].mxu0
      %v4357 = vadd.f32 0.0, %v4356
      %v4358 = vpop.f32.mrb[0].mxu0
      %4359 = vmatprep.mubr.f32.mxu0 0.0
      %4360 = vmatmul.mubr.f32.gmra.mrb[0].mxu0 %v4173
      %v4361 = vpop.f32.mrb[0].mxu0
      %v4362 = vadd.f32 0.0, %v4361
      %v4363 = vpop.f32.mrb[0].mxu0
      %4364 = vmatprep.mubr.f32.mxu0 0.0
      %4365 = vmatmul.mubr.f32.gmra.mrb[0].mxu0 %v4176
      %v4366 = vpop.f32.mrb[0].mxu0
      %v4367 = vadd.f32 0.0, %v4366
      %v4368 = vpop.f32.mrb[0].mxu0
      %4369 = vmatprep.mubr.f32.mxu0 0.0
      %4370 = vmatmul.mubr.f32.gmra.mrb[0].mxu0 %v4179
      %v4371 = vpop.f32.mrb[0].mxu0
      %v4372 = vadd.f32 0.0, %v4371
      %v4373 = vpop.f32.mrb[0].mxu0
      %4374 = vmatprep.mubr.f32.mxu0 0.0
      %4375 = vmatmul.mubr.f32.gmra.mrb[0].mxu0 %v4182
      %v4376 = vpop.f32.mrb[0].mxu0
      %v4377 = vadd.f32 0.0, %v4376
      %v4378 = vpop.f32.mrb[0].mxu0
      %4379 = vmatprep.mubr.f32.mxu0 0.0
      %4380 = vmatmul.mubr.f32.gmra.mrb[0].mxu0 %v4185
      %v4381 = vpop.f32.mrb[0].mxu0
      %v4382 = vadd.f32 0.0, %v4381
      %v4383 = vpop.f32.mrb[0].mxu0
      %4384 = vmatprep.mubr.f32.mxu0 0.0
      %4385 = vmatmul.mubr.f32.gmra.mrb[0].mxu0 %v4188
      %v4386 = vpop.f32.mrb[0].mxu0
      %v4387 = vadd.f32 0.0, %v4386
      %v4388 = vpop.f32.mrb[0].mxu0
      %4389 = vmatprep.mubr.f32.mxu0 0.0
      %4390 = vmatmul.mubr.f32.gmra.mrb[0].mxu0 %v4191
      %v4391 = vpop.f32.mrb[0].mxu0
      %v4392 = vadd.f32 0.0, %v4391
      %v4393 = vpop.f32.mrb[0].mxu0
      %4394 = vmatprep.mubr.f32.mxu0 0.0
      %4395 = vmatmul.mubr.f32.gmra.mrb[0].mxu0 %v4194
      %v4396 = vpop.f32.mrb[0].mxu0
      %v4397 = vadd.f32 0.0, %v4396
      %v4398 = vpop.f32.mrb[0].mxu0
      %4399 = vmatprep.mubr.f32.mxu0 0.0
      %4400 = vmatmul.mubr.f32.gmra.mrb[0].mxu0 %v4197
      %v4401 = vpop.f32.mrb[0].mxu0
      %v4402 = vadd.f32 0.0, %v4401
      %v4403 = vpop.f32.mrb[0].mxu0
      %4404 = vmatprep.mubr.f32.mxu0 0.0
      %4405 = vmatmul.mubr.f32.gmra.mrb[0].mxu0 %v4200
      %v4406 = vpop.f32.mrb[0].mxu0
      %v4407 = vadd.f32 0.0, %v4406
      %v4408 = vpop.f32.mrb[0].mxu0
      %4409 = vmatprep.mubr.f32.mxu0 0.0
      %4410 = vmatmul.mubr.f32.gmra.mrb[0].mxu0 %v4203
      %v4411 = vpop.f32.mrb[0].mxu0
      %v4412 = vadd.f32 0.0, %v4411
      %v4413 = vpop.f32.mrb[0].mxu0
      %4414 = vmatprep.mubr.f32.mxu0 0.0
      %4415 = vmatmul.mubr.f32.gmra.mrb[0].mxu0 %v4206
      %v4416 = vpop.f32.mrb[0].mxu0
      %v4417 = vadd.f32 0.0, %v4416
      %v4418 = vpop.f32.mrb[0].mxu0
      %4419 = vmatprep.mubr.f32.mxu0 0.0
      %4420 = vmatmul.mubr.f32.gmra.mrb[0].mxu0 %v4209
      %v4421 = vpop.f32.mrb[0].mxu0
      %v4422 = vadd.f32 0.0, %v4421
      %v4423 = vpop.f32.mrb[0].mxu0
      %4424 = vmatprep.mubr.f32.mxu0 0.0
      %4425 = vmatmul.mubr.f32.gmra.mrb[0].mxu0 %v4212
      %v4426 = vpop.f32.mrb[0].mxu0
      %v4427 = vadd.f32 0.0, %v4426
      %v4428 = vpop.f32.mrb[0].mxu0
      %4429 = vmatprep.mubr.f32.mxu0 0.0
      %4430 = vmatmul.mubr.f32.gmra.mrb[0].mxu0 %v4215
      %v4431 = vpop.f32.mrb[0].mxu0
      %v4432 = vadd.f32 0.0, %v4431
      %v4433 = vpop.f32.mrb[0].mxu0
      %4434 = vmatprep.mubr.f32.mxu0 0.0
      %4435 = vmatmul.mubr.f32.gmra.mrb[0].mxu0 %v4218
      %v4436 = vpop.f32.mrb[0].mxu0
      %v4437 = vadd.f32 0.0, %v4436
      %v4438 = vpop.f32.mrb[0].mxu0
      %4439 = vmatprep.mubr.f32.mxu0 0.0
      %4440 = vmatmul.mubr.f32.gmra.mrb[0].mxu0 %v4221
      %v4441 = vpop.f32.mrb[0].mxu0
      %v4442 = vadd.f32 0.0, %v4441
      %v4443 = vpop.f32.mrb[0].mxu0
      %4444 = vmatprep.mubr.f32.mxu0 0.0
      %4445 = vmatmul.mubr.f32.gmra.mrb[0].mxu0 %v4224
      %v4446 = vpop.f32.mrb[0].mxu0
      %v4447 = vadd.f32 0.0, %v4446
      %v4448 = vpop.f32.mrb[0].mxu0
      %4449 = vmatprep.mubr.f32.mxu0 0.0
      %4450 = vmatmul.mubr.f32.gmra.mrb[0].mxu0 %v4227
      %v4451 = vpop.f32.mrb[0].mxu0
      %v4452 = vadd.f32 0.0, %v4451
      %v4453 = vpop.f32.mrb[0].mxu0
      %4454 = vmatprep.mubr.f32.mxu0 0.0
      %4455 = vmatmul.mubr.f32.gmra.mrb[0].mxu0 %v4230
      %v4456 = vpop.f32.mrb[0].mxu0
      %v4457 = vadd.f32 0.0, %v4456
      %v4458 = vpop.f32.mrb[0].mxu0
      %4459 = vdwg.mxu0
      %v4461 = vsel %vm689, %v4104, 0
      %4463 = vmatprep.subr.mxu0 0.0
      %4464 = vmatpush1.msra.mxu0 %v4103
      %4465 = vmatprep.subr.mxu0 0.0
      %4466 = vmatpush1.msra.mxu0 %v4461
      %4467 = vmatprep.subr.mxu0 0.0
      %4468 = vmatpush1.msra.mxu0 0.0
      %4469 = vmatprep.subr.mxu0 0.0
      %4470 = vmatpush1.msra.mxu0 0.0
      %4471 = vmatprep.subr.mxu0 0.0
      %4472 = vmatpush1.msra.mxu0 0.0
      %4473 = vmatprep.subr.mxu0 0.0
      %4474 = vmatpush1.msra.mxu0 0.0
      %4475 = vmatprep.subr.mxu0 0.0
      %4476 = vmatpush1.msra.mxu0 0.0
      %4477 = vmatprep.subr.mxu0 0.0
      %4478 = vmatpush1.msra.mxu0 0.0
      %4479 = vmatprep.subr.mxu0 0.0
      %4480 = vmatpush1.msra.mxu0 0.0
      %4481 = vmatprep.subr.mxu0 0.0
      %4482 = vmatpush1.msra.mxu0 0.0
      %4483 = vmatprep.subr.mxu0 0.0
      %4484 = vmatpush1.msra.mxu0 0.0
      %4485 = vmatprep.subr.mxu0 0.0
      %4486 = vmatpush1.msra.mxu0 0.0
      %4487 = vmatprep.subr.mxu0 0.0
      %4488 = vmatpush1.msra.mxu0 0.0
      %4489 = vmatprep.subr.mxu0 0.0
      %4490 = vmatpush1.msra.mxu0 0.0
      %4491 = vmatprep.subr.mxu0 0.0
      %4492 = vmatpush1.msra.mxu0 0.0
      %4493 = vmatprep.subr.mxu0 0.0
      %4494 = vmatpush1.msra.mxu0 0.0
      %4495 = vmatprep.subr.mxu0 0.0
      %4496 = vmatpush1.msra.mxu0 0.0
      %4497 = vmatprep.subr.mxu0 0.0
      %4498 = vmatpush1.msra.mxu0 0.0
      %4499 = vmatprep.subr.mxu0 0.0
      %4500 = vmatpush1.msra.mxu0 0.0
      %4501 = vmatprep.subr.mxu0 0.0
      %4502 = vmatpush1.msra.mxu0 0.0
      %4503 = vmatprep.subr.mxu0 0.0
      %4504 = vmatpush1.msra.mxu0 0.0
      %4505 = vmatprep.subr.mxu0 0.0
      %4506 = vmatpush1.msra.mxu0 0.0
      %4507 = vmatprep.subr.mxu0 0.0
      %4508 = vmatpush1.msra.mxu0 0.0
      %4509 = vmatprep.subr.mxu0 0.0
      %4510 = vmatpush1.msra.mxu0 0.0
      %4511 = vmatprep.subr.mxu0 0.0
      %4512 = vmatpush1.msra.mxu0 0.0
      %4513 = vmatprep.subr.mxu0 0.0
      %4514 = vmatpush1.msra.mxu0 0.0
      %4515 = vmatprep.subr.mxu0 0.0
      %4516 = vmatpush1.msra.mxu0 0.0
      %4517 = vmatprep.subr.mxu0 0.0
      %4518 = vmatpush1.msra.mxu0 0.0
      %4519 = vmatprep.subr.mxu0 0.0
      %4520 = vmatpush1.msra.mxu0 0.0
      %4521 = vmatprep.subr.mxu0 0.0
      %4522 = vmatpush1.msra.mxu0 0.0
      %4523 = vmatprep.subr.mxu0 0.0
      %4524 = vmatpush1.msra.mxu0 0.0
      %4525 = vmatprep.subr.mxu0 0.0
      %4526 = vmatpush1.msra.mxu0 0.0
      %4527 = vmatprep.mubr.f32.mxu0 0.0
      %4528 = vmatmul.mubr.f32.gmra.mrb[0].mxu0 %v2170
      %v4529 = vpop.f32.mrb[0].mxu0
      %v4530 = vadd.f32 %v4302, %v4529
      %v4531 = vpop.f32.mrb[0].mxu0
      %4532 = vmatprep.mubr.f32.mxu0 0.0
      %4533 = vmatmul.mubr.f32.gmra.mrb[0].mxu0 %v2170
      %v4534 = vpop.f32.mrb[0].mxu0
      %v4535 = vadd.f32 %v4307, %v4534
      %v4536 = vpop.f32.mrb[0].mxu0
      %4537 = vmatprep.mubr.f32.mxu0 0.0
      %4538 = vmatmul.mubr.f32.gmra.mrb[0].mxu0 %v4137
      %v4539 = vpop.f32.mrb[0].mxu0
      %v4540 = vadd.f32 %v4312, %v4539
      %v4541 = vpop.f32.mrb[0].mxu0
      %4542 = vmatprep.mubr.f32.mxu0 0.0
      %4543 = vmatmul.mubr.f32.gmra.mrb[0].mxu0 %v4140
      %v4544 = vpop.f32.mrb[0].mxu0
      %v4545 = vadd.f32 %v4317, %v4544
      %v4546 = vpop.f32.mrb[0].mxu0
      %4547 = vmatprep.mubr.f32.mxu0 0.0
      %4548 = vmatmul.mubr.f32.gmra.mrb[0].mxu0 %v4143
      %v4549 = vpop.f32.mrb[0].mxu0
      %v4550 = vadd.f32 %v4322, %v4549
      %v4551 = vpop.f32.mrb[0].mxu0
      %4552 = vmatprep.mubr.f32.mxu0 0.0
      %4553 = vmatmul.mubr.f32.gmra.mrb[0].mxu0 %v4146
      %v4554 = vpop.f32.mrb[0].mxu0
      %v4555 = vadd.f32 %v4327, %v4554
      %v4556 = vpop.f32.mrb[0].mxu0
      %4557 = vmatprep.mubr.f32.mxu0 0.0
      %4558 = vmatmul.mubr.f32.gmra.mrb[0].mxu0 %v4149
      %v4559 = vpop.f32.mrb[0].mxu0
      %v4560 = vadd.f32 %v4332, %v4559
      %v4561 = vpop.f32.mrb[0].mxu0
      %4562 = vmatprep.mubr.f32.mxu0 0.0
      %4563 = vmatmul.mubr.f32.gmra.mrb[0].mxu0 %v4152
      %v4564 = vpop.f32.mrb[0].mxu0
      %v4565 = vadd.f32 %v4337, %v4564
      %v4566 = vpop.f32.mrb[0].mxu0
      %4567 = vmatprep.mubr.f32.mxu0 0.0
      %4568 = vmatmul.mubr.f32.gmra.mrb[0].mxu0 %v4155
      %v4569 = vpop.f32.mrb[0].mxu0
      %v4570 = vadd.f32 %v4342, %v4569
      %v4571 = vpop.f32.mrb[0].mxu0
      %4572 = vmatprep.mubr.f32.mxu0 0.0
      %4573 = vmatmul.mubr.f32.gmra.mrb[0].mxu0 %v4158
      %v4574 = vpop.f32.mrb[0].mxu0
      %v4575 = vadd.f32 %v4347, %v4574
      %v4576 = vpop.f32.mrb[0].mxu0
      %4577 = vmatprep.mubr.f32.mxu0 0.0
      %4578 = vmatmul.mubr.f32.gmra.mrb[0].mxu0 %v4161
      %v4579 = vpop.f32.mrb[0].mxu0
      %v4580 = vadd.f32 %v4352, %v4579
      %v4581 = vpop.f32.mrb[0].mxu0
      %4582 = vmatprep.mubr.f32.mxu0 0.0
      %4583 = vmatmul.mubr.f32.gmra.mrb[0].mxu0 %v4164
      %v4584 = vpop.f32.mrb[0].mxu0
      %v4585 = vadd.f32 %v4357, %v4584
      %v4586 = vpop.f32.mrb[0].mxu0
      %4587 = vmatprep.mubr.f32.mxu0 0.0
      %4588 = vmatmul.mubr.f32.gmra.mrb[0].mxu0 %v4167
      %v4589 = vpop.f32.mrb[0].mxu0
      %v4590 = vadd.f32 %v4362, %v4589
      %v4591 = vpop.f32.mrb[0].mxu0
      %4592 = vmatprep.mubr.f32.mxu0 0.0
      %4593 = vmatmul.mubr.f32.gmra.mrb[0].mxu0 %v4170
      %v4594 = vpop.f32.mrb[0].mxu0
      %v4595 = vadd.f32 %v4367, %v4594
      %v4596 = vpop.f32.mrb[0].mxu0
      %4597 = vmatprep.mubr.f32.mxu0 0.0
      %4598 = vmatmul.mubr.f32.gmra.mrb[0].mxu0 %v4173
      %v4599 = vpop.f32.mrb[0].mxu0
      %v4600 = vadd.f32 %v4372, %v4599
      %v4601 = vpop.f32.mrb[0].mxu0
      %4602 = vmatprep.mubr.f32.mxu0 0.0
      %4603 = vmatmul.mubr.f32.gmra.mrb[0].mxu0 %v4176
      %v4604 = vpop.f32.mrb[0].mxu0
      %v4605 = vadd.f32 %v4377, %v4604
      %v4606 = vpop.f32.mrb[0].mxu0
      %4607 = vmatprep.mubr.f32.mxu0 0.0
      %4608 = vmatmul.mubr.f32.gmra.mrb[0].mxu0 %v4179
      %v4609 = vpop.f32.mrb[0].mxu0
      %v4610 = vadd.f32 %v4382, %v4609
      %v4611 = vpop.f32.mrb[0].mxu0
      %4612 = vmatprep.mubr.f32.mxu0 0.0
      %4613 = vmatmul.mubr.f32.gmra.mrb[0].mxu0 %v4182
      %v4614 = vpop.f32.mrb[0].mxu0
      %v4615 = vadd.f32 %v4387, %v4614
      %v4616 = vpop.f32.mrb[0].mxu0
      %4617 = vmatprep.mubr.f32.mxu0 0.0
      %4618 = vmatmul.mubr.f32.gmra.mrb[0].mxu0 %v4185
      %v4619 = vpop.f32.mrb[0].mxu0
      %v4620 = vadd.f32 %v4392, %v4619
      %v4621 = vpop.f32.mrb[0].mxu0
      %4622 = vmatprep.mubr.f32.mxu0 0.0
      %4623 = vmatmul.mubr.f32.gmra.mrb[0].mxu0 %v4188
      %v4624 = vpop.f32.mrb[0].mxu0
      %v4625 = vadd.f32 %v4397, %v4624
      %v4626 = vpop.f32.mrb[0].mxu0
      %4627 = vmatprep.mubr.f32.mxu0 0.0
      %4628 = vmatmul.mubr.f32.gmra.mrb[0].mxu0 %v4191
      %v4629 = vpop.f32.mrb[0].mxu0
      %v4630 = vadd.f32 %v4402, %v4629
      %v4631 = vpop.f32.mrb[0].mxu0
      %4632 = vmatprep.mubr.f32.mxu0 0.0
      %4633 = vmatmul.mubr.f32.gmra.mrb[0].mxu0 %v4194
      %v4634 = vpop.f32.mrb[0].mxu0
      %v4635 = vadd.f32 %v4407, %v4634
      %v4636 = vpop.f32.mrb[0].mxu0
      %4637 = vmatprep.mubr.f32.mxu0 0.0
      %4638 = vmatmul.mubr.f32.gmra.mrb[0].mxu0 %v4197
      %v4639 = vpop.f32.mrb[0].mxu0
      %v4640 = vadd.f32 %v4412, %v4639
      %v4641 = vpop.f32.mrb[0].mxu0
      %4642 = vmatprep.mubr.f32.mxu0 0.0
      %4643 = vmatmul.mubr.f32.gmra.mrb[0].mxu0 %v4200
      %v4644 = vpop.f32.mrb[0].mxu0
      %v4645 = vadd.f32 %v4417, %v4644
      %v4646 = vpop.f32.mrb[0].mxu0
      %4647 = vmatprep.mubr.f32.mxu0 0.0
      %4648 = vmatmul.mubr.f32.gmra.mrb[0].mxu0 %v4203
      %v4649 = vpop.f32.mrb[0].mxu0
      %v4650 = vadd.f32 %v4422, %v4649
      %v4651 = vpop.f32.mrb[0].mxu0
      %4652 = vmatprep.mubr.f32.mxu0 0.0
      %4653 = vmatmul.mubr.f32.gmra.mrb[0].mxu0 %v4206
      %v4654 = vpop.f32.mrb[0].mxu0
      %v4655 = vadd.f32 %v4427, %v4654
      %v4656 = vpop.f32.mrb[0].mxu0
      %4657 = vmatprep.mubr.f32.mxu0 0.0
      %4658 = vmatmul.mubr.f32.gmra.mrb[0].mxu0 %v4209
      %v4659 = vpop.f32.mrb[0].mxu0
      %v4660 = vadd.f32 %v4432, %v4659
      %v4661 = vpop.f32.mrb[0].mxu0
      %4662 = vmatprep.mubr.f32.mxu0 0.0
      %4663 = vmatmul.mubr.f32.gmra.mrb[0].mxu0 %v4212
      %v4664 = vpop.f32.mrb[0].mxu0
      %v4665 = vadd.f32 %v4437, %v4664
      %v4666 = vpop.f32.mrb[0].mxu0
      %4667 = vmatprep.mubr.f32.mxu0 0.0
      %4668 = vmatmul.mubr.f32.gmra.mrb[0].mxu0 %v4215
      %v4669 = vpop.f32.mrb[0].mxu0
      %v4670 = vadd.f32 %v4442, %v4669
      %v4671 = vpop.f32.mrb[0].mxu0
      %4672 = vmatprep.mubr.f32.mxu0 0.0
      %4673 = vmatmul.mubr.f32.gmra.mrb[0].mxu0 %v4218
      %v4674 = vpop.f32.mrb[0].mxu0
      %v4675 = vadd.f32 %v4447, %v4674
      %v4676 = vpop.f32.mrb[0].mxu0
      %4677 = vmatprep.mubr.f32.mxu0 0.0
      %4678 = vmatmul.mubr.f32.gmra.mrb[0].mxu0 %v4221
      %v4679 = vpop.f32.mrb[0].mxu0
      %v4680 = vadd.f32 %v4452, %v4679
      %v4681 = vpop.f32.mrb[0].mxu0
      %4682 = vmatprep.mubr.f32.mxu0 0.0
      %4683 = vmatmul.mubr.f32.gmra.mrb[0].mxu0 %v4224
      %v4684 = vpop.f32.mrb[0].mxu0
      %v4685 = vadd.f32 %v4457, %v4684
      %v4686 = vpop.f32.mrb[0].mxu0
      %4687 = vdwg.mxu0
      %s4688 = scalar_lea.vmem %s12, 32
      %v4689 = vld [vmem:[%s4688] sm:$0xff]
      %v4690 = vld [vmem:[%s4688 + $0x8] sm:$0xf]
      %v4692 = vsel %vm689, %v4690, 0
      %4694 = vmatprep.subr.mxu0 0.0
      %4695 = vmatpush1.msra.mxu0 %v4689
      %4696 = vmatprep.subr.mxu0 0.0
      %4697 = vmatpush1.msra.mxu0 %v4692
      %4698 = vmatprep.subr.mxu0 0.0
      %4699 = vmatpush1.msra.mxu0 0.0
      %4700 = vmatprep.subr.mxu0 0.0
      %4701 = vmatpush1.msra.mxu0 0.0
      %4702 = vmatprep.subr.mxu0 0.0
      %4703 = vmatpush1.msra.mxu0 0.0
      %4704 = vmatprep.subr.mxu0 0.0
      %4705 = vmatpush1.msra.mxu0 0.0
      %4706 = vmatprep.subr.mxu0 0.0
      %4707 = vmatpush1.msra.mxu0 0.0
      %4708 = vmatprep.subr.mxu0 0.0
      %4709 = vmatpush1.msra.mxu0 0.0
      %4710 = vmatprep.subr.mxu0 0.0
      %4711 = vmatpush1.msra.mxu0 0.0
      %4712 = vmatprep.subr.mxu0 0.0
      %4713 = vmatpush1.msra.mxu0 0.0
      %4714 = vmatprep.subr.mxu0 0.0
      %4715 = vmatpush1.msra.mxu0 0.0
      %4716 = vmatprep.subr.mxu0 0.0
      %4717 = vmatpush1.msra.mxu0 0.0
      %4718 = vmatprep.subr.mxu0 0.0
      %4719 = vmatpush1.msra.mxu0 0.0
      %4720 = vmatprep.subr.mxu0 0.0
      %4721 = vmatpush1.msra.mxu0 0.0
      %4722 = vmatprep.subr.mxu0 0.0
      %4723 = vmatpush1.msra.mxu0 0.0
      %4724 = vmatprep.subr.mxu0 0.0
      %4725 = vmatpush1.msra.mxu0 0.0
      %4726 = vmatprep.subr.mxu0 0.0
      %4727 = vmatpush1.msra.mxu0 0.0
      %4728 = vmatprep.subr.mxu0 0.0
      %4729 = vmatpush1.msra.mxu0 0.0
      %4730 = vmatprep.subr.mxu0 0.0
      %4731 = vmatpush1.msra.mxu0 0.0
      %4732 = vmatprep.subr.mxu0 0.0
      %4733 = vmatpush1.msra.mxu0 0.0
      %4734 = vmatprep.subr.mxu0 0.0
      %4735 = vmatpush1.msra.mxu0 0.0
      %4736 = vmatprep.subr.mxu0 0.0
      %4737 = vmatpush1.msra.mxu0 0.0
      %4738 = vmatprep.subr.mxu0 0.0
      %4739 = vmatpush1.msra.mxu0 0.0
      %4740 = vmatprep.subr.mxu0 0.0
      %4741 = vmatpush1.msra.mxu0 0.0
      %4742 = vmatprep.subr.mxu0 0.0
      %4743 = vmatpush1.msra.mxu0 0.0
      %4744 = vmatprep.subr.mxu0 0.0
      %4745 = vmatpush1.msra.mxu0 0.0
      %4746 = vmatprep.subr.mxu0 0.0
      %4747 = vmatpush1.msra.mxu0 0.0
      %4748 = vmatprep.subr.mxu0 0.0
      %4749 = vmatpush1.msra.mxu0 0.0
      %4750 = vmatprep.subr.mxu0 0.0
      %4751 = vmatpush1.msra.mxu0 0.0
      %4752 = vmatprep.subr.mxu0 0.0
      %4753 = vmatpush1.msra.mxu0 0.0
      %4754 = vmatprep.subr.mxu0 0.0
      %4755 = vmatpush1.msra.mxu0 0.0
      %4756 = vmatprep.subr.mxu0 0.0
      %4757 = vmatpush1.msra.mxu0 0.0
      %4758 = vmatprep.mubr.f32.mxu0 0.0
      %4759 = vmatmul.mubr.f32.gmra.mrb[0].mxu0 %v4143
      %v4760 = vpop.f32.mrb[0].mxu0
      %v4761 = vadd.f32 0.0, %v4760
      %v4762 = vpop.f32.mrb[0].mxu0
      %4763 = vmatprep.mubr.f32.mxu0 0.0
      %4764 = vmatmul.mubr.f32.gmra.mrb[0].mxu0 %v4146
      %v4765 = vpop.f32.mrb[0].mxu0
      %v4766 = vadd.f32 0.0, %v4765
      %v4767 = vpop.f32.mrb[0].mxu0
      %4768 = vmatprep.mubr.f32.mxu0 0.0
      %4769 = vmatmul.mubr.f32.gmra.mrb[0].mxu0 %v4149
      %v4770 = vpop.f32.mrb[0].mxu0
      %v4771 = vadd.f32 0.0, %v4770
      %v4772 = vpop.f32.mrb[0].mxu0
      %4773 = vmatprep.mubr.f32.mxu0 0.0
      %4774 = vmatmul.mubr.f32.gmra.mrb[0].mxu0 %v4152
      %v4775 = vpop.f32.mrb[0].mxu0
      %v4776 = vadd.f32 0.0, %v4775
      %v4777 = vpop.f32.mrb[0].mxu0
      %4778 = vmatprep.mubr.f32.mxu0 0.0
      %4779 = vmatmul.mubr.f32.gmra.mrb[0].mxu0 %v4155
      %v4780 = vpop.f32.mrb[0].mxu0
      %v4781 = vadd.f32 0.0, %v4780
      %v4782 = vpop.f32.mrb[0].mxu0
      %4783 = vmatprep.mubr.f32.mxu0 0.0
      %4784 = vmatmul.mubr.f32.gmra.mrb[0].mxu0 %v4158
      %v4785 = vpop.f32.mrb[0].mxu0
      %v4786 = vadd.f32 0.0, %v4785
      %v4787 = vpop.f32.mrb[0].mxu0
      %4788 = vmatprep.mubr.f32.mxu0 0.0
      %4789 = vmatmul.mubr.f32.gmra.mrb[0].mxu0 %v4161
      %v4790 = vpop.f32.mrb[0].mxu0
      %v4791 = vadd.f32 0.0, %v4790
      %v4792 = vpop.f32.mrb[0].mxu0
      %4793 = vmatprep.mubr.f32.mxu0 0.0
      %4794 = vmatmul.mubr.f32.gmra.mrb[0].mxu0 %v4164
      %v4795 = vpop.f32.mrb[0].mxu0
      %v4796 = vadd.f32 0.0, %v4795
      %v4797 = vpop.f32.mrb[0].mxu0
      %4798 = vmatprep.mubr.f32.mxu0 0.0
      %4799 = vmatmul.mubr.f32.gmra.mrb[0].mxu0 %v4167
      %v4800 = vpop.f32.mrb[0].mxu0
      %v4801 = vadd.f32 0.0, %v4800
      %v4802 = vpop.f32.mrb[0].mxu0
      %4803 = vmatprep.mubr.f32.mxu0 0.0
      %4804 = vmatmul.mubr.f32.gmra.mrb[0].mxu0 %v4170
      %v4805 = vpop.f32.mrb[0].mxu0
      %v4806 = vadd.f32 0.0, %v4805
      %v4807 = vpop.f32.mrb[0].mxu0
      %4808 = vmatprep.mubr.f32.mxu0 0.0
      %4809 = vmatmul.mubr.f32.gmra.mrb[0].mxu0 %v4173
      %v4810 = vpop.f32.mrb[0].mxu0
      %v4811 = vadd.f32 0.0, %v4810
      %v4812 = vpop.f32.mrb[0].mxu0
      %4813 = vmatprep.mubr.f32.mxu0 0.0
      %4814 = vmatmul.mubr.f32.gmra.mrb[0].mxu0 %v4176
      %v4815 = vpop.f32.mrb[0].mxu0
      %v4816 = vadd.f32 0.0, %v4815
      %v4817 = vpop.f32.mrb[0].mxu0
      %4818 = vmatprep.mubr.f32.mxu0 0.0
      %4819 = vmatmul.mubr.f32.gmra.mrb[0].mxu0 %v4179
      %v4820 = vpop.f32.mrb[0].mxu0
      %v4821 = vadd.f32 0.0, %v4820
      %v4822 = vpop.f32.mrb[0].mxu0
      %4823 = vmatprep.mubr.f32.mxu0 0.0
      %4824 = vmatmul.mubr.f32.gmra.mrb[0].mxu0 %v4182
      %v4825 = vpop.f32.mrb[0].mxu0
      %v4826 = vadd.f32 0.0, %v4825
      %v4827 = vpop.f32.mrb[0].mxu0
      %4828 = vmatprep.mubr.f32.mxu0 0.0
      %4829 = vmatmul.mubr.f32.gmra.mrb[0].mxu0 %v4185
      %v4830 = vpop.f32.mrb[0].mxu0
      %v4831 = vadd.f32 0.0, %v4830
      %v4832 = vpop.f32.mrb[0].mxu0
      %4833 = vmatprep.mubr.f32.mxu0 0.0
      %4834 = vmatmul.mubr.f32.gmra.mrb[0].mxu0 %v4188
      %v4835 = vpop.f32.mrb[0].mxu0
      %v4836 = vadd.f32 0.0, %v4835
      %v4837 = vpop.f32.mrb[0].mxu0
      %4838 = vmatprep.mubr.f32.mxu0 0.0
      %4839 = vmatmul.mubr.f32.gmra.mrb[0].mxu0 %v4191
      %v4840 = vpop.f32.mrb[0].mxu0
      %v4841 = vadd.f32 0.0, %v4840
      %v4842 = vpop.f32.mrb[0].mxu0
      %4843 = vmatprep.mubr.f32.mxu0 0.0
      %4844 = vmatmul.mubr.f32.gmra.mrb[0].mxu0 %v4194
      %v4845 = vpop.f32.mrb[0].mxu0
      %v4846 = vadd.f32 0.0, %v4845
      %v4847 = vpop.f32.mrb[0].mxu0
      %4848 = vmatprep.mubr.f32.mxu0 0.0
      %4849 = vmatmul.mubr.f32.gmra.mrb[0].mxu0 %v4197
      %v4850 = vpop.f32.mrb[0].mxu0
      %v4851 = vadd.f32 0.0, %v4850
      %v4852 = vpop.f32.mrb[0].mxu0
      %4853 = vmatprep.mubr.f32.mxu0 0.0
      %4854 = vmatmul.mubr.f32.gmra.mrb[0].mxu0 %v4200
      %v4855 = vpop.f32.mrb[0].mxu0
      %v4856 = vadd.f32 0.0, %v4855
      %v4857 = vpop.f32.mrb[0].mxu0
      %4858 = vmatprep.mubr.f32.mxu0 0.0
      %4859 = vmatmul.mubr.f32.gmra.mrb[0].mxu0 %v4203
      %v4860 = vpop.f32.mrb[0].mxu0
      %v4861 = vadd.f32 0.0, %v4860
      %v4862 = vpop.f32.mrb[0].mxu0
      %4863 = vmatprep.mubr.f32.mxu0 0.0
      %4864 = vmatmul.mubr.f32.gmra.mrb[0].mxu0 %v4206
      %v4865 = vpop.f32.mrb[0].mxu0
      %v4866 = vadd.f32 0.0, %v4865
      %v4867 = vpop.f32.mrb[0].mxu0
      %4868 = vmatprep.mubr.f32.mxu0 0.0
      %4869 = vmatmul.mubr.f32.gmra.mrb[0].mxu0 %v4209
      %v4870 = vpop.f32.mrb[0].mxu0
      %v4871 = vadd.f32 0.0, %v4870
      %v4872 = vpop.f32.mrb[0].mxu0
      %4873 = vmatprep.mubr.f32.mxu0 0.0
      %4874 = vmatmul.mubr.f32.gmra.mrb[0].mxu0 %v4212
      %v4875 = vpop.f32.mrb[0].mxu0
      %v4876 = vadd.f32 0.0, %v4875
      %v4877 = vpop.f32.mrb[0].mxu0
      %4878 = vmatprep.mubr.f32.mxu0 0.0
      %4879 = vmatmul.mubr.f32.gmra.mrb[0].mxu0 %v4215
      %v4880 = vpop.f32.mrb[0].mxu0
      %v4881 = vadd.f32 0.0, %v4880
      %v4882 = vpop.f32.mrb[0].mxu0
      %4883 = vmatprep.mubr.f32.mxu0 0.0
      %4884 = vmatmul.mubr.f32.gmra.mrb[0].mxu0 %v4218
      %v4885 = vpop.f32.mrb[0].mxu0
      %v4886 = vadd.f32 0.0, %v4885
      %v4887 = vpop.f32.mrb[0].mxu0
      %4888 = vmatprep.mubr.f32.mxu0 0.0
      %4889 = vmatmul.mubr.f32.gmra.mrb[0].mxu0 %v4221
      %v4890 = vpop.f32.mrb[0].mxu0
      %v4891 = vadd.f32 0.0, %v4890
      %v4892 = vpop.f32.mrb[0].mxu0
      %4893 = vmatprep.mubr.f32.mxu0 0.0
      %4894 = vmatmul.mubr.f32.gmra.mrb[0].mxu0 %v4224
      %v4895 = vpop.f32.mrb[0].mxu0
      %v4896 = vadd.f32 0.0, %v4895
      %v4897 = vpop.f32.mrb[0].mxu0
      %4898 = vmatprep.mubr.f32.mxu0 0.0
      %4899 = vmatmul.mubr.f32.gmra.mrb[0].mxu0 %v4227
      %v4900 = vpop.f32.mrb[0].mxu0
      %v4901 = vadd.f32 0.0, %v4900
      %v4902 = vpop.f32.mrb[0].mxu0
      %4903 = vmatprep.mubr.f32.mxu0 0.0
      %4904 = vmatmul.mubr.f32.gmra.mrb[0].mxu0 %v4230
      %v4905 = vpop.f32.mrb[0].mxu0
      %v4906 = vadd.f32 0.0, %v4905
      %v4907 = vpop.f32.mrb[0].mxu0
      %4908 = vmatprep.mubr.f32.mxu0 0.0
      %4909 = vmatmul.mubr.f32.gmra.mrb[0].mxu0 %v2170
      %v4910 = vpop.f32.mrb[0].mxu0
      %v4911 = vadd.f32 0.0, %v4910
      %v4912 = vpop.f32.mrb[0].mxu0
      %4913 = vmatprep.mubr.f32.mxu0 0.0
      %4914 = vmatmul.mubr.f32.gmra.mrb[0].mxu0 %v2170
      %v4915 = vpop.f32.mrb[0].mxu0
      %v4916 = vadd.f32 0.0, %v4915
      %v4917 = vpop.f32.mrb[0].mxu0
      %4918 = vdwg.mxu0
      %v4919 = vadd.f32 %v4530, %v4761
      %v4920 = vadd.f32 %v4535, %v4766
      %v4921 = vadd.f32 %v4540, %v4771
      %v4922 = vadd.f32 %v4545, %v4776
      %v4923 = vadd.f32 %v4550, %v4781
      %v4924 = vadd.f32 %v4555, %v4786
      %v4925 = vadd.f32 %v4560, %v4791
      %v4926 = vadd.f32 %v4565, %v4796
      %v4927 = vadd.f32 %v4570, %v4801
      %v4928 = vadd.f32 %v4575, %v4806
      %v4929 = vadd.f32 %v4580, %v4811
      %v4930 = vadd.f32 %v4585, %v4816
      %v4931 = vadd.f32 %v4590, %v4821
      %v4932 = vadd.f32 %v4595, %v4826
      %v4933 = vadd.f32 %v4600, %v4831
      %v4934 = vadd.f32 %v4605, %v4836
      %v4935 = vadd.f32 %v4610, %v4841
      %v4936 = vadd.f32 %v4615, %v4846
      %v4937 = vadd.f32 %v4620, %v4851
      %v4938 = vadd.f32 %v4625, %v4856
      %v4939 = vadd.f32 %v4630, %v4861
      %v4940 = vadd.f32 %v4635, %v4866
      %v4941 = vadd.f32 %v4640, %v4871
      %v4942 = vadd.f32 %v4645, %v4876
      %v4943 = vadd.f32 %v4650, %v4881
      %v4944 = vadd.f32 %v4655, %v4886
      %v4945 = vadd.f32 %v4660, %v4891
      %v4946 = vadd.f32 %v4665, %v4896
      %v4947 = vadd.f32 %v4670, %v4901
      %v4948 = vadd.f32 %v4675, %v4906
      %v4949 = vadd.f32 %v4680, %v4911
      %v4950 = vadd.f32 %v4685, %v4916
      %v4951 = vld [vmem:[%s13] sm:$0x1]
      %v4953 = vlaneseq
      %v4954 = vshrl.u32 %v4953, 7
      %v4955 = vsub.s32 0, %v4954
      %v4956 = vrot.slane %v4951, %v4955
      %v4958 = vadd.f32 %v4919, %v4956
      %v4959 = vadd.f32 %v4920, %v4956
      %v4960 = vadd.f32 %v4921, %v4956
      %v4961 = vadd.f32 %v4922, %v4956
      %v4962 = vadd.f32 %v4923, %v4956
      %v4963 = vadd.f32 %v4924, %v4956
      %v4964 = vadd.f32 %v4925, %v4956
      %v4965 = vadd.f32 %v4926, %v4956
      %v4966 = vadd.f32 %v4927, %v4956
      %v4967 = vadd.f32 %v4928, %v4956
      %v4968 = vadd.f32 %v4929, %v4956
      %v4969 = vadd.f32 %v4930, %v4956
      %v4970 = vadd.f32 %v4931, %v4956
      %v4971 = vadd.f32 %v4932, %v4956
      %v4972 = vadd.f32 %v4933, %v4956
      %v4973 = vadd.f32 %v4934, %v4956
      %v4974 = vadd.f32 %v4935, %v4956
      %v4975 = vadd.f32 %v4936, %v4956
      %v4976 = vadd.f32 %v4937, %v4956
      %v4977 = vadd.f32 %v4938, %v4956
      %v4978 = vadd.f32 %v4939, %v4956
      %v4979 = vadd.f32 %v4940, %v4956
      %v4980 = vadd.f32 %v4941, %v4956
      %v4981 = vadd.f32 %v4942, %v4956
      %v4982 = vadd.f32 %v4943, %v4956
      %v4983 = vadd.f32 %v4944, %v4956
      %v4984 = vadd.f32 %v4945, %v4956
      %v4985 = vadd.f32 %v4946, %v4956
      %v4986 = vadd.f32 %v4947, %v4956
      %v4987 = vadd.f32 %v4948, %v4956
      %v4988 = vadd.f32 %v4949, %v4956
      %v4989 = vadd.f32 %v4950, %v4956
      %4990 = vst.msk [vmem:[%s481] sm:$0xff] %vm514, %v4958
      %4991 = vst.msk [vmem:[%s481 + $0x8] sm:$0xff] %vm514, %v4959
      %4992 = vst.msk [vmem:[%s481 + $0x10] sm:$0xff] %vm514, %v4960
      %4993 = vst.msk [vmem:[%s481 + $0x18] sm:$0xff] %vm514, %v4961
      %4994 = vst.msk [vmem:[%s481 + $0x20] sm:$0xff] %vm514, %v4962
      %4995 = vst.msk [vmem:[%s481 + $0x28] sm:$0xff] %vm514, %v4963
      %4996 = vst.msk [vmem:[%s481 + $0x30] sm:$0xff] %vm514, %v4964
      %4997 = vst.msk [vmem:[%s481 + $0x38] sm:$0xff] %vm514, %v4965
      %4998 = vst.msk [vmem:[%s481 + $0x40] sm:$0xff] %vm514, %v4966
      %4999 = vst.msk [vmem:[%s481 + $0x48] sm:$0xff] %vm514, %v4967
      %5000 = vst.msk [vmem:[%s481 + $0x50] sm:$0xff] %vm514, %v4968
      %5001 = vst.msk [vmem:[%s481 + $0x58] sm:$0xff] %vm514, %v4969
      %5002 = vst.msk [vmem:[%s481 + $0x60] sm:$0xff] %vm514, %v4970
      %5003 = vst.msk [vmem:[%s481 + $0x68] sm:$0xff] %vm514, %v4971
      %5004 = vst.msk [vmem:[%s481 + $0x70] sm:$0xff] %vm514, %v4972
      %5005 = vst.msk [vmem:[%s481 + $0x78] sm:$0xff] %vm514, %v4973
      %5006 = vst.msk [vmem:[%s481 + $0x80] sm:$0xff] %vm514, %v4974
      %5007 = vst.msk [vmem:[%s481 + $0x88] sm:$0xff] %vm514, %v4975
      %5008 = vst.msk [vmem:[%s481 + $0x90] sm:$0xff] %vm514, %v4976
      %5009 = vst.msk [vmem:[%s481 + $0x98] sm:$0xff] %vm514, %v4977
      %5010 = vst.msk [vmem:[%s481 + $0xa0] sm:$0xff] %vm514, %v4978
      %5011 = vst.msk [vmem:[%s481 + $0xa8] sm:$0xff] %vm514, %v4979
      %5012 = vst.msk [vmem:[%s481 + $0xb0] sm:$0xff] %vm514, %v4980
      %5013 = vst.msk [vmem:[%s481 + $0xb8] sm:$0xff] %vm514, %v4981
      %5014 = vst.msk [vmem:[%s481 + $0xc0] sm:$0xff] %vm514, %v4982
      %5015 = vst.msk [vmem:[%s481 + $0xc8] sm:$0xff] %vm514, %v4983
      %5016 = vst.msk [vmem:[%s481 + $0xd0] sm:$0xff] %vm514, %v4984
      %5017 = vst.msk [vmem:[%s481 + $0xd8] sm:$0xff] %vm514, %v4985
      %5018 = vst.msk [vmem:[%s481 + $0xe0] sm:$0xff] %vm514, %v4986
      %5019 = vst.msk [vmem:[%s481 + $0xe8] sm:$0xff] %vm514, %v4987
      %5020 = vst.msk [vmem:[%s481 + $0xf0] sm:$0xff] %vm514, %v4988
      %5021 = vst.msk [vmem:[%s481 + $0xf8] sm:$0xff] %vm514, %v4989
      %p5022 = scmp.lt.s32.totalorder %s25, 1
      %s5023 = scalar_select %p5022, %s25, 1
      %s5024 = smul.addr %s5023, 32
      %s5025 = smul.addr %s5024, 8
      %s5026 = scalar_lea.vmem %s14, %s5025
      // Predicated region
      $region77: #{tpu_custom_call.1} parent=75 // pred_check
        %p5027 = pneg %p347
      $region78: #{tpu_custom_call.1} parent=75 // pred_check_branch
        %5029 = sbr.rel (%p5027) target = $region80
      $region79: #{tpu_custom_call.1} parent=75 // pred_region
        _
      $region80: #{tpu_custom_call.1} parent=75 // pred_fallthru
        _
    $region76: #{tpu_custom_call.1} parent=5 // pred_fallthru
      _
    %p5030 = scmp.le.s32.totalorder 2, %s20
    // Predicated region
    $region81: #{tpu_custom_call.1} parent=5 // pred_check
      %p5031 = pneg %p5030
    $region82: #{tpu_custom_call.1} parent=5 // pred_check_branch
      %5033 = sbr.rel (%p5031) target = $region84
    $region83: #{tpu_custom_call.1} parent=5 // pred_region
      %s5034 = ssub.s32 %s20, 2
      // Predicated region
      $region85: #{tpu_custom_call.1} parent=83 // pred_check
        %p5035 = pneg %p353
      $region86: #{tpu_custom_call.1} parent=83 // pred_check_branch
        %5037 = sbr.rel (%p5035) target = $region88
      $region87: #{tpu_custom_call.1} parent=83 // pred_region
        %p5038 = scmp.lt.s32.totalorder %s26, 1
        %s5039 = scalar_select %p5038, %s26, 1
        %s5040 = smul.addr %s5039, 32
        %s5041 = smul.addr %s5040, 8
        %s5042 = scalar_lea.vmem %s14, %s5041
      $region88: #{tpu_custom_call.1} parent=83 // pred_fallthru
        _
    $region84: #{tpu_custom_call.1} parent=5 // pred_fallthru
      _
  $region6: #{tpu_custom_call.1} parent=0 // loop_footer
    %s24 = sadd.s32 1, %s20
  $region7: #{tpu_custom_call.1} parent=0 // loop_footer_branch
    %19 = sbr.rel target = $region3
  $region8: #{tpu_custom_call.1} parent=0 // loop_exit
    _

</llo_original>
